<compile_context>
chip_gen: v5e
topology: v5e:2x2
jax: 0.10.0
libtpu: 0.0.40
codegen_flags: <defaults>
</compile_context>

<pallas_src>
import functools
import math

import jax
import jax.numpy as jnp
from jax.experimental import pallas as pl
from jax.experimental.pallas import tpu as pltpu


# ----------------------------------------------------------------------------
# Fused backbone kernel
# ----------------------------------------------------------------------------
def _fused_backbone_kernel(x_ref, in_w_ref, in_b_ref,
                           wqkv_ref, bqkv_ref, wout_ref, bout_ref,
                           wff1_ref, bff1_ref, wff2_ref, bff2_ref,
                           ln1g_ref, ln1b_ref, ln2g_ref, ln2b_ref,
                           hsum_ref, hexp_ref, o_ref, *, eps):
    """x_ref: (B, tl, C) tile.  Working layout: a token-major (B*tl, E) slab whose rows are
    ordered s-major, where s in range(B) is the attention sequence axis (the PyTorch
    batch_first=False quirk)."""
    B, tl, _ = x_ref.shape
    E = in_w_ref.shape[1]
    NL = wqkv_ref.shape[0]

    hsum = hsum_ref[...]          # (E, H): column h sums that head's D lanes
    hexp = hexp_ref[...]          # (H, E): broadcasts a per-head scalar back onto its D lanes
    in_w = in_w_ref[...]          # (C, E)
    in_b = in_b_ref[...]          # (1, E)

    # ---- input projection, stacked token-major (rows ordered s-major) -------------------
    h = jnp.concatenate(
        [jnp.dot(x_ref[s].astype(jnp.float32), in_w,
                 preferred_element_type=jnp.float32) + in_b
         for s in range(B)],
        axis=0)                                                    # (B*tl, E)

    def layer_norm(y, g, b):
        mu = jnp.mean(y, axis=-1, keepdims=True)
        yc = y - mu
        var = jnp.mean(yc * yc, axis=-1, keepdims=True)
        return yc * jax.lax.rsqrt(var + eps) * g + b

    for l in range(NL):                           # unrolled; all layer weights VMEM-resident
        wqkv, bqkv = wqkv_ref[l], bqkv_ref[l]     # (E, 3E), (1, 3E)  (Q columns pre-scaled)
        wout, bout = wout_ref[l], bout_ref[l]
        wff1, bff1 = wff1_ref[l], bff1_ref[l]
        wff2, bff2 = wff2_ref[l], bff2_ref[l]
        g1, b1 = ln1g_ref[l], ln1b_ref[l]
        g2, b2 = ln2g_ref[l], ln2b_ref[l]

        # ---- multi-head self-attention over the sequence axis s (length B) --------------
        qkv = jnp.dot(h, wqkv, preferred_element_type=jnp.float32) + bqkv   # (B*tl, 3E)
        q = [qkv[s * tl:(s + 1) * tl, 0 * E:1 * E] for s in range(B)]
        k = [qkv[s * tl:(s + 1) * tl, 1 * E:2 * E] for s in range(B)]
        v = [qkv[s * tl:(s + 1) * tl, 2 * E:3 * E] for s in range(B)]

        attn_rows = []
        for s in range(B):
            # per-head dot products q_s . k_t for ALL heads at once -> (tl, H) per key pos t
            sc = [jnp.dot(q[s] * k[t], hsum, preferred_element_type=jnp.float32)
                  for t in range(B)]
            m = sc[0]
            for t in range(1, B):
                m = jnp.maximum(m, sc[t])
            ex = [jnp.exp(sc[t] - m) for t in range(B)]
            den = ex[0]
            for t in range(1, B):
                den = den + ex[t]
            inv = pl.reciprocal(den, approx=True)                  # EUP slot, ~free
            o_s = None
            for t in range(B):
                w = jnp.dot(ex[t] * inv, hexp,
                            preferred_element_type=jnp.float32)    # (tl, E): per-head prob
                o_s = w * v[t] if o_s is None else o_s + w * v[t]
            attn_rows.append(o_s)
        attn = jnp.concatenate(attn_rows, axis=0)                  # (B*tl, E)
        attn = jnp.dot(attn, wout, preferred_element_type=jnp.float32) + bout

        h = layer_norm(h + attn, g1, b1)                           # norm1(x + self_attn)

        # ---- feed-forward (dim_feedforward = E, ReLU) ------------------------------------
        ff = jnp.dot(h, wff1, preferred_element_type=jnp.float32) + bff1
        ff = jnp.maximum(ff, 0.0)
        ff = jnp.dot(ff, wff2, preferred_element_type=jnp.float32) + bff2
        h = layer_norm(h + ff, g2, b2)                             # norm2(x + ff)

    for s in range(B):
        o_ref[s] = h[s * tl:(s + 1) * tl, :].astype(o_ref.dtype)


# ----------------------------------------------------------------------------
# Wrapper
# ----------------------------------------------------------------------------
def _full_block(a):
    nd = a.ndim
    return pl.BlockSpec(a.shape, lambda i, nd=nd: (0,) * nd)


def _choose_tile(L, cap=512):
    if L <= cap:
        tl = ((L + 7) // 8) * 8          # keep sublane (8) alignment for slab slices
        return tl, tl
    Lp = ((L + cap - 1) // cap) * cap
    return cap, Lp


def transformer_backbone_forward(x, prep):
    """x: (B, C, L) -> (B, nh, L), reproducing TransformerBackbone.forward (eval mode)."""
    B, C, L = x.shape
    E = prep['in_w'].shape[1]

    tl, Lp = _choose_tile(L)
    xt = x.transpose(0, 2, 1)                     # module's own input transpose: (B, L, C)
    if Lp != L:
        xt = jnp.pad(xt, ((0, 0), (0, Lp - L), (0, 0)))

    weight_args = [
        prep['in_w'], prep['in_b'],
        prep['wqkv'], prep['bqkv'], prep['wout'], prep['bout'],
        prep['wff1'], prep['bff1'], prep['wff2'], prep['bff2'],
        prep['ln1g'], prep['ln1b'], prep['ln2g'], prep['ln2b'],
        prep['hsum'], prep['hexp'],
    ]
    in_specs = [pl.BlockSpec((B, tl, C), lambda i: (0, i, 0))]
    in_specs += [_full_block(a) for a in weight_args]   # constant index_map -> weights stay
                                                        # resident in VMEM across grid steps

    out = pl.pallas_call(
        functools.partial(_fused_backbone_kernel, eps=1e-5),
        out_shape=jax.ShapeDtypeStruct((B, Lp, E), x.dtype),
        grid=(pl.cdiv(Lp, tl),),
        in_specs=in_specs,
        out_specs=pl.BlockSpec((B, tl, E), lambda i: (0, i, 0)),
        compiler_params=pltpu.CompilerParams(
            dimension_semantics=("parallel",),
            vmem_limit_bytes=64 * 1024 * 1024),
    )(xt, *weight_args)

    if Lp != L:
        out = out[:, :L, :]
    return out.transpose(0, 2, 1)                 # (B, nh, L)


# ----------------------------------------------------------------------------
# Parameter prep: pre-transpose, fold 1/sqrt(D) into Q, stack all layers
# ----------------------------------------------------------------------------
def prepare_params(params, *, nheads):
    E = params['in_w'].shape[0]
    H = nheads
    assert E % H == 0
    D = E // H
    scale = 1.0 / math.sqrt(D)

    layers = [l for block in params['blocks'] for l in block]

    def stack(fn):
        return jnp.stack([fn(l) for l in layers], axis=0)

    def qkv_w(l):
        w = l['in_proj_w'].T                       # (E, 3E), columns = [Q | K | V]
        return w.at[:, :E].multiply(scale)         # fold attention scale into Q

    def qkv_b(l):
        return l['in_proj_b'].at[:E].multiply(scale).reshape(1, 3 * E)

    head = jnp.repeat(jnp.eye(H, dtype=jnp.float32), D, axis=0)    # (E, H)

    return {
        'in_w': params['in_w'].T,                                  # (C, E)
        'in_b': params['in_b'].reshape(1, E),
        'wqkv': stack(qkv_w),                                      # (NL, E, 3E)
        'bqkv': stack(qkv_b),                                      # (NL, 1, 3E)
        'wout': stack(lambda l: l['out_proj_w'].T),                # (NL, E, E)
        'bout': stack(lambda l: l['out_proj_b'].reshape(1, E)),
        'wff1': stack(lambda l: l['lin1_w'].T),
        'bff1': stack(lambda l: l['lin1_b'].reshape(1, E)),
        'wff2': stack(lambda l: l['lin2_w'].T),
        'bff2': stack(lambda l: l['lin2_b'].reshape(1, E)),
        'ln1g': stack(lambda l: l['ln1_g'].reshape(1, E)),
        'ln1b': stack(lambda l: l['ln1_b'].reshape(1, E)),
        'ln2g': stack(lambda l: l['ln2_g'].reshape(1, E)),
        'ln2b': stack(lambda l: l['ln2_b'].reshape(1, E)),
        'hsum': head,                                              # (E, H)
        'hexp': head.T,                                            # (H, E)
    }


# ----------------------------------------------------------------------------
# Deterministic synthetic params (shapes match the PyTorch module)
# ----------------------------------------------------------------------------
def init_params(key, C, nh, nlayers, depth):
    def nrm(k, shape, scale=0.1):
        return (scale * jax.random.normal(k, shape)).astype(jnp.float32)

    keys = jax.random.split(key, 2 + depth * nlayers)
    params = {'in_w': nrm(keys[0], (nh, C)), 'in_b': nrm(keys[1], (nh,)), 'blocks': []}
    idx = 2
    for _ in range(depth):
        layers = []
        for _ in range(nlayers):
            ks = jax.random.split(keys[idx], 8)
            idx += 1
            layers.append({
                'in_proj_w': nrm(ks[0], (3 * nh, nh)),
                'in_proj_b': nrm(ks[1], (3 * nh,)),
                'out_proj_w': nrm(ks[2], (nh, nh)),
                'out_proj_b': nrm(ks[3], (nh,)),
                'lin1_w': nrm(ks[4], (nh, nh)),     # dim_feedforward = nh
                'lin1_b': nrm(ks[5], (nh,)),
                'lin2_w': nrm(ks[6], (nh, nh)),
                'lin2_b': nrm(ks[7], (nh,)),
                'ln1_g': jnp.ones((nh,), jnp.float32),
                'ln1_b': jnp.zeros((nh,), jnp.float32),
                'ln2_g': jnp.ones((nh,), jnp.float32),
                'ln2_b': jnp.zeros((nh,), jnp.float32),
            })
        params['blocks'].append(layers)
    return params


# ----------------------------------------------------------------------------
# Pure-JAX reference (mirrors PyTorch semantics) for a correctness self-check
# ----------------------------------------------------------------------------
def _ln_ref(y, g, b, eps=1e-5):
    mu = y.mean(-1, keepdims=True)
    var = ((y - mu) ** 2).mean(-1, keepdims=True)
    return (y - mu) * jax.lax.rsqrt(var + eps) * g + b


def _reference_forward(x, params, *, nheads):
    B, C, L = x.shape
    E = params['in_w'].shape[0]
    H = nheads
    D = E // H
    h = jnp.einsum('bcl,ec->ble', x, params['in_w']) + params['in_b']   # (B, L, E)
    for block in params['blocks']:
        for p in block:
            S, N, _ = h.shape                                           # S=B (seq), N=L (batch)
            qkv = jnp.einsum('sne,fe->snf', h, p['in_proj_w']) + p['in_proj_b']
            q, k, v = qkv[..., :E], qkv[..., E:2 * E], qkv[..., 2 * E:]
            qh = q.reshape(S, N, H, D); kh = k.reshape(S, N, H, D); vh = v.reshape(S, N, H, D)
            sc = jnp.einsum('snhd,tnhd->nhst', qh, kh) / math.sqrt(D)
            pr = jax.nn.softmax(sc, axis=-1)
            oh = jnp.einsum('nhst,tnhd->snhd', pr, vh).reshape(S, N, E)
            attn = jnp.einsum('sne,fe->snf', oh, p['out_proj_w']) + p['out_proj_b']
            h = _ln_ref(h + attn, p['ln1_g'], p['ln1_b'])
            ff = jnp.maximum(jnp.einsum('sne,fe->snf', h, p['lin1_w']) + p['lin1_b'], 0.0)
            ff = jnp.einsum('snf,ef->sne', ff, p['lin2_w']) + p['lin2_b']
            h = _ln_ref(h + ff, p['ln2_g'], p['ln2_b'])
    return h.transpose(0, 2, 1)                                         # (B, nh, L)


# ----------------------------------------------------------------------------
if __name__ == "__main__":
    B, C, L = 2, 4, 16          # batch, input_channels, sequence length
    nh, nheads, nlayers, depth = 32, 4, 2, 2

    key = jax.random.PRNGKey(0)
    kx, kp = jax.random.split(key)
    x = jax.random.normal(kx, (B, C, L), dtype=jnp.float32)
    params = init_params(kp, C, nh, nlayers, depth)
    prep = prepare_params(params, nheads=nheads)

    fwd = jax.jit(transformer_backbone_forward)
    out = fwd(x, prep)
    out = jax.block_until_ready(out)

    assert out.shape == (B, nh, L), out.shape
    assert bool(jnp.all(jnp.isfinite(out)))

    ref = _reference_forward(x, params, nheads=nheads)
    err = float(jnp.max(jnp.abs(out - ref)))
    assert bool(jnp.allclose(out, ref, rtol=2e-2, atol=2e-2)), err

    print("KERNEL_OK")
</pallas_src>

<mosaic_0001>
module attributes {stable_mosaic.version = 11 : i64} {
  func.func @_fused_backbone_kernel(%arg0: i32, %arg1: memref<2x16x4xf32, #tpu.memory_space<vmem>>, %arg2: memref<4x32xf32, #tpu.memory_space<vmem>>, %arg3: memref<1x32xf32, #tpu.memory_space<vmem>>, %arg4: memref<4x32x96xf32, #tpu.memory_space<vmem>>, %arg5: memref<4x1x96xf32, #tpu.memory_space<vmem>>, %arg6: memref<4x32x32xf32, #tpu.memory_space<vmem>>, %arg7: memref<4x1x32xf32, #tpu.memory_space<vmem>>, %arg8: memref<4x32x32xf32, #tpu.memory_space<vmem>>, %arg9: memref<4x1x32xf32, #tpu.memory_space<vmem>>, %arg10: memref<4x32x32xf32, #tpu.memory_space<vmem>>, %arg11: memref<4x1x32xf32, #tpu.memory_space<vmem>>, %arg12: memref<4x1x32xf32, #tpu.memory_space<vmem>>, %arg13: memref<4x1x32xf32, #tpu.memory_space<vmem>>, %arg14: memref<4x1x32xf32, #tpu.memory_space<vmem>>, %arg15: memref<4x1x32xf32, #tpu.memory_space<vmem>>, %arg16: memref<32x4xf32, #tpu.memory_space<vmem>>, %arg17: memref<4x32xf32, #tpu.memory_space<vmem>>, %arg18: memref<2x16x32xf32, #tpu.memory_space<vmem>>) attributes {dimension_semantics = [#tpu.dimension_semantics<parallel>], iteration_bounds = array<i64: 1>, scalar_prefetch = 0 : i64, scratch_operands = 0 : i64, tpu.core_type = #tpu.core_type<tc>, window_params = [{transform_indices = @transform_0, window_bounds = array<i64: 2, 16, 4>}, {pipeline_mode = #tpu.pipeline_mode<synchronous>, transform_indices = @transform_1, window_bounds = array<i64: 4, 32>}, {pipeline_mode = #tpu.pipeline_mode<synchronous>, transform_indices = @transform_2, window_bounds = array<i64: 1, 32>}, {pipeline_mode = #tpu.pipeline_mode<synchronous>, transform_indices = @transform_3, window_bounds = array<i64: 4, 32, 96>}, {pipeline_mode = #tpu.pipeline_mode<synchronous>, transform_indices = @transform_4, window_bounds = array<i64: 4, 1, 96>}, {pipeline_mode = #tpu.pipeline_mode<synchronous>, transform_indices = @transform_5, window_bounds = array<i64: 4, 32, 32>}, {pipeline_mode = #tpu.pipeline_mode<synchronous>, transform_indices = @transform_6, window_bounds = array<i64: 4, 1, 32>}, {pipeline_mode = #tpu.pipeline_mode<synchronous>, transform_indices = @transform_7, window_bounds = array<i64: 4, 32, 32>}, {pipeline_mode = #tpu.pipeline_mode<synchronous>, transform_indices = @transform_8, window_bounds = array<i64: 4, 1, 32>}, {pipeline_mode = #tpu.pipeline_mode<synchronous>, transform_indices = @transform_9, window_bounds = array<i64: 4, 32, 32>}, {pipeline_mode = #tpu.pipeline_mode<synchronous>, transform_indices = @transform_10, window_bounds = array<i64: 4, 1, 32>}, {pipeline_mode = #tpu.pipeline_mode<synchronous>, transform_indices = @transform_11, window_bounds = array<i64: 4, 1, 32>}, {pipeline_mode = #tpu.pipeline_mode<synchronous>, transform_indices = @transform_12, window_bounds = array<i64: 4, 1, 32>}, {pipeline_mode = #tpu.pipeline_mode<synchronous>, transform_indices = @transform_13, window_bounds = array<i64: 4, 1, 32>}, {pipeline_mode = #tpu.pipeline_mode<synchronous>, transform_indices = @transform_14, window_bounds = array<i64: 4, 1, 32>}, {pipeline_mode = #tpu.pipeline_mode<synchronous>, transform_indices = @transform_15, window_bounds = array<i64: 32, 4>}, {pipeline_mode = #tpu.pipeline_mode<synchronous>, transform_indices = @transform_16, window_bounds = array<i64: 4, 32>}, {transform_indices = @transform_17, window_bounds = array<i64: 2, 16, 32>}]} {
    %c0 = arith.constant 0 : index
    %c0_0 = arith.constant 0 : index
    %0 = vector.load %arg16[%c0, %c0_0] : memref<32x4xf32, #tpu.memory_space<vmem>>, vector<32x4xf32>
    %c0_1 = arith.constant 0 : index
    %c0_2 = arith.constant 0 : index
    %1 = vector.load %arg17[%c0_1, %c0_2] : memref<4x32xf32, #tpu.memory_space<vmem>>, vector<4x32xf32>
    %c0_3 = arith.constant 0 : index
    %c0_4 = arith.constant 0 : index
    %2 = vector.load %arg2[%c0_3, %c0_4] : memref<4x32xf32, #tpu.memory_space<vmem>>, vector<4x32xf32>
    %c0_5 = arith.constant 0 : index
    %c0_6 = arith.constant 0 : index
    %3 = vector.load %arg3[%c0_5, %c0_6] : memref<1x32xf32, #tpu.memory_space<vmem>>, vector<1x32xf32>
    %c0_7 = arith.constant 0 : index
    %c0_8 = arith.constant 0 : index
    %c0_9 = arith.constant 0 : index
    %4 = vector.load %arg1[%c0_7, %c0_8, %c0_9] : memref<2x16x4xf32, #tpu.memory_space<vmem>>, vector<1x16x4xf32>
    %5 = vector.shape_cast %4 : vector<1x16x4xf32> to vector<16x4xf32>
    %cst = arith.constant dense<0.000000e+00> : vector<16x32xf32>
    %6 = tpu.matmul %5, %2, %cst {dimension_numbers = #tpu.dot_dimension_numbers<[1], [0], [0], [1], [0, 0, 1, 1], [], []>} : vector<16x4xf32>, vector<4x32xf32>, vector<16x32xf32> -> vector<16x32xf32>
    %7 = vector.broadcast %3 : vector<1x32xf32> to vector<16x32xf32>
    %8 = arith.addf %6, %7 : vector<16x32xf32>
    %c1 = arith.constant 1 : index
    %c0_10 = arith.constant 0 : index
    %c0_11 = arith.constant 0 : index
    %9 = vector.load %arg1[%c1, %c0_10, %c0_11] : memref<2x16x4xf32, #tpu.memory_space<vmem>>, vector<1x16x4xf32>
    %10 = vector.shape_cast %9 : vector<1x16x4xf32> to vector<16x4xf32>
    %cst_12 = arith.constant dense<0.000000e+00> : vector<16x32xf32>
    %11 = tpu.matmul %10, %2, %cst_12 {dimension_numbers = #tpu.dot_dimension_numbers<[1], [0], [0], [1], [0, 0, 1, 1], [], []>} : vector<16x4xf32>, vector<4x32xf32>, vector<16x32xf32> -> vector<16x32xf32>
    %12 = vector.broadcast %3 : vector<1x32xf32> to vector<16x32xf32>
    %13 = arith.addf %11, %12 : vector<16x32xf32>
    %14 = tpu.concatenate %8, %13 in 0 : vector<16x32xf32>, vector<16x32xf32> -> vector<32x32xf32>
    %c0_13 = arith.constant 0 : index
    %c0_14 = arith.constant 0 : index
    %c0_15 = arith.constant 0 : index
    %15 = vector.load %arg4[%c0_13, %c0_14, %c0_15] : memref<4x32x96xf32, #tpu.memory_space<vmem>>, vector<1x32x96xf32>
    %16 = vector.shape_cast %15 : vector<1x32x96xf32> to vector<32x96xf32>
    %c0_16 = arith.constant 0 : index
    %c0_17 = arith.constant 0 : index
    %c0_18 = arith.constant 0 : index
    %17 = vector.load %arg5[%c0_16, %c0_17, %c0_18] : memref<4x1x96xf32, #tpu.memory_space<vmem>>, vector<1x1x96xf32>
    %18 = vector.shape_cast %17 : vector<1x1x96xf32> to vector<1x96xf32>
    %c0_19 = arith.constant 0 : index
    %c0_20 = arith.constant 0 : index
    %c0_21 = arith.constant 0 : index
    %19 = vector.load %arg6[%c0_19, %c0_20, %c0_21] : memref<4x32x32xf32, #tpu.memory_space<vmem>>, vector<1x32x32xf32>
    %20 = vector.shape_cast %19 : vector<1x32x32xf32> to vector<32x32xf32>
    %c0_22 = arith.constant 0 : index
    %c0_23 = arith.constant 0 : index
    %c0_24 = arith.constant 0 : index
    %21 = vector.load %arg7[%c0_22, %c0_23, %c0_24] : memref<4x1x32xf32, #tpu.memory_space<vmem>>, vector<1x1x32xf32>
    %22 = vector.shape_cast %21 : vector<1x1x32xf32> to vector<1x32xf32>
    %c0_25 = arith.constant 0 : index
    %c0_26 = arith.constant 0 : index
    %c0_27 = arith.constant 0 : index
    %23 = vector.load %arg8[%c0_25, %c0_26, %c0_27] : memref<4x32x32xf32, #tpu.memory_space<vmem>>, vector<1x32x32xf32>
    %24 = vector.shape_cast %23 : vector<1x32x32xf32> to vector<32x32xf32>
    %c0_28 = arith.constant 0 : index
    %c0_29 = arith.constant 0 : index
    %c0_30 = arith.constant 0 : index
    %25 = vector.load %arg9[%c0_28, %c0_29, %c0_30] : memref<4x1x32xf32, #tpu.memory_space<vmem>>, vector<1x1x32xf32>
    %26 = vector.shape_cast %25 : vector<1x1x32xf32> to vector<1x32xf32>
    %c0_31 = arith.constant 0 : index
    %c0_32 = arith.constant 0 : index
    %c0_33 = arith.constant 0 : index
    %27 = vector.load %arg10[%c0_31, %c0_32, %c0_33] : memref<4x32x32xf32, #tpu.memory_space<vmem>>, vector<1x32x32xf32>
    %28 = vector.shape_cast %27 : vector<1x32x32xf32> to vector<32x32xf32>
    %c0_34 = arith.constant 0 : index
    %c0_35 = arith.constant 0 : index
    %c0_36 = arith.constant 0 : index
    %29 = vector.load %arg11[%c0_34, %c0_35, %c0_36] : memref<4x1x32xf32, #tpu.memory_space<vmem>>, vector<1x1x32xf32>
    %30 = vector.shape_cast %29 : vector<1x1x32xf32> to vector<1x32xf32>
    %c0_37 = arith.constant 0 : index
    %c0_38 = arith.constant 0 : index
    %c0_39 = arith.constant 0 : index
    %31 = vector.load %arg12[%c0_37, %c0_38, %c0_39] : memref<4x1x32xf32, #tpu.memory_space<vmem>>, vector<1x1x32xf32>
    %32 = vector.shape_cast %31 : vector<1x1x32xf32> to vector<1x32xf32>
    %c0_40 = arith.constant 0 : index
    %c0_41 = arith.constant 0 : index
    %c0_42 = arith.constant 0 : index
    %33 = vector.load %arg13[%c0_40, %c0_41, %c0_42] : memref<4x1x32xf32, #tpu.memory_space<vmem>>, vector<1x1x32xf32>
    %34 = vector.shape_cast %33 : vector<1x1x32xf32> to vector<1x32xf32>
    %c0_43 = arith.constant 0 : index
    %c0_44 = arith.constant 0 : index
    %c0_45 = arith.constant 0 : index
    %35 = vector.load %arg14[%c0_43, %c0_44, %c0_45] : memref<4x1x32xf32, #tpu.memory_space<vmem>>, vector<1x1x32xf32>
    %36 = vector.shape_cast %35 : vector<1x1x32xf32> to vector<1x32xf32>
    %c0_46 = arith.constant 0 : index
    %c0_47 = arith.constant 0 : index
    %c0_48 = arith.constant 0 : index
    %37 = vector.load %arg15[%c0_46, %c0_47, %c0_48] : memref<4x1x32xf32, #tpu.memory_space<vmem>>, vector<1x1x32xf32>
    %38 = vector.shape_cast %37 : vector<1x1x32xf32> to vector<1x32xf32>
    %cst_49 = arith.constant dense<0.000000e+00> : vector<32x96xf32>
    %39 = tpu.matmul %14, %16, %cst_49 {dimension_numbers = #tpu.dot_dimension_numbers<[1], [0], [0], [1], [0, 0, 1, 1], [], []>} : vector<32x32xf32>, vector<32x96xf32>, vector<32x96xf32> -> vector<32x96xf32>
    %40 = vector.broadcast %18 : vector<1x96xf32> to vector<32x96xf32>
    %41 = arith.addf %39, %40 : vector<32x96xf32>
    %42 = vector.extract_strided_slice %41 {offsets = [0, 0], sizes = [16, 32], strides = [1, 1]} : vector<32x96xf32> to vector<16x32xf32>
    %43 = vector.extract_strided_slice %41 {offsets = [16, 0], sizes = [16, 32], strides = [1, 1]} : vector<32x96xf32> to vector<16x32xf32>
    %44 = vector.extract_strided_slice %41 {offsets = [0, 32], sizes = [16, 32], strides = [1, 1]} : vector<32x96xf32> to vector<16x32xf32>
    %45 = vector.extract_strided_slice %41 {offsets = [16, 32], sizes = [16, 32], strides = [1, 1]} : vector<32x96xf32> to vector<16x32xf32>
    %46 = vector.extract_strided_slice %41 {offsets = [0, 64], sizes = [16, 32], strides = [1, 1]} : vector<32x96xf32> to vector<16x32xf32>
    %47 = vector.extract_strided_slice %41 {offsets = [16, 64], sizes = [16, 32], strides = [1, 1]} : vector<32x96xf32> to vector<16x32xf32>
    %48 = arith.mulf %42, %44 : vector<16x32xf32>
    %cst_50 = arith.constant dense<0.000000e+00> : vector<16x4xf32>
    %49 = tpu.matmul %48, %0, %cst_50 {dimension_numbers = #tpu.dot_dimension_numbers<[1], [0], [0], [1], [0, 0, 1, 1], [], []>} : vector<16x32xf32>, vector<32x4xf32>, vector<16x4xf32> -> vector<16x4xf32>
    %50 = arith.mulf %42, %45 : vector<16x32xf32>
    %cst_51 = arith.constant dense<0.000000e+00> : vector<16x4xf32>
    %51 = tpu.matmul %50, %0, %cst_51 {dimension_numbers = #tpu.dot_dimension_numbers<[1], [0], [0], [1], [0, 0, 1, 1], [], []>} : vector<16x32xf32>, vector<32x4xf32>, vector<16x4xf32> -> vector<16x4xf32>
    %52 = arith.maximumf %49, %51 : vector<16x4xf32>
    %53 = arith.subf %49, %52 : vector<16x4xf32>
    %54 = math.exp %53 : vector<16x4xf32>
    %55 = arith.subf %51, %52 : vector<16x4xf32>
    %56 = math.exp %55 : vector<16x4xf32>
    %57 = arith.addf %54, %56 : vector<16x4xf32>
    %58 = tpu.reciprocal %57 {approx = true} : vector<16x4xf32> -> vector<16x4xf32>
    %59 = arith.mulf %54, %58 : vector<16x4xf32>
    %cst_52 = arith.constant dense<0.000000e+00> : vector<16x32xf32>
    %60 = tpu.matmul %59, %1, %cst_52 {dimension_numbers = #tpu.dot_dimension_numbers<[1], [0], [0], [1], [0, 0, 1, 1], [], []>} : vector<16x4xf32>, vector<4x32xf32>, vector<16x32xf32> -> vector<16x32xf32>
    %61 = arith.mulf %60, %46 : vector<16x32xf32>
    %62 = arith.mulf %56, %58 : vector<16x4xf32>
    %cst_53 = arith.constant dense<0.000000e+00> : vector<16x32xf32>
    %63 = tpu.matmul %62, %1, %cst_53 {dimension_numbers = #tpu.dot_dimension_numbers<[1], [0], [0], [1], [0, 0, 1, 1], [], []>} : vector<16x4xf32>, vector<4x32xf32>, vector<16x32xf32> -> vector<16x32xf32>
    %64 = arith.mulf %63, %47 : vector<16x32xf32>
    %65 = arith.addf %61, %64 : vector<16x32xf32>
    %66 = arith.mulf %43, %44 : vector<16x32xf32>
    %cst_54 = arith.constant dense<0.000000e+00> : vector<16x4xf32>
    %67 = tpu.matmul %66, %0, %cst_54 {dimension_numbers = #tpu.dot_dimension_numbers<[1], [0], [0], [1], [0, 0, 1, 1], [], []>} : vector<16x32xf32>, vector<32x4xf32>, vector<16x4xf32> -> vector<16x4xf32>
    %68 = arith.mulf %43, %45 : vector<16x32xf32>
    %cst_55 = arith.constant dense<0.000000e+00> : vector<16x4xf32>
    %69 = tpu.matmul %68, %0, %cst_55 {dimension_numbers = #tpu.dot_dimension_numbers<[1], [0], [0], [1], [0, 0, 1, 1], [], []>} : vector<16x32xf32>, vector<32x4xf32>, vector<16x4xf32> -> vector<16x4xf32>
    %70 = arith.maximumf %67, %69 : vector<16x4xf32>
    %71 = arith.subf %67, %70 : vector<16x4xf32>
    %72 = math.exp %71 : vector<16x4xf32>
    %73 = arith.subf %69, %70 : vector<16x4xf32>
    %74 = math.exp %73 : vector<16x4xf32>
    %75 = arith.addf %72, %74 : vector<16x4xf32>
    %76 = tpu.reciprocal %75 {approx = true} : vector<16x4xf32> -> vector<16x4xf32>
    %77 = arith.mulf %72, %76 : vector<16x4xf32>
    %cst_56 = arith.constant dense<0.000000e+00> : vector<16x32xf32>
    %78 = tpu.matmul %77, %1, %cst_56 {dimension_numbers = #tpu.dot_dimension_numbers<[1], [0], [0], [1], [0, 0, 1, 1], [], []>} : vector<16x4xf32>, vector<4x32xf32>, vector<16x32xf32> -> vector<16x32xf32>
    %79 = arith.mulf %78, %46 : vector<16x32xf32>
    %80 = arith.mulf %74, %76 : vector<16x4xf32>
    %cst_57 = arith.constant dense<0.000000e+00> : vector<16x32xf32>
    %81 = tpu.matmul %80, %1, %cst_57 {dimension_numbers = #tpu.dot_dimension_numbers<[1], [0], [0], [1], [0, 0, 1, 1], [], []>} : vector<16x4xf32>, vector<4x32xf32>, vector<16x32xf32> -> vector<16x32xf32>
    %82 = arith.mulf %81, %47 : vector<16x32xf32>
    %83 = arith.addf %79, %82 : vector<16x32xf32>
    %84 = tpu.concatenate %65, %83 in 0 : vector<16x32xf32>, vector<16x32xf32> -> vector<32x32xf32>
    %cst_58 = arith.constant dense<0.000000e+00> : vector<32x32xf32>
    %85 = tpu.matmul %84, %20, %cst_58 {dimension_numbers = #tpu.dot_dimension_numbers<[1], [0], [0], [1], [0, 0, 1, 1], [], []>} : vector<32x32xf32>, vector<32x32xf32>, vector<32x32xf32> -> vector<32x32xf32>
    %86 = vector.broadcast %22 : vector<1x32xf32> to vector<32x32xf32>
    %87 = arith.addf %85, %86 : vector<32x32xf32>
    %88 = arith.addf %14, %87 : vector<32x32xf32>
    %cst_59 = arith.constant dense<0.000000e+00> : vector<32xf32>
    %89 = vector.multi_reduction <add>, %88, %cst_59 [1] : vector<32x32xf32> to vector<32xf32>
    %90 = vector.shape_cast %89 : vector<32xf32> to vector<32x1xf32>
    %cst_60 = arith.constant 3.200000e+01 : f32
    %91 = vector.broadcast %cst_60 : f32 to vector<32x1xf32>
    %92 = arith.divf %90, %91 : vector<32x1xf32>
    %93 = vector.broadcast %92 : vector<32x1xf32> to vector<32x32xf32>
    %94 = arith.subf %88, %93 : vector<32x32xf32>
    %95 = arith.mulf %94, %94 : vector<32x32xf32>
    %cst_61 = arith.constant dense<0.000000e+00> : vector<32xf32>
    %96 = vector.multi_reduction <add>, %95, %cst_61 [1] : vector<32x32xf32> to vector<32xf32>
    %97 = vector.shape_cast %96 : vector<32xf32> to vector<32x1xf32>
    %cst_62 = arith.constant 3.200000e+01 : f32
    %98 = vector.broadcast %cst_62 : f32 to vector<32x1xf32>
    %99 = arith.divf %97, %98 : vector<32x1xf32>
    %cst_63 = arith.constant 9.99999974E-6 : f32
    %100 = vector.broadcast %cst_63 : f32 to vector<32x1xf32>
    %101 = arith.addf %99, %100 : vector<32x1xf32>
    %102 = math.rsqrt %101 : vector<32x1xf32>
    %103 = vector.broadcast %102 : vector<32x1xf32> to vector<32x32xf32>
    %104 = arith.mulf %94, %103 : vector<32x32xf32>
    %105 = vector.broadcast %32 : vector<1x32xf32> to vector<32x32xf32>
    %106 = arith.mulf %104, %105 : vector<32x32xf32>
    %107 = vector.broadcast %34 : vector<1x32xf32> to vector<32x32xf32>
    %108 = arith.addf %106, %107 : vector<32x32xf32>
    %cst_64 = arith.constant dense<0.000000e+00> : vector<32x32xf32>
    %109 = tpu.matmul %108, %24, %cst_64 {dimension_numbers = #tpu.dot_dimension_numbers<[1], [0], [0], [1], [0, 0, 1, 1], [], []>} : vector<32x32xf32>, vector<32x32xf32>, vector<32x32xf32> -> vector<32x32xf32>
    %110 = vector.broadcast %26 : vector<1x32xf32> to vector<32x32xf32>
    %111 = arith.addf %109, %110 : vector<32x32xf32>
    %cst_65 = arith.constant 0.000000e+00 : f32
    %112 = vector.broadcast %cst_65 : f32 to vector<32x32xf32>
    %113 = arith.maximumf %111, %112 : vector<32x32xf32>
    %cst_66 = arith.constant dense<0.000000e+00> : vector<32x32xf32>
    %114 = tpu.matmul %113, %28, %cst_66 {dimension_numbers = #tpu.dot_dimension_numbers<[1], [0], [0], [1], [0, 0, 1, 1], [], []>} : vector<32x32xf32>, vector<32x32xf32>, vector<32x32xf32> -> vector<32x32xf32>
    %115 = vector.broadcast %30 : vector<1x32xf32> to vector<32x32xf32>
    %116 = arith.addf %114, %115 : vector<32x32xf32>
    %117 = arith.addf %108, %116 : vector<32x32xf32>
    %cst_67 = arith.constant dense<0.000000e+00> : vector<32xf32>
    %118 = vector.multi_reduction <add>, %117, %cst_67 [1] : vector<32x32xf32> to vector<32xf32>
    %119 = vector.shape_cast %118 : vector<32xf32> to vector<32x1xf32>
    %cst_68 = arith.constant 3.200000e+01 : f32
    %120 = vector.broadcast %cst_68 : f32 to vector<32x1xf32>
    %121 = arith.divf %119, %120 : vector<32x1xf32>
    %122 = vector.broadcast %121 : vector<32x1xf32> to vector<32x32xf32>
    %123 = arith.subf %117, %122 : vector<32x32xf32>
    %124 = arith.mulf %123, %123 : vector<32x32xf32>
    %cst_69 = arith.constant dense<0.000000e+00> : vector<32xf32>
    %125 = vector.multi_reduction <add>, %124, %cst_69 [1] : vector<32x32xf32> to vector<32xf32>
    %126 = vector.shape_cast %125 : vector<32xf32> to vector<32x1xf32>
    %cst_70 = arith.constant 3.200000e+01 : f32
    %127 = vector.broadcast %cst_70 : f32 to vector<32x1xf32>
    %128 = arith.divf %126, %127 : vector<32x1xf32>
    %cst_71 = arith.constant 9.99999974E-6 : f32
    %129 = vector.broadcast %cst_71 : f32 to vector<32x1xf32>
    %130 = arith.addf %128, %129 : vector<32x1xf32>
    %131 = math.rsqrt %130 : vector<32x1xf32>
    %132 = vector.broadcast %131 : vector<32x1xf32> to vector<32x32xf32>
    %133 = arith.mulf %123, %132 : vector<32x32xf32>
    %134 = vector.broadcast %36 : vector<1x32xf32> to vector<32x32xf32>
    %135 = arith.mulf %133, %134 : vector<32x32xf32>
    %136 = vector.broadcast %38 : vector<1x32xf32> to vector<32x32xf32>
    %137 = arith.addf %135, %136 : vector<32x32xf32>
    %c1_72 = arith.constant 1 : index
    %c0_73 = arith.constant 0 : index
    %c0_74 = arith.constant 0 : index
    %138 = vector.load %arg4[%c1_72, %c0_73, %c0_74] : memref<4x32x96xf32, #tpu.memory_space<vmem>>, vector<1x32x96xf32>
    %139 = vector.shape_cast %138 : vector<1x32x96xf32> to vector<32x96xf32>
    %c1_75 = arith.constant 1 : index
    %c0_76 = arith.constant 0 : index
    %c0_77 = arith.constant 0 : index
    %140 = vector.load %arg5[%c1_75, %c0_76, %c0_77] : memref<4x1x96xf32, #tpu.memory_space<vmem>>, vector<1x1x96xf32>
    %141 = vector.shape_cast %140 : vector<1x1x96xf32> to vector<1x96xf32>
    %c1_78 = arith.constant 1 : index
    %c0_79 = arith.constant 0 : index
    %c0_80 = arith.constant 0 : index
    %142 = vector.load %arg6[%c1_78, %c0_79, %c0_80] : memref<4x32x32xf32, #tpu.memory_space<vmem>>, vector<1x32x32xf32>
    %143 = vector.shape_cast %142 : vector<1x32x32xf32> to vector<32x32xf32>
    %c1_81 = arith.constant 1 : index
    %c0_82 = arith.constant 0 : index
    %c0_83 = arith.constant 0 : index
    %144 = vector.load %arg7[%c1_81, %c0_82, %c0_83] : memref<4x1x32xf32, #tpu.memory_space<vmem>>, vector<1x1x32xf32>
    %145 = vector.shape_cast %144 : vector<1x1x32xf32> to vector<1x32xf32>
    %c1_84 = arith.constant 1 : index
    %c0_85 = arith.constant 0 : index
    %c0_86 = arith.constant 0 : index
    %146 = vector.load %arg8[%c1_84, %c0_85, %c0_86] : memref<4x32x32xf32, #tpu.memory_space<vmem>>, vector<1x32x32xf32>
    %147 = vector.shape_cast %146 : vector<1x32x32xf32> to vector<32x32xf32>
    %c1_87 = arith.constant 1 : index
    %c0_88 = arith.constant 0 : index
    %c0_89 = arith.constant 0 : index
    %148 = vector.load %arg9[%c1_87, %c0_88, %c0_89] : memref<4x1x32xf32, #tpu.memory_space<vmem>>, vector<1x1x32xf32>
    %149 = vector.shape_cast %148 : vector<1x1x32xf32> to vector<1x32xf32>
    %c1_90 = arith.constant 1 : index
    %c0_91 = arith.constant 0 : index
    %c0_92 = arith.constant 0 : index
    %150 = vector.load %arg10[%c1_90, %c0_91, %c0_92] : memref<4x32x32xf32, #tpu.memory_space<vmem>>, vector<1x32x32xf32>
    %151 = vector.shape_cast %150 : vector<1x32x32xf32> to vector<32x32xf32>
    %c1_93 = arith.constant 1 : index
    %c0_94 = arith.constant 0 : index
    %c0_95 = arith.constant 0 : index
    %152 = vector.load %arg11[%c1_93, %c0_94, %c0_95] : memref<4x1x32xf32, #tpu.memory_space<vmem>>, vector<1x1x32xf32>
    %153 = vector.shape_cast %152 : vector<1x1x32xf32> to vector<1x32xf32>
    %c1_96 = arith.constant 1 : index
    %c0_97 = arith.constant 0 : index
    %c0_98 = arith.constant 0 : index
    %154 = vector.load %arg12[%c1_96, %c0_97, %c0_98] : memref<4x1x32xf32, #tpu.memory_space<vmem>>, vector<1x1x32xf32>
    %155 = vector.shape_cast %154 : vector<1x1x32xf32> to vector<1x32xf32>
    %c1_99 = arith.constant 1 : index
    %c0_100 = arith.constant 0 : index
    %c0_101 = arith.constant 0 : index
    %156 = vector.load %arg13[%c1_99, %c0_100, %c0_101] : memref<4x1x32xf32, #tpu.memory_space<vmem>>, vector<1x1x32xf32>
    %157 = vector.shape_cast %156 : vector<1x1x32xf32> to vector<1x32xf32>
    %c1_102 = arith.constant 1 : index
    %c0_103 = arith.constant 0 : index
    %c0_104 = arith.constant 0 : index
    %158 = vector.load %arg14[%c1_102, %c0_103, %c0_104] : memref<4x1x32xf32, #tpu.memory_space<vmem>>, vector<1x1x32xf32>
    %159 = vector.shape_cast %158 : vector<1x1x32xf32> to vector<1x32xf32>
    %c1_105 = arith.constant 1 : index
    %c0_106 = arith.constant 0 : index
    %c0_107 = arith.constant 0 : index
    %160 = vector.load %arg15[%c1_105, %c0_106, %c0_107] : memref<4x1x32xf32, #tpu.memory_space<vmem>>, vector<1x1x32xf32>
    %161 = vector.shape_cast %160 : vector<1x1x32xf32> to vector<1x32xf32>
    %cst_108 = arith.constant dense<0.000000e+00> : vector<32x96xf32>
    %162 = tpu.matmul %137, %139, %cst_108 {dimension_numbers = #tpu.dot_dimension_numbers<[1], [0], [0], [1], [0, 0, 1, 1], [], []>} : vector<32x32xf32>, vector<32x96xf32>, vector<32x96xf32> -> vector<32x96xf32>
    %163 = vector.broadcast %141 : vector<1x96xf32> to vector<32x96xf32>
    %164 = arith.addf %162, %163 : vector<32x96xf32>
    %165 = vector.extract_strided_slice %164 {offsets = [0, 0], sizes = [16, 32], strides = [1, 1]} : vector<32x96xf32> to vector<16x32xf32>
    %166 = vector.extract_strided_slice %164 {offsets = [16, 0], sizes = [16, 32], strides = [1, 1]} : vector<32x96xf32> to vector<16x32xf32>
    %167 = vector.extract_strided_slice %164 {offsets = [0, 32], sizes = [16, 32], strides = [1, 1]} : vector<32x96xf32> to vector<16x32xf32>
    %168 = vector.extract_strided_slice %164 {offsets = [16, 32], sizes = [16, 32], strides = [1, 1]} : vector<32x96xf32> to vector<16x32xf32>
    %169 = vector.extract_strided_slice %164 {offsets = [0, 64], sizes = [16, 32], strides = [1, 1]} : vector<32x96xf32> to vector<16x32xf32>
    %170 = vector.extract_strided_slice %164 {offsets = [16, 64], sizes = [16, 32], strides = [1, 1]} : vector<32x96xf32> to vector<16x32xf32>
    %171 = arith.mulf %165, %167 : vector<16x32xf32>
    %cst_109 = arith.constant dense<0.000000e+00> : vector<16x4xf32>
    %172 = tpu.matmul %171, %0, %cst_109 {dimension_numbers = #tpu.dot_dimension_numbers<[1], [0], [0], [1], [0, 0, 1, 1], [], []>} : vector<16x32xf32>, vector<32x4xf32>, vector<16x4xf32> -> vector<16x4xf32>
    %173 = arith.mulf %165, %168 : vector<16x32xf32>
    %cst_110 = arith.constant dense<0.000000e+00> : vector<16x4xf32>
    %174 = tpu.matmul %173, %0, %cst_110 {dimension_numbers = #tpu.dot_dimension_numbers<[1], [0], [0], [1], [0, 0, 1, 1], [], []>} : vector<16x32xf32>, vector<32x4xf32>, vector<16x4xf32> -> vector<16x4xf32>
    %175 = arith.maximumf %172, %174 : vector<16x4xf32>
    %176 = arith.subf %172, %175 : vector<16x4xf32>
    %177 = math.exp %176 : vector<16x4xf32>
    %178 = arith.subf %174, %175 : vector<16x4xf32>
    %179 = math.exp %178 : vector<16x4xf32>
    %180 = arith.addf %177, %179 : vector<16x4xf32>
    %181 = tpu.reciprocal %180 {approx = true} : vector<16x4xf32> -> vector<16x4xf32>
    %182 = arith.mulf %177, %181 : vector<16x4xf32>
    %cst_111 = arith.constant dense<0.000000e+00> : vector<16x32xf32>
    %183 = tpu.matmul %182, %1, %cst_111 {dimension_numbers = #tpu.dot_dimension_numbers<[1], [0], [0], [1], [0, 0, 1, 1], [], []>} : vector<16x4xf32>, vector<4x32xf32>, vector<16x32xf32> -> vector<16x32xf32>
    %184 = arith.mulf %183, %169 : vector<16x32xf32>
    %185 = arith.mulf %179, %181 : vector<16x4xf32>
    %cst_112 = arith.constant dense<0.000000e+00> : vector<16x32xf32>
    %186 = tpu.matmul %185, %1, %cst_112 {dimension_numbers = #tpu.dot_dimension_numbers<[1], [0], [0], [1], [0, 0, 1, 1], [], []>} : vector<16x4xf32>, vector<4x32xf32>, vector<16x32xf32> -> vector<16x32xf32>
    %187 = arith.mulf %186, %170 : vector<16x32xf32>
    %188 = arith.addf %184, %187 : vector<16x32xf32>
    %189 = arith.mulf %166, %167 : vector<16x32xf32>
    %cst_113 = arith.constant dense<0.000000e+00> : vector<16x4xf32>
    %190 = tpu.matmul %189, %0, %cst_113 {dimension_numbers = #tpu.dot_dimension_numbers<[1], [0], [0], [1], [0, 0, 1, 1], [], []>} : vector<16x32xf32>, vector<32x4xf32>, vector<16x4xf32> -> vector<16x4xf32>
    %191 = arith.mulf %166, %168 : vector<16x32xf32>
    %cst_114 = arith.constant dense<0.000000e+00> : vector<16x4xf32>
    %192 = tpu.matmul %191, %0, %cst_114 {dimension_numbers = #tpu.dot_dimension_numbers<[1], [0], [0], [1], [0, 0, 1, 1], [], []>} : vector<16x32xf32>, vector<32x4xf32>, vector<16x4xf32> -> vector<16x4xf32>
    %193 = arith.maximumf %190, %192 : vector<16x4xf32>
    %194 = arith.subf %190, %193 : vector<16x4xf32>
    %195 = math.exp %194 : vector<16x4xf32>
    %196 = arith.subf %192, %193 : vector<16x4xf32>
    %197 = math.exp %196 : vector<16x4xf32>
    %198 = arith.addf %195, %197 : vector<16x4xf32>
    %199 = tpu.reciprocal %198 {approx = true} : vector<16x4xf32> -> vector<16x4xf32>
    %200 = arith.mulf %195, %199 : vector<16x4xf32>
    %cst_115 = arith.constant dense<0.000000e+00> : vector<16x32xf32>
    %201 = tpu.matmul %200, %1, %cst_115 {dimension_numbers = #tpu.dot_dimension_numbers<[1], [0], [0], [1], [0, 0, 1, 1], [], []>} : vector<16x4xf32>, vector<4x32xf32>, vector<16x32xf32> -> vector<16x32xf32>
    %202 = arith.mulf %201, %169 : vector<16x32xf32>
    %203 = arith.mulf %197, %199 : vector<16x4xf32>
    %cst_116 = arith.constant dense<0.000000e+00> : vector<16x32xf32>
    %204 = tpu.matmul %203, %1, %cst_116 {dimension_numbers = #tpu.dot_dimension_numbers<[1], [0], [0], [1], [0, 0, 1, 1], [], []>} : vector<16x4xf32>, vector<4x32xf32>, vector<16x32xf32> -> vector<16x32xf32>
    %205 = arith.mulf %204, %170 : vector<16x32xf32>
    %206 = arith.addf %202, %205 : vector<16x32xf32>
    %207 = tpu.concatenate %188, %206 in 0 : vector<16x32xf32>, vector<16x32xf32> -> vector<32x32xf32>
    %cst_117 = arith.constant dense<0.000000e+00> : vector<32x32xf32>
    %208 = tpu.matmul %207, %143, %cst_117 {dimension_numbers = #tpu.dot_dimension_numbers<[1], [0], [0], [1], [0, 0, 1, 1], [], []>} : vector<32x32xf32>, vector<32x32xf32>, vector<32x32xf32> -> vector<32x32xf32>
    %209 = vector.broadcast %145 : vector<1x32xf32> to vector<32x32xf32>
    %210 = arith.addf %208, %209 : vector<32x32xf32>
    %211 = arith.addf %137, %210 : vector<32x32xf32>
    %cst_118 = arith.constant dense<0.000000e+00> : vector<32xf32>
    %212 = vector.multi_reduction <add>, %211, %cst_118 [1] : vector<32x32xf32> to vector<32xf32>
    %213 = vector.shape_cast %212 : vector<32xf32> to vector<32x1xf32>
    %cst_119 = arith.constant 3.200000e+01 : f32
    %214 = vector.broadcast %cst_119 : f32 to vector<32x1xf32>
    %215 = arith.divf %213, %214 : vector<32x1xf32>
    %216 = vector.broadcast %215 : vector<32x1xf32> to vector<32x32xf32>
    %217 = arith.subf %211, %216 : vector<32x32xf32>
    %218 = arith.mulf %217, %217 : vector<32x32xf32>
    %cst_120 = arith.constant dense<0.000000e+00> : vector<32xf32>
    %219 = vector.multi_reduction <add>, %218, %cst_120 [1] : vector<32x32xf32> to vector<32xf32>
    %220 = vector.shape_cast %219 : vector<32xf32> to vector<32x1xf32>
    %cst_121 = arith.constant 3.200000e+01 : f32
    %221 = vector.broadcast %cst_121 : f32 to vector<32x1xf32>
    %222 = arith.divf %220, %221 : vector<32x1xf32>
    %cst_122 = arith.constant 9.99999974E-6 : f32
    %223 = vector.broadcast %cst_122 : f32 to vector<32x1xf32>
    %224 = arith.addf %222, %223 : vector<32x1xf32>
    %225 = math.rsqrt %224 : vector<32x1xf32>
    %226 = vector.broadcast %225 : vector<32x1xf32> to vector<32x32xf32>
    %227 = arith.mulf %217, %226 : vector<32x32xf32>
    %228 = vector.broadcast %155 : vector<1x32xf32> to vector<32x32xf32>
    %229 = arith.mulf %227, %228 : vector<32x32xf32>
    %230 = vector.broadcast %157 : vector<1x32xf32> to vector<32x32xf32>
    %231 = arith.addf %229, %230 : vector<32x32xf32>
    %cst_123 = arith.constant dense<0.000000e+00> : vector<32x32xf32>
    %232 = tpu.matmul %231, %147, %cst_123 {dimension_numbers = #tpu.dot_dimension_numbers<[1], [0], [0], [1], [0, 0, 1, 1], [], []>} : vector<32x32xf32>, vector<32x32xf32>, vector<32x32xf32> -> vector<32x32xf32>
    %233 = vector.broadcast %149 : vector<1x32xf32> to vector<32x32xf32>
    %234 = arith.addf %232, %233 : vector<32x32xf32>
    %cst_124 = arith.constant 0.000000e+00 : f32
    %235 = vector.broadcast %cst_124 : f32 to vector<32x32xf32>
    %236 = arith.maximumf %234, %235 : vector<32x32xf32>
    %cst_125 = arith.constant dense<0.000000e+00> : vector<32x32xf32>
    %237 = tpu.matmul %236, %151, %cst_125 {dimension_numbers = #tpu.dot_dimension_numbers<[1], [0], [0], [1], [0, 0, 1, 1], [], []>} : vector<32x32xf32>, vector<32x32xf32>, vector<32x32xf32> -> vector<32x32xf32>
    %238 = vector.broadcast %153 : vector<1x32xf32> to vector<32x32xf32>
    %239 = arith.addf %237, %238 : vector<32x32xf32>
    %240 = arith.addf %231, %239 : vector<32x32xf32>
    %cst_126 = arith.constant dense<0.000000e+00> : vector<32xf32>
    %241 = vector.multi_reduction <add>, %240, %cst_126 [1] : vector<32x32xf32> to vector<32xf32>
    %242 = vector.shape_cast %241 : vector<32xf32> to vector<32x1xf32>
    %cst_127 = arith.constant 3.200000e+01 : f32
    %243 = vector.broadcast %cst_127 : f32 to vector<32x1xf32>
    %244 = arith.divf %242, %243 : vector<32x1xf32>
    %245 = vector.broadcast %244 : vector<32x1xf32> to vector<32x32xf32>
    %246 = arith.subf %240, %245 : vector<32x32xf32>
    %247 = arith.mulf %246, %246 : vector<32x32xf32>
    %cst_128 = arith.constant dense<0.000000e+00> : vector<32xf32>
    %248 = vector.multi_reduction <add>, %247, %cst_128 [1] : vector<32x32xf32> to vector<32xf32>
    %249 = vector.shape_cast %248 : vector<32xf32> to vector<32x1xf32>
    %cst_129 = arith.constant 3.200000e+01 : f32
    %250 = vector.broadcast %cst_129 : f32 to vector<32x1xf32>
    %251 = arith.divf %249, %250 : vector<32x1xf32>
    %cst_130 = arith.constant 9.99999974E-6 : f32
    %252 = vector.broadcast %cst_130 : f32 to vector<32x1xf32>
    %253 = arith.addf %251, %252 : vector<32x1xf32>
    %254 = math.rsqrt %253 : vector<32x1xf32>
    %255 = vector.broadcast %254 : vector<32x1xf32> to vector<32x32xf32>
    %256 = arith.mulf %246, %255 : vector<32x32xf32>
    %257 = vector.broadcast %159 : vector<1x32xf32> to vector<32x32xf32>
    %258 = arith.mulf %256, %257 : vector<32x32xf32>
    %259 = vector.broadcast %161 : vector<1x32xf32> to vector<32x32xf32>
    %260 = arith.addf %258, %259 : vector<32x32xf32>
    %c2 = arith.constant 2 : index
    %c0_131 = arith.constant 0 : index
    %c0_132 = arith.constant 0 : index
    %261 = vector.load %arg4[%c2, %c0_131, %c0_132] : memref<4x32x96xf32, #tpu.memory_space<vmem>>, vector<1x32x96xf32>
    %262 = vector.shape_cast %261 : vector<1x32x96xf32> to vector<32x96xf32>
    %c2_133 = arith.constant 2 : index
    %c0_134 = arith.constant 0 : index
    %c0_135 = arith.constant 0 : index
    %263 = vector.load %arg5[%c2_133, %c0_134, %c0_135] : memref<4x1x96xf32, #tpu.memory_space<vmem>>, vector<1x1x96xf32>
    %264 = vector.shape_cast %263 : vector<1x1x96xf32> to vector<1x96xf32>
    %c2_136 = arith.constant 2 : index
    %c0_137 = arith.constant 0 : index
    %c0_138 = arith.constant 0 : index
    %265 = vector.load %arg6[%c2_136, %c0_137, %c0_138] : memref<4x32x32xf32, #tpu.memory_space<vmem>>, vector<1x32x32xf32>
    %266 = vector.shape_cast %265 : vector<1x32x32xf32> to vector<32x32xf32>
    %c2_139 = arith.constant 2 : index
    %c0_140 = arith.constant 0 : index
    %c0_141 = arith.constant 0 : index
    %267 = vector.load %arg7[%c2_139, %c0_140, %c0_141] : memref<4x1x32xf32, #tpu.memory_space<vmem>>, vector<1x1x32xf32>
    %268 = vector.shape_cast %267 : vector<1x1x32xf32> to vector<1x32xf32>
    %c2_142 = arith.constant 2 : index
    %c0_143 = arith.constant 0 : index
    %c0_144 = arith.constant 0 : index
    %269 = vector.load %arg8[%c2_142, %c0_143, %c0_144] : memref<4x32x32xf32, #tpu.memory_space<vmem>>, vector<1x32x32xf32>
    %270 = vector.shape_cast %269 : vector<1x32x32xf32> to vector<32x32xf32>
    %c2_145 = arith.constant 2 : index
    %c0_146 = arith.constant 0 : index
    %c0_147 = arith.constant 0 : index
    %271 = vector.load %arg9[%c2_145, %c0_146, %c0_147] : memref<4x1x32xf32, #tpu.memory_space<vmem>>, vector<1x1x32xf32>
    %272 = vector.shape_cast %271 : vector<1x1x32xf32> to vector<1x32xf32>
    %c2_148 = arith.constant 2 : index
    %c0_149 = arith.constant 0 : index
    %c0_150 = arith.constant 0 : index
    %273 = vector.load %arg10[%c2_148, %c0_149, %c0_150] : memref<4x32x32xf32, #tpu.memory_space<vmem>>, vector<1x32x32xf32>
    %274 = vector.shape_cast %273 : vector<1x32x32xf32> to vector<32x32xf32>
    %c2_151 = arith.constant 2 : index
    %c0_152 = arith.constant 0 : index
    %c0_153 = arith.constant 0 : index
    %275 = vector.load %arg11[%c2_151, %c0_152, %c0_153] : memref<4x1x32xf32, #tpu.memory_space<vmem>>, vector<1x1x32xf32>
    %276 = vector.shape_cast %275 : vector<1x1x32xf32> to vector<1x32xf32>
    %c2_154 = arith.constant 2 : index
    %c0_155 = arith.constant 0 : index
    %c0_156 = arith.constant 0 : index
    %277 = vector.load %arg12[%c2_154, %c0_155, %c0_156] : memref<4x1x32xf32, #tpu.memory_space<vmem>>, vector<1x1x32xf32>
    %278 = vector.shape_cast %277 : vector<1x1x32xf32> to vector<1x32xf32>
    %c2_157 = arith.constant 2 : index
    %c0_158 = arith.constant 0 : index
    %c0_159 = arith.constant 0 : index
    %279 = vector.load %arg13[%c2_157, %c0_158, %c0_159] : memref<4x1x32xf32, #tpu.memory_space<vmem>>, vector<1x1x32xf32>
    %280 = vector.shape_cast %279 : vector<1x1x32xf32> to vector<1x32xf32>
    %c2_160 = arith.constant 2 : index
    %c0_161 = arith.constant 0 : index
    %c0_162 = arith.constant 0 : index
    %281 = vector.load %arg14[%c2_160, %c0_161, %c0_162] : memref<4x1x32xf32, #tpu.memory_space<vmem>>, vector<1x1x32xf32>
    %282 = vector.shape_cast %281 : vector<1x1x32xf32> to vector<1x32xf32>
    %c2_163 = arith.constant 2 : index
    %c0_164 = arith.constant 0 : index
    %c0_165 = arith.constant 0 : index
    %283 = vector.load %arg15[%c2_163, %c0_164, %c0_165] : memref<4x1x32xf32, #tpu.memory_space<vmem>>, vector<1x1x32xf32>
    %284 = vector.shape_cast %283 : vector<1x1x32xf32> to vector<1x32xf32>
    %cst_166 = arith.constant dense<0.000000e+00> : vector<32x96xf32>
    %285 = tpu.matmul %260, %262, %cst_166 {dimension_numbers = #tpu.dot_dimension_numbers<[1], [0], [0], [1], [0, 0, 1, 1], [], []>} : vector<32x32xf32>, vector<32x96xf32>, vector<32x96xf32> -> vector<32x96xf32>
    %286 = vector.broadcast %264 : vector<1x96xf32> to vector<32x96xf32>
    %287 = arith.addf %285, %286 : vector<32x96xf32>
    %288 = vector.extract_strided_slice %287 {offsets = [0, 0], sizes = [16, 32], strides = [1, 1]} : vector<32x96xf32> to vector<16x32xf32>
    %289 = vector.extract_strided_slice %287 {offsets = [16, 0], sizes = [16, 32], strides = [1, 1]} : vector<32x96xf32> to vector<16x32xf32>
    %290 = vector.extract_strided_slice %287 {offsets = [0, 32], sizes = [16, 32], strides = [1, 1]} : vector<32x96xf32> to vector<16x32xf32>
    %291 = vector.extract_strided_slice %287 {offsets = [16, 32], sizes = [16, 32], strides = [1, 1]} : vector<32x96xf32> to vector<16x32xf32>
    %292 = vector.extract_strided_slice %287 {offsets = [0, 64], sizes = [16, 32], strides = [1, 1]} : vector<32x96xf32> to vector<16x32xf32>
    %293 = vector.extract_strided_slice %287 {offsets = [16, 64], sizes = [16, 32], strides = [1, 1]} : vector<32x96xf32> to vector<16x32xf32>
    %294 = arith.mulf %288, %290 : vector<16x32xf32>
    %cst_167 = arith.constant dense<0.000000e+00> : vector<16x4xf32>
    %295 = tpu.matmul %294, %0, %cst_167 {dimension_numbers = #tpu.dot_dimension_numbers<[1], [0], [0], [1], [0, 0, 1, 1], [], []>} : vector<16x32xf32>, vector<32x4xf32>, vector<16x4xf32> -> vector<16x4xf32>
    %296 = arith.mulf %288, %291 : vector<16x32xf32>
    %cst_168 = arith.constant dense<0.000000e+00> : vector<16x4xf32>
    %297 = tpu.matmul %296, %0, %cst_168 {dimension_numbers = #tpu.dot_dimension_numbers<[1], [0], [0], [1], [0, 0, 1, 1], [], []>} : vector<16x32xf32>, vector<32x4xf32>, vector<16x4xf32> -> vector<16x4xf32>
    %298 = arith.maximumf %295, %297 : vector<16x4xf32>
    %299 = arith.subf %295, %298 : vector<16x4xf32>
    %300 = math.exp %299 : vector<16x4xf32>
    %301 = arith.subf %297, %298 : vector<16x4xf32>
    %302 = math.exp %301 : vector<16x4xf32>
    %303 = arith.addf %300, %302 : vector<16x4xf32>
    %304 = tpu.reciprocal %303 {approx = true} : vector<16x4xf32> -> vector<16x4xf32>
    %305 = arith.mulf %300, %304 : vector<16x4xf32>
    %cst_169 = arith.constant dense<0.000000e+00> : vector<16x32xf32>
    %306 = tpu.matmul %305, %1, %cst_169 {dimension_numbers = #tpu.dot_dimension_numbers<[1], [0], [0], [1], [0, 0, 1, 1], [], []>} : vector<16x4xf32>, vector<4x32xf32>, vector<16x32xf32> -> vector<16x32xf32>
    %307 = arith.mulf %306, %292 : vector<16x32xf32>
    %308 = arith.mulf %302, %304 : vector<16x4xf32>
    %cst_170 = arith.constant dense<0.000000e+00> : vector<16x32xf32>
    %309 = tpu.matmul %308, %1, %cst_170 {dimension_numbers = #tpu.dot_dimension_numbers<[1], [0], [0], [1], [0, 0, 1, 1], [], []>} : vector<16x4xf32>, vector<4x32xf32>, vector<16x32xf32> -> vector<16x32xf32>
    %310 = arith.mulf %309, %293 : vector<16x32xf32>
    %311 = arith.addf %307, %310 : vector<16x32xf32>
    %312 = arith.mulf %289, %290 : vector<16x32xf32>
    %cst_171 = arith.constant dense<0.000000e+00> : vector<16x4xf32>
    %313 = tpu.matmul %312, %0, %cst_171 {dimension_numbers = #tpu.dot_dimension_numbers<[1], [0], [0], [1], [0, 0, 1, 1], [], []>} : vector<16x32xf32>, vector<32x4xf32>, vector<16x4xf32> -> vector<16x4xf32>
    %314 = arith.mulf %289, %291 : vector<16x32xf32>
    %cst_172 = arith.constant dense<0.000000e+00> : vector<16x4xf32>
    %315 = tpu.matmul %314, %0, %cst_172 {dimension_numbers = #tpu.dot_dimension_numbers<[1], [0], [0], [1], [0, 0, 1, 1], [], []>} : vector<16x32xf32>, vector<32x4xf32>, vector<16x4xf32> -> vector<16x4xf32>
    %316 = arith.maximumf %313, %315 : vector<16x4xf32>
    %317 = arith.subf %313, %316 : vector<16x4xf32>
    %318 = math.exp %317 : vector<16x4xf32>
    %319 = arith.subf %315, %316 : vector<16x4xf32>
    %320 = math.exp %319 : vector<16x4xf32>
    %321 = arith.addf %318, %320 : vector<16x4xf32>
    %322 = tpu.reciprocal %321 {approx = true} : vector<16x4xf32> -> vector<16x4xf32>
    %323 = arith.mulf %318, %322 : vector<16x4xf32>
    %cst_173 = arith.constant dense<0.000000e+00> : vector<16x32xf32>
    %324 = tpu.matmul %323, %1, %cst_173 {dimension_numbers = #tpu.dot_dimension_numbers<[1], [0], [0], [1], [0, 0, 1, 1], [], []>} : vector<16x4xf32>, vector<4x32xf32>, vector<16x32xf32> -> vector<16x32xf32>
    %325 = arith.mulf %324, %292 : vector<16x32xf32>
    %326 = arith.mulf %320, %322 : vector<16x4xf32>
    %cst_174 = arith.constant dense<0.000000e+00> : vector<16x32xf32>
    %327 = tpu.matmul %326, %1, %cst_174 {dimension_numbers = #tpu.dot_dimension_numbers<[1], [0], [0], [1], [0, 0, 1, 1], [], []>} : vector<16x4xf32>, vector<4x32xf32>, vector<16x32xf32> -> vector<16x32xf32>
    %328 = arith.mulf %327, %293 : vector<16x32xf32>
    %329 = arith.addf %325, %328 : vector<16x32xf32>
    %330 = tpu.concatenate %311, %329 in 0 : vector<16x32xf32>, vector<16x32xf32> -> vector<32x32xf32>
    %cst_175 = arith.constant dense<0.000000e+00> : vector<32x32xf32>
    %331 = tpu.matmul %330, %266, %cst_175 {dimension_numbers = #tpu.dot_dimension_numbers<[1], [0], [0], [1], [0, 0, 1, 1], [], []>} : vector<32x32xf32>, vector<32x32xf32>, vector<32x32xf32> -> vector<32x32xf32>
    %332 = vector.broadcast %268 : vector<1x32xf32> to vector<32x32xf32>
    %333 = arith.addf %331, %332 : vector<32x32xf32>
    %334 = arith.addf %260, %333 : vector<32x32xf32>
    %cst_176 = arith.constant dense<0.000000e+00> : vector<32xf32>
    %335 = vector.multi_reduction <add>, %334, %cst_176 [1] : vector<32x32xf32> to vector<32xf32>
    %336 = vector.shape_cast %335 : vector<32xf32> to vector<32x1xf32>
    %cst_177 = arith.constant 3.200000e+01 : f32
    %337 = vector.broadcast %cst_177 : f32 to vector<32x1xf32>
    %338 = arith.divf %336, %337 : vector<32x1xf32>
    %339 = vector.broadcast %338 : vector<32x1xf32> to vector<32x32xf32>
    %340 = arith.subf %334, %339 : vector<32x32xf32>
    %341 = arith.mulf %340, %340 : vector<32x32xf32>
    %cst_178 = arith.constant dense<0.000000e+00> : vector<32xf32>
    %342 = vector.multi_reduction <add>, %341, %cst_178 [1] : vector<32x32xf32> to vector<32xf32>
    %343 = vector.shape_cast %342 : vector<32xf32> to vector<32x1xf32>
    %cst_179 = arith.constant 3.200000e+01 : f32
    %344 = vector.broadcast %cst_179 : f32 to vector<32x1xf32>
    %345 = arith.divf %343, %344 : vector<32x1xf32>
    %cst_180 = arith.constant 9.99999974E-6 : f32
    %346 = vector.broadcast %cst_180 : f32 to vector<32x1xf32>
    %347 = arith.addf %345, %346 : vector<32x1xf32>
    %348 = math.rsqrt %347 : vector<32x1xf32>
    %349 = vector.broadcast %348 : vector<32x1xf32> to vector<32x32xf32>
    %350 = arith.mulf %340, %349 : vector<32x32xf32>
    %351 = vector.broadcast %278 : vector<1x32xf32> to vector<32x32xf32>
    %352 = arith.mulf %350, %351 : vector<32x32xf32>
    %353 = vector.broadcast %280 : vector<1x32xf32> to vector<32x32xf32>
    %354 = arith.addf %352, %353 : vector<32x32xf32>
    %cst_181 = arith.constant dense<0.000000e+00> : vector<32x32xf32>
    %355 = tpu.matmul %354, %270, %cst_181 {dimension_numbers = #tpu.dot_dimension_numbers<[1], [0], [0], [1], [0, 0, 1, 1], [], []>} : vector<32x32xf32>, vector<32x32xf32>, vector<32x32xf32> -> vector<32x32xf32>
    %356 = vector.broadcast %272 : vector<1x32xf32> to vector<32x32xf32>
    %357 = arith.addf %355, %356 : vector<32x32xf32>
    %cst_182 = arith.constant 0.000000e+00 : f32
    %358 = vector.broadcast %cst_182 : f32 to vector<32x32xf32>
    %359 = arith.maximumf %357, %358 : vector<32x32xf32>
    %cst_183 = arith.constant dense<0.000000e+00> : vector<32x32xf32>
    %360 = tpu.matmul %359, %274, %cst_183 {dimension_numbers = #tpu.dot_dimension_numbers<[1], [0], [0], [1], [0, 0, 1, 1], [], []>} : vector<32x32xf32>, vector<32x32xf32>, vector<32x32xf32> -> vector<32x32xf32>
    %361 = vector.broadcast %276 : vector<1x32xf32> to vector<32x32xf32>
    %362 = arith.addf %360, %361 : vector<32x32xf32>
    %363 = arith.addf %354, %362 : vector<32x32xf32>
    %cst_184 = arith.constant dense<0.000000e+00> : vector<32xf32>
    %364 = vector.multi_reduction <add>, %363, %cst_184 [1] : vector<32x32xf32> to vector<32xf32>
    %365 = vector.shape_cast %364 : vector<32xf32> to vector<32x1xf32>
    %cst_185 = arith.constant 3.200000e+01 : f32
    %366 = vector.broadcast %cst_185 : f32 to vector<32x1xf32>
    %367 = arith.divf %365, %366 : vector<32x1xf32>
    %368 = vector.broadcast %367 : vector<32x1xf32> to vector<32x32xf32>
    %369 = arith.subf %363, %368 : vector<32x32xf32>
    %370 = arith.mulf %369, %369 : vector<32x32xf32>
    %cst_186 = arith.constant dense<0.000000e+00> : vector<32xf32>
    %371 = vector.multi_reduction <add>, %370, %cst_186 [1] : vector<32x32xf32> to vector<32xf32>
    %372 = vector.shape_cast %371 : vector<32xf32> to vector<32x1xf32>
    %cst_187 = arith.constant 3.200000e+01 : f32
    %373 = vector.broadcast %cst_187 : f32 to vector<32x1xf32>
    %374 = arith.divf %372, %373 : vector<32x1xf32>
    %cst_188 = arith.constant 9.99999974E-6 : f32
    %375 = vector.broadcast %cst_188 : f32 to vector<32x1xf32>
    %376 = arith.addf %374, %375 : vector<32x1xf32>
    %377 = math.rsqrt %376 : vector<32x1xf32>
    %378 = vector.broadcast %377 : vector<32x1xf32> to vector<32x32xf32>
    %379 = arith.mulf %369, %378 : vector<32x32xf32>
    %380 = vector.broadcast %282 : vector<1x32xf32> to vector<32x32xf32>
    %381 = arith.mulf %379, %380 : vector<32x32xf32>
    %382 = vector.broadcast %284 : vector<1x32xf32> to vector<32x32xf32>
    %383 = arith.addf %381, %382 : vector<32x32xf32>
    %c3 = arith.constant 3 : index
    %c0_189 = arith.constant 0 : index
    %c0_190 = arith.constant 0 : index
    %384 = vector.load %arg4[%c3, %c0_189, %c0_190] : memref<4x32x96xf32, #tpu.memory_space<vmem>>, vector<1x32x96xf32>
    %385 = vector.shape_cast %384 : vector<1x32x96xf32> to vector<32x96xf32>
    %c3_191 = arith.constant 3 : index
    %c0_192 = arith.constant 0 : index
    %c0_193 = arith.constant 0 : index
    %386 = vector.load %arg5[%c3_191, %c0_192, %c0_193] : memref<4x1x96xf32, #tpu.memory_space<vmem>>, vector<1x1x96xf32>
    %387 = vector.shape_cast %386 : vector<1x1x96xf32> to vector<1x96xf32>
    %c3_194 = arith.constant 3 : index
    %c0_195 = arith.constant 0 : index
    %c0_196 = arith.constant 0 : index
    %388 = vector.load %arg6[%c3_194, %c0_195, %c0_196] : memref<4x32x32xf32, #tpu.memory_space<vmem>>, vector<1x32x32xf32>
    %389 = vector.shape_cast %388 : vector<1x32x32xf32> to vector<32x32xf32>
    %c3_197 = arith.constant 3 : index
    %c0_198 = arith.constant 0 : index
    %c0_199 = arith.constant 0 : index
    %390 = vector.load %arg7[%c3_197, %c0_198, %c0_199] : memref<4x1x32xf32, #tpu.memory_space<vmem>>, vector<1x1x32xf32>
    %391 = vector.shape_cast %390 : vector<1x1x32xf32> to vector<1x32xf32>
    %c3_200 = arith.constant 3 : index
    %c0_201 = arith.constant 0 : index
    %c0_202 = arith.constant 0 : index
    %392 = vector.load %arg8[%c3_200, %c0_201, %c0_202] : memref<4x32x32xf32, #tpu.memory_space<vmem>>, vector<1x32x32xf32>
    %393 = vector.shape_cast %392 : vector<1x32x32xf32> to vector<32x32xf32>
    %c3_203 = arith.constant 3 : index
    %c0_204 = arith.constant 0 : index
    %c0_205 = arith.constant 0 : index
    %394 = vector.load %arg9[%c3_203, %c0_204, %c0_205] : memref<4x1x32xf32, #tpu.memory_space<vmem>>, vector<1x1x32xf32>
    %395 = vector.shape_cast %394 : vector<1x1x32xf32> to vector<1x32xf32>
    %c3_206 = arith.constant 3 : index
    %c0_207 = arith.constant 0 : index
    %c0_208 = arith.constant 0 : index
    %396 = vector.load %arg10[%c3_206, %c0_207, %c0_208] : memref<4x32x32xf32, #tpu.memory_space<vmem>>, vector<1x32x32xf32>
    %397 = vector.shape_cast %396 : vector<1x32x32xf32> to vector<32x32xf32>
    %c3_209 = arith.constant 3 : index
    %c0_210 = arith.constant 0 : index
    %c0_211 = arith.constant 0 : index
    %398 = vector.load %arg11[%c3_209, %c0_210, %c0_211] : memref<4x1x32xf32, #tpu.memory_space<vmem>>, vector<1x1x32xf32>
    %399 = vector.shape_cast %398 : vector<1x1x32xf32> to vector<1x32xf32>
    %c3_212 = arith.constant 3 : index
    %c0_213 = arith.constant 0 : index
    %c0_214 = arith.constant 0 : index
    %400 = vector.load %arg12[%c3_212, %c0_213, %c0_214] : memref<4x1x32xf32, #tpu.memory_space<vmem>>, vector<1x1x32xf32>
    %401 = vector.shape_cast %400 : vector<1x1x32xf32> to vector<1x32xf32>
    %c3_215 = arith.constant 3 : index
    %c0_216 = arith.constant 0 : index
    %c0_217 = arith.constant 0 : index
    %402 = vector.load %arg13[%c3_215, %c0_216, %c0_217] : memref<4x1x32xf32, #tpu.memory_space<vmem>>, vector<1x1x32xf32>
    %403 = vector.shape_cast %402 : vector<1x1x32xf32> to vector<1x32xf32>
    %c3_218 = arith.constant 3 : index
    %c0_219 = arith.constant 0 : index
    %c0_220 = arith.constant 0 : index
    %404 = vector.load %arg14[%c3_218, %c0_219, %c0_220] : memref<4x1x32xf32, #tpu.memory_space<vmem>>, vector<1x1x32xf32>
    %405 = vector.shape_cast %404 : vector<1x1x32xf32> to vector<1x32xf32>
    %c3_221 = arith.constant 3 : index
    %c0_222 = arith.constant 0 : index
    %c0_223 = arith.constant 0 : index
    %406 = vector.load %arg15[%c3_221, %c0_222, %c0_223] : memref<4x1x32xf32, #tpu.memory_space<vmem>>, vector<1x1x32xf32>
    %407 = vector.shape_cast %406 : vector<1x1x32xf32> to vector<1x32xf32>
    %cst_224 = arith.constant dense<0.000000e+00> : vector<32x96xf32>
    %408 = tpu.matmul %383, %385, %cst_224 {dimension_numbers = #tpu.dot_dimension_numbers<[1], [0], [0], [1], [0, 0, 1, 1], [], []>} : vector<32x32xf32>, vector<32x96xf32>, vector<32x96xf32> -> vector<32x96xf32>
    %409 = vector.broadcast %387 : vector<1x96xf32> to vector<32x96xf32>
    %410 = arith.addf %408, %409 : vector<32x96xf32>
    %411 = vector.extract_strided_slice %410 {offsets = [0, 0], sizes = [16, 32], strides = [1, 1]} : vector<32x96xf32> to vector<16x32xf32>
    %412 = vector.extract_strided_slice %410 {offsets = [16, 0], sizes = [16, 32], strides = [1, 1]} : vector<32x96xf32> to vector<16x32xf32>
    %413 = vector.extract_strided_slice %410 {offsets = [0, 32], sizes = [16, 32], strides = [1, 1]} : vector<32x96xf32> to vector<16x32xf32>
    %414 = vector.extract_strided_slice %410 {offsets = [16, 32], sizes = [16, 32], strides = [1, 1]} : vector<32x96xf32> to vector<16x32xf32>
    %415 = vector.extract_strided_slice %410 {offsets = [0, 64], sizes = [16, 32], strides = [1, 1]} : vector<32x96xf32> to vector<16x32xf32>
    %416 = vector.extract_strided_slice %410 {offsets = [16, 64], sizes = [16, 32], strides = [1, 1]} : vector<32x96xf32> to vector<16x32xf32>
    %417 = arith.mulf %411, %413 : vector<16x32xf32>
    %cst_225 = arith.constant dense<0.000000e+00> : vector<16x4xf32>
    %418 = tpu.matmul %417, %0, %cst_225 {dimension_numbers = #tpu.dot_dimension_numbers<[1], [0], [0], [1], [0, 0, 1, 1], [], []>} : vector<16x32xf32>, vector<32x4xf32>, vector<16x4xf32> -> vector<16x4xf32>
    %419 = arith.mulf %411, %414 : vector<16x32xf32>
    %cst_226 = arith.constant dense<0.000000e+00> : vector<16x4xf32>
    %420 = tpu.matmul %419, %0, %cst_226 {dimension_numbers = #tpu.dot_dimension_numbers<[1], [0], [0], [1], [0, 0, 1, 1], [], []>} : vector<16x32xf32>, vector<32x4xf32>, vector<16x4xf32> -> vector<16x4xf32>
    %421 = arith.maximumf %418, %420 : vector<16x4xf32>
    %422 = arith.subf %418, %421 : vector<16x4xf32>
    %423 = math.exp %422 : vector<16x4xf32>
    %424 = arith.subf %420, %421 : vector<16x4xf32>
    %425 = math.exp %424 : vector<16x4xf32>
    %426 = arith.addf %423, %425 : vector<16x4xf32>
    %427 = tpu.reciprocal %426 {approx = true} : vector<16x4xf32> -> vector<16x4xf32>
    %428 = arith.mulf %423, %427 : vector<16x4xf32>
    %cst_227 = arith.constant dense<0.000000e+00> : vector<16x32xf32>
    %429 = tpu.matmul %428, %1, %cst_227 {dimension_numbers = #tpu.dot_dimension_numbers<[1], [0], [0], [1], [0, 0, 1, 1], [], []>} : vector<16x4xf32>, vector<4x32xf32>, vector<16x32xf32> -> vector<16x32xf32>
    %430 = arith.mulf %429, %415 : vector<16x32xf32>
    %431 = arith.mulf %425, %427 : vector<16x4xf32>
    %cst_228 = arith.constant dense<0.000000e+00> : vector<16x32xf32>
    %432 = tpu.matmul %431, %1, %cst_228 {dimension_numbers = #tpu.dot_dimension_numbers<[1], [0], [0], [1], [0, 0, 1, 1], [], []>} : vector<16x4xf32>, vector<4x32xf32>, vector<16x32xf32> -> vector<16x32xf32>
    %433 = arith.mulf %432, %416 : vector<16x32xf32>
    %434 = arith.addf %430, %433 : vector<16x32xf32>
    %435 = arith.mulf %412, %413 : vector<16x32xf32>
    %cst_229 = arith.constant dense<0.000000e+00> : vector<16x4xf32>
    %436 = tpu.matmul %435, %0, %cst_229 {dimension_numbers = #tpu.dot_dimension_numbers<[1], [0], [0], [1], [0, 0, 1, 1], [], []>} : vector<16x32xf32>, vector<32x4xf32>, vector<16x4xf32> -> vector<16x4xf32>
    %437 = arith.mulf %412, %414 : vector<16x32xf32>
    %cst_230 = arith.constant dense<0.000000e+00> : vector<16x4xf32>
    %438 = tpu.matmul %437, %0, %cst_230 {dimension_numbers = #tpu.dot_dimension_numbers<[1], [0], [0], [1], [0, 0, 1, 1], [], []>} : vector<16x32xf32>, vector<32x4xf32>, vector<16x4xf32> -> vector<16x4xf32>
    %439 = arith.maximumf %436, %438 : vector<16x4xf32>
    %440 = arith.subf %436, %439 : vector<16x4xf32>
    %441 = math.exp %440 : vector<16x4xf32>
    %442 = arith.subf %438, %439 : vector<16x4xf32>
    %443 = math.exp %442 : vector<16x4xf32>
    %444 = arith.addf %441, %443 : vector<16x4xf32>
    %445 = tpu.reciprocal %444 {approx = true} : vector<16x4xf32> -> vector<16x4xf32>
    %446 = arith.mulf %441, %445 : vector<16x4xf32>
    %cst_231 = arith.constant dense<0.000000e+00> : vector<16x32xf32>
    %447 = tpu.matmul %446, %1, %cst_231 {dimension_numbers = #tpu.dot_dimension_numbers<[1], [0], [0], [1], [0, 0, 1, 1], [], []>} : vector<16x4xf32>, vector<4x32xf32>, vector<16x32xf32> -> vector<16x32xf32>
    %448 = arith.mulf %447, %415 : vector<16x32xf32>
    %449 = arith.mulf %443, %445 : vector<16x4xf32>
    %cst_232 = arith.constant dense<0.000000e+00> : vector<16x32xf32>
    %450 = tpu.matmul %449, %1, %cst_232 {dimension_numbers = #tpu.dot_dimension_numbers<[1], [0], [0], [1], [0, 0, 1, 1], [], []>} : vector<16x4xf32>, vector<4x32xf32>, vector<16x32xf32> -> vector<16x32xf32>
    %451 = arith.mulf %450, %416 : vector<16x32xf32>
    %452 = arith.addf %448, %451 : vector<16x32xf32>
    %453 = tpu.concatenate %434, %452 in 0 : vector<16x32xf32>, vector<16x32xf32> -> vector<32x32xf32>
    %cst_233 = arith.constant dense<0.000000e+00> : vector<32x32xf32>
    %454 = tpu.matmul %453, %389, %cst_233 {dimension_numbers = #tpu.dot_dimension_numbers<[1], [0], [0], [1], [0, 0, 1, 1], [], []>} : vector<32x32xf32>, vector<32x32xf32>, vector<32x32xf32> -> vector<32x32xf32>
    %455 = vector.broadcast %391 : vector<1x32xf32> to vector<32x32xf32>
    %456 = arith.addf %454, %455 : vector<32x32xf32>
    %457 = arith.addf %383, %456 : vector<32x32xf32>
    %cst_234 = arith.constant dense<0.000000e+00> : vector<32xf32>
    %458 = vector.multi_reduction <add>, %457, %cst_234 [1] : vector<32x32xf32> to vector<32xf32>
    %459 = vector.shape_cast %458 : vector<32xf32> to vector<32x1xf32>
    %cst_235 = arith.constant 3.200000e+01 : f32
    %460 = vector.broadcast %cst_235 : f32 to vector<32x1xf32>
    %461 = arith.divf %459, %460 : vector<32x1xf32>
    %462 = vector.broadcast %461 : vector<32x1xf32> to vector<32x32xf32>
    %463 = arith.subf %457, %462 : vector<32x32xf32>
    %464 = arith.mulf %463, %463 : vector<32x32xf32>
    %cst_236 = arith.constant dense<0.000000e+00> : vector<32xf32>
    %465 = vector.multi_reduction <add>, %464, %cst_236 [1] : vector<32x32xf32> to vector<32xf32>
    %466 = vector.shape_cast %465 : vector<32xf32> to vector<32x1xf32>
    %cst_237 = arith.constant 3.200000e+01 : f32
    %467 = vector.broadcast %cst_237 : f32 to vector<32x1xf32>
    %468 = arith.divf %466, %467 : vector<32x1xf32>
    %cst_238 = arith.constant 9.99999974E-6 : f32
    %469 = vector.broadcast %cst_238 : f32 to vector<32x1xf32>
    %470 = arith.addf %468, %469 : vector<32x1xf32>
    %471 = math.rsqrt %470 : vector<32x1xf32>
    %472 = vector.broadcast %471 : vector<32x1xf32> to vector<32x32xf32>
    %473 = arith.mulf %463, %472 : vector<32x32xf32>
    %474 = vector.broadcast %401 : vector<1x32xf32> to vector<32x32xf32>
    %475 = arith.mulf %473, %474 : vector<32x32xf32>
    %476 = vector.broadcast %403 : vector<1x32xf32> to vector<32x32xf32>
    %477 = arith.addf %475, %476 : vector<32x32xf32>
    %cst_239 = arith.constant dense<0.000000e+00> : vector<32x32xf32>
    %478 = tpu.matmul %477, %393, %cst_239 {dimension_numbers = #tpu.dot_dimension_numbers<[1], [0], [0], [1], [0, 0, 1, 1], [], []>} : vector<32x32xf32>, vector<32x32xf32>, vector<32x32xf32> -> vector<32x32xf32>
    %479 = vector.broadcast %395 : vector<1x32xf32> to vector<32x32xf32>
    %480 = arith.addf %478, %479 : vector<32x32xf32>
    %cst_240 = arith.constant 0.000000e+00 : f32
    %481 = vector.broadcast %cst_240 : f32 to vector<32x32xf32>
    %482 = arith.maximumf %480, %481 : vector<32x32xf32>
    %cst_241 = arith.constant dense<0.000000e+00> : vector<32x32xf32>
    %483 = tpu.matmul %482, %397, %cst_241 {dimension_numbers = #tpu.dot_dimension_numbers<[1], [0], [0], [1], [0, 0, 1, 1], [], []>} : vector<32x32xf32>, vector<32x32xf32>, vector<32x32xf32> -> vector<32x32xf32>
    %484 = vector.broadcast %399 : vector<1x32xf32> to vector<32x32xf32>
    %485 = arith.addf %483, %484 : vector<32x32xf32>
    %486 = arith.addf %477, %485 : vector<32x32xf32>
    %cst_242 = arith.constant dense<0.000000e+00> : vector<32xf32>
    %487 = vector.multi_reduction <add>, %486, %cst_242 [1] : vector<32x32xf32> to vector<32xf32>
    %488 = vector.shape_cast %487 : vector<32xf32> to vector<32x1xf32>
    %cst_243 = arith.constant 3.200000e+01 : f32
    %489 = vector.broadcast %cst_243 : f32 to vector<32x1xf32>
    %490 = arith.divf %488, %489 : vector<32x1xf32>
    %491 = vector.broadcast %490 : vector<32x1xf32> to vector<32x32xf32>
    %492 = arith.subf %486, %491 : vector<32x32xf32>
    %493 = arith.mulf %492, %492 : vector<32x32xf32>
    %cst_244 = arith.constant dense<0.000000e+00> : vector<32xf32>
    %494 = vector.multi_reduction <add>, %493, %cst_244 [1] : vector<32x32xf32> to vector<32xf32>
    %495 = vector.shape_cast %494 : vector<32xf32> to vector<32x1xf32>
    %cst_245 = arith.constant 3.200000e+01 : f32
    %496 = vector.broadcast %cst_245 : f32 to vector<32x1xf32>
    %497 = arith.divf %495, %496 : vector<32x1xf32>
    %cst_246 = arith.constant 9.99999974E-6 : f32
    %498 = vector.broadcast %cst_246 : f32 to vector<32x1xf32>
    %499 = arith.addf %497, %498 : vector<32x1xf32>
    %500 = math.rsqrt %499 : vector<32x1xf32>
    %501 = vector.broadcast %500 : vector<32x1xf32> to vector<32x32xf32>
    %502 = arith.mulf %492, %501 : vector<32x32xf32>
    %503 = vector.broadcast %405 : vector<1x32xf32> to vector<32x32xf32>
    %504 = arith.mulf %502, %503 : vector<32x32xf32>
    %505 = vector.broadcast %407 : vector<1x32xf32> to vector<32x32xf32>
    %506 = arith.addf %504, %505 : vector<32x32xf32>
    %507 = vector.extract_strided_slice %506 {offsets = [0, 0], sizes = [16, 32], strides = [1, 1]} : vector<32x32xf32> to vector<16x32xf32>
    %c0_247 = arith.constant 0 : index
    %c0_248 = arith.constant 0 : index
    %c0_249 = arith.constant 0 : index
    %508 = vector.load %arg18[%c0_247, %c0_248, %c0_249] : memref<2x16x32xf32, #tpu.memory_space<vmem>>, vector<1x16x32xf32>
    %509 = vector.shape_cast %508 : vector<1x16x32xf32> to vector<16x32xf32>
    %510 = vector.shape_cast %507 : vector<16x32xf32> to vector<1x16x32xf32>
    tpu.vector_store %arg18[%c0_247, %c0_248, %c0_249], %510 {strides = array<i32>} : memref<2x16x32xf32, #tpu.memory_space<vmem>>, vector<1x16x32xf32>,
    %511 = vector.extract_strided_slice %506 {offsets = [16, 0], sizes = [16, 32], strides = [1, 1]} : vector<32x32xf32> to vector<16x32xf32>
    %c1_250 = arith.constant 1 : index
    %c0_251 = arith.constant 0 : index
    %c0_252 = arith.constant 0 : index
    %512 = vector.load %arg18[%c1_250, %c0_251, %c0_252] : memref<2x16x32xf32, #tpu.memory_space<vmem>>, vector<1x16x32xf32>
    %513 = vector.shape_cast %512 : vector<1x16x32xf32> to vector<16x32xf32>
    %514 = vector.shape_cast %511 : vector<16x32xf32> to vector<1x16x32xf32>
    tpu.vector_store %arg18[%c1_250, %c0_251, %c0_252], %514 {strides = array<i32>} : memref<2x16x32xf32, #tpu.memory_space<vmem>>, vector<1x16x32xf32>,
    return
  }
  func.func @transform_0(%arg0: i32) -> (i32, i32, i32) {
    %c0_i32 = arith.constant 0 : i32
    %c0_i32_0 = arith.constant 0 : i32
    %c0_i32_1 = arith.constant 0 : i32
    return %c0_i32, %arg0, %c0_i32_0 : i32, i32, i32
  }
  func.func @transform_1(%arg0: i32) -> (i32, i32) {
    %c0_i32 = arith.constant 0 : i32
    %c0_i32_0 = arith.constant 0 : i32
    %c0_i32_1 = arith.constant 0 : i32
    return %c0_i32, %c0_i32_0 : i32, i32
  }
  func.func @transform_2(%arg0: i32) -> (i32, i32) {
    %c0_i32 = arith.constant 0 : i32
    %c0_i32_0 = arith.constant 0 : i32
    %c0_i32_1 = arith.constant 0 : i32
    return %c0_i32, %c0_i32_0 : i32, i32
  }
  func.func @transform_3(%arg0: i32) -> (i32, i32, i32) {
    %c0_i32 = arith.constant 0 : i32
    %c0_i32_0 = arith.constant 0 : i32
    %c0_i32_1 = arith.constant 0 : i32
    %c0_i32_2 = arith.constant 0 : i32
    return %c0_i32, %c0_i32_0, %c0_i32_1 : i32, i32, i32
  }
  func.func @transform_4(%arg0: i32) -> (i32, i32, i32) {
    %c0_i32 = arith.constant 0 : i32
    %c0_i32_0 = arith.constant 0 : i32
    %c0_i32_1 = arith.constant 0 : i32
    %c0_i32_2 = arith.constant 0 : i32
    return %c0_i32, %c0_i32_0, %c0_i32_1 : i32, i32, i32
  }
  func.func @transform_5(%arg0: i32) -> (i32, i32, i32) {
    %c0_i32 = arith.constant 0 : i32
    %c0_i32_0 = arith.constant 0 : i32
    %c0_i32_1 = arith.constant 0 : i32
    %c0_i32_2 = arith.constant 0 : i32
    return %c0_i32, %c0_i32_0, %c0_i32_1 : i32, i32, i32
  }
  func.func @transform_6(%arg0: i32) -> (i32, i32, i32) {
    %c0_i32 = arith.constant 0 : i32
    %c0_i32_0 = arith.constant 0 : i32
    %c0_i32_1 = arith.constant 0 : i32
    %c0_i32_2 = arith.constant 0 : i32
    return %c0_i32, %c0_i32_0, %c0_i32_1 : i32, i32, i32
  }
  func.func @transform_7(%arg0: i32) -> (i32, i32, i32) {
    %c0_i32 = arith.constant 0 : i32
    %c0_i32_0 = arith.constant 0 : i32
    %c0_i32_1 = arith.constant 0 : i32
    %c0_i32_2 = arith.constant 0 : i32
    return %c0_i32, %c0_i32_0, %c0_i32_1 : i32, i32, i32
  }
  func.func @transform_8(%arg0: i32) -> (i32, i32, i32) {
    %c0_i32 = arith.constant 0 : i32
    %c0_i32_0 = arith.constant 0 : i32
    %c0_i32_1 = arith.constant 0 : i32
    %c0_i32_2 = arith.constant 0 : i32
    return %c0_i32, %c0_i32_0, %c0_i32_1 : i32, i32, i32
  }
  func.func @transform_9(%arg0: i32) -> (i32, i32, i32) {
    %c0_i32 = arith.constant 0 : i32
    %c0_i32_0 = arith.constant 0 : i32
    %c0_i32_1 = arith.constant 0 : i32
    %c0_i32_2 = arith.constant 0 : i32
    return %c0_i32, %c0_i32_0, %c0_i32_1 : i32, i32, i32
  }
  func.func @transform_10(%arg0: i32) -> (i32, i32, i32) {
    %c0_i32 = arith.constant 0 : i32
    %c0_i32_0 = arith.constant 0 : i32
    %c0_i32_1 = arith.constant 0 : i32
    %c0_i32_2 = arith.constant 0 : i32
    return %c0_i32, %c0_i32_0, %c0_i32_1 : i32, i32, i32
  }
  func.func @transform_11(%arg0: i32) -> (i32, i32, i32) {
    %c0_i32 = arith.constant 0 : i32
    %c0_i32_0 = arith.constant 0 : i32
    %c0_i32_1 = arith.constant 0 : i32
    %c0_i32_2 = arith.constant 0 : i32
    return %c0_i32, %c0_i32_0, %c0_i32_1 : i32, i32, i32
  }
  func.func @transform_12(%arg0: i32) -> (i32, i32, i32) {
    %c0_i32 = arith.constant 0 : i32
    %c0_i32_0 = arith.constant 0 : i32
    %c0_i32_1 = arith.constant 0 : i32
    %c0_i32_2 = arith.constant 0 : i32
    return %c0_i32, %c0_i32_0, %c0_i32_1 : i32, i32, i32
  }
  func.func @transform_13(%arg0: i32) -> (i32, i32, i32) {
    %c0_i32 = arith.constant 0 : i32
    %c0_i32_0 = arith.constant 0 : i32
    %c0_i32_1 = arith.constant 0 : i32
    %c0_i32_2 = arith.constant 0 : i32
    return %c0_i32, %c0_i32_0, %c0_i32_1 : i32, i32, i32
  }
  func.func @transform_14(%arg0: i32) -> (i32, i32, i32) {
    %c0_i32 = arith.constant 0 : i32
    %c0_i32_0 = arith.constant 0 : i32
    %c0_i32_1 = arith.constant 0 : i32
    %c0_i32_2 = arith.constant 0 : i32
    return %c0_i32, %c0_i32_0, %c0_i32_1 : i32, i32, i32
  }
  func.func @transform_15(%arg0: i32) -> (i32, i32) {
    %c0_i32 = arith.constant 0 : i32
    %c0_i32_0 = arith.constant 0 : i32
    %c0_i32_1 = arith.constant 0 : i32
    return %c0_i32, %c0_i32_0 : i32, i32
  }
  func.func @transform_16(%arg0: i32) -> (i32, i32) {
    %c0_i32 = arith.constant 0 : i32
    %c0_i32_0 = arith.constant 0 : i32
    %c0_i32_1 = arith.constant 0 : i32
    return %c0_i32, %c0_i32_0 : i32, i32
  }
  func.func @transform_17(%arg0: i32) -> (i32, i32, i32) {
    %c0_i32 = arith.constant 0 : i32
    %c0_i32_0 = arith.constant 0 : i32
    %c0_i32_1 = arith.constant 0 : i32
    return %c0_i32, %arg0, %c0_i32_0 : i32, i32, i32
  }
}

</mosaic_0001>

<llo_original>
// kernel: transformer_backbone_forward.1
$region0: #{transformer_backbone_forward.1}
  #allocation0 [shape = 'u32[]', space=smem, size = 0x4, offset = 0x4, fixed_abs, tag = 'smem constant byte address 0x4 - core index']
  #allocation1 [shape = 'u32[72,128]{1,0:T(1,128)}', space=vmem, size = 0x9000, scoped, tag = 'internal scratch']
  %s0 = inlined_call_operand.vmem [shape: f32[2,16,4], index: 0, kind: input, shape index: {}]
  %s1 = inlined_call_operand.vmem [shape: f32[4,32], index: 1, kind: input, shape index: {}]
  %s2 = inlined_call_operand.vmem [shape: f32[1,32], index: 2, kind: input, shape index: {}]
  %s3 = inlined_call_operand.hbm [shape: f32[4,32,96], index: 3, kind: input, shape index: {}]
  %s4 = inlined_call_operand.vmem [shape: f32[4,1,96], index: 4, kind: input, shape index: {}]
  %s5 = inlined_call_operand.hbm [shape: f32[4,32,32], index: 5, kind: input, shape index: {}]
  %s6 = inlined_call_operand.vmem [shape: f32[4,1,32], index: 6, kind: input, shape index: {}]
  %s7 = inlined_call_operand.hbm [shape: f32[4,32,32], index: 7, kind: input, shape index: {}]
  %s8 = inlined_call_operand.vmem [shape: f32[4,1,32], index: 8, kind: input, shape index: {}]
  %s9 = inlined_call_operand.hbm [shape: f32[4,32,32], index: 9, kind: input, shape index: {}]
  %s10 = inlined_call_operand.vmem [shape: f32[4,1,32], index: 10, kind: input, shape index: {}]
  %s11 = inlined_call_operand.vmem [shape: f32[4,1,32], index: 11, kind: input, shape index: {}]
  %s12 = inlined_call_operand.vmem [shape: f32[4,1,32], index: 12, kind: input, shape index: {}]
  %s13 = inlined_call_operand.vmem [shape: f32[4,1,32], index: 13, kind: input, shape index: {}]
  %s14 = inlined_call_operand.vmem [shape: f32[4,1,32], index: 14, kind: input, shape index: {}]
  %s15 = inlined_call_operand.vmem [shape: f32[32,4], index: 15, kind: input, shape index: {}]
  %s16 = inlined_call_operand.vmem [shape: f32[4,32], index: 16, kind: input, shape index: {}]
  %s17 = inlined_call_operand.hbm [shape: f32[2,16,32], index: 17, kind: output, shape index: {}]
  %s18 = sld [smem:[#allocation0]]
  $region94: #{transformer_backbone_forward.1} parent=0
    _
  %s20 = ssub.s32 1, %s18
  %s21 = scalar_select 0, %s20, %s18
  $region1: #{transformer_backbone_forward.1} parent=0
    #allocation2 [shape = 'u8[65536]{0}', space=vmem, size = 0x10000, scoped, tag = 'input window, operand 3, single buffered']
    #allocation3 [shape = 's32[1]{0}', space=sflag, size = 0x4, scoped, tag = 'scoped memory for transformer_backbone_forward.1']
    #allocation4 [shape = 's32[1]{0}', space=sflag, size = 0x4, scoped, tag = 'scoped memory for transformer_backbone_forward.1']
    #allocation5 [shape = 'u8[65536]{0}', space=vmem, size = 0x10000, scoped, tag = 'input window, operand 5, single buffered']
    #allocation6 [shape = 's32[1]{0}', space=sflag, size = 0x4, scoped, tag = 'scoped memory for transformer_backbone_forward.1']
    #allocation7 [shape = 'u8[65536]{0}', space=vmem, size = 0x10000, scoped, tag = 'input window, operand 7, single buffered']
    #allocation8 [shape = 'u8[65536]{0}', space=vmem, size = 0x10000, scoped, tag = 'input window, operand 9, single buffered']
    #allocation9 [shape = 's32[1]{0}', space=sflag, size = 0x4, scoped, tag = 'scoped memory for transformer_backbone_forward.1']
    #allocation10 [shape = 'u8[16384]{0}', space=vmem, size = 0x4000, scoped, tag = 'output window, operand 0, single buffered']
    %22 = vsyncpa [#allocation3], 0
    %23 = vsyncpa [#allocation6], 0
    %24 = vsyncpa [#allocation9], 0
    %25 = vsyncpa [#allocation4], 0
    // Predicated region
    $region2: #{transformer_backbone_forward.1} parent=1 // pred_check
      _
    $region3: #{transformer_backbone_forward.1} parent=1 // pred_check_branch
      %27 = sbr.rel (0) target = $region5
    $region4: #{transformer_backbone_forward.1} parent=1 // pred_region
      _
    $region5: #{transformer_backbone_forward.1} parent=1 // pred_fallthru
      _
    // Predicated region
    $region6: #{transformer_backbone_forward.1} parent=1 // pred_check
      _
    $region7: #{transformer_backbone_forward.1} parent=1 // pred_check_branch
      %29 = sbr.rel (0) target = $region9
    $region8: #{transformer_backbone_forward.1} parent=1 // pred_region
      _
    $region9: #{transformer_backbone_forward.1} parent=1 // pred_fallthru
      _
    // Predicated region
    $region10: #{transformer_backbone_forward.1} parent=1 // pred_check
      _
    $region11: #{transformer_backbone_forward.1} parent=1 // pred_check_branch
      %31 = sbr.rel (0) target = $region13
    $region12: #{transformer_backbone_forward.1} parent=1 // pred_region
      _
    $region13: #{transformer_backbone_forward.1} parent=1 // pred_fallthru
      _
    // Predicated region
    $region14: #{transformer_backbone_forward.1} parent=1 // pred_check
      _
    $region15: #{transformer_backbone_forward.1} parent=1 // pred_check_branch
      %33 = sbr.rel (0) target = $region17
    $region16: #{transformer_backbone_forward.1} parent=1 // pred_region
      %35 = vsyncadd [#allocation3], 0
      %s36 = sshll.u32 %s3, 4
      %s37 = int_to_ptr.hbm [resolvable:$true] %s36
      %s38 = sshll.u32 [#allocation2], 4
      %s39 = int_to_ptr.vmem [resolvable:$true] %s38
      %44 = dma.hbm_to_vmem [thread:$0]  %s37, 2048, %s39, [#allocation3], 128, 128, 8
    $region17: #{transformer_backbone_forward.1} parent=1 // pred_fallthru
      _
    // Predicated region
    $region18: #{transformer_backbone_forward.1} parent=1 // pred_check
      _
    $region19: #{transformer_backbone_forward.1} parent=1 // pred_check_branch
      %46 = sbr.rel (0) target = $region21
    $region20: #{transformer_backbone_forward.1} parent=1 // pred_region
      _
    $region21: #{transformer_backbone_forward.1} parent=1 // pred_fallthru
      _
    // Predicated region
    $region22: #{transformer_backbone_forward.1} parent=1 // pred_check
      _
    $region23: #{transformer_backbone_forward.1} parent=1 // pred_check_branch
      %48 = sbr.rel (0) target = $region25
    $region24: #{transformer_backbone_forward.1} parent=1 // pred_region
      %50 = vsyncadd [#allocation6], 0
      %s51 = sshll.u32 %s5, 4
      %s52 = int_to_ptr.hbm [resolvable:$true] %s51
      %s53 = sshll.u32 [#allocation5], 4
      %s54 = int_to_ptr.vmem [resolvable:$true] %s53
      %59 = dma.hbm_to_vmem [thread:$0]  %s52, 2048, %s54, [#allocation6], 128, 128, 8
    $region25: #{transformer_backbone_forward.1} parent=1 // pred_fallthru
      _
    // Predicated region
    $region26: #{transformer_backbone_forward.1} parent=1 // pred_check
      _
    $region27: #{transformer_backbone_forward.1} parent=1 // pred_check_branch
      %61 = sbr.rel (0) target = $region29
    $region28: #{transformer_backbone_forward.1} parent=1 // pred_region
      _
    $region29: #{transformer_backbone_forward.1} parent=1 // pred_fallthru
      _
    // Predicated region
    $region30: #{transformer_backbone_forward.1} parent=1 // pred_check
      _
    $region31: #{transformer_backbone_forward.1} parent=1 // pred_check_branch
      %63 = sbr.rel (0) target = $region33
    $region32: #{transformer_backbone_forward.1} parent=1 // pred_region
      %65 = vsyncadd [#allocation6], 0
      %s66 = sshll.u32 %s7, 4
      %s67 = int_to_ptr.hbm [resolvable:$true] %s66
      %s68 = sshll.u32 [#allocation7], 4
      %s69 = int_to_ptr.vmem [resolvable:$true] %s68
      %74 = dma.hbm_to_vmem [thread:$0]  %s67, 2048, %s69, [#allocation6], 128, 128, 8
    $region33: #{transformer_backbone_forward.1} parent=1 // pred_fallthru
      _
    // Predicated region
    $region34: #{transformer_backbone_forward.1} parent=1 // pred_check
      _
    $region35: #{transformer_backbone_forward.1} parent=1 // pred_check_branch
      %76 = sbr.rel (0) target = $region37
    $region36: #{transformer_backbone_forward.1} parent=1 // pred_region
      _
    $region37: #{transformer_backbone_forward.1} parent=1 // pred_fallthru
      _
    // Predicated region
    $region38: #{transformer_backbone_forward.1} parent=1 // pred_check
      _
    $region39: #{transformer_backbone_forward.1} parent=1 // pred_check_branch
      %78 = sbr.rel (0) target = $region41
    $region40: #{transformer_backbone_forward.1} parent=1 // pred_region
      %80 = vsyncadd [#allocation9], 0
      %s81 = sshll.u32 %s9, 4
      %s82 = int_to_ptr.hbm [resolvable:$true] %s81
      %s83 = sshll.u32 [#allocation8], 4
      %s84 = int_to_ptr.vmem [resolvable:$true] %s83
      %89 = dma.hbm_to_vmem [thread:$0]  %s82, 2048, %s84, [#allocation9], 128, 128, 8
    $region41: #{transformer_backbone_forward.1} parent=1 // pred_fallthru
      _
    // Predicated region
    $region42: #{transformer_backbone_forward.1} parent=1 // pred_check
      _
    $region43: #{transformer_backbone_forward.1} parent=1 // pred_check_branch
      %91 = sbr.rel (0) target = $region45
    $region44: #{transformer_backbone_forward.1} parent=1 // pred_region
      _
    $region45: #{transformer_backbone_forward.1} parent=1 // pred_fallthru
      _
    // Predicated region
    $region46: #{transformer_backbone_forward.1} parent=1 // pred_check
      _
    $region47: #{transformer_backbone_forward.1} parent=1 // pred_check_branch
      %93 = sbr.rel (0) target = $region49
    $region48: #{transformer_backbone_forward.1} parent=1 // pred_region
      _
    $region49: #{transformer_backbone_forward.1} parent=1 // pred_fallthru
      _
    // Predicated region
    $region50: #{transformer_backbone_forward.1} parent=1 // pred_check
      _
    $region51: #{transformer_backbone_forward.1} parent=1 // pred_check_branch
      %95 = sbr.rel (0) target = $region53
    $region52: #{transformer_backbone_forward.1} parent=1 // pred_region
      _
    $region53: #{transformer_backbone_forward.1} parent=1 // pred_fallthru
      _
    // Predicated region
    $region54: #{transformer_backbone_forward.1} parent=1 // pred_check
      _
    $region55: #{transformer_backbone_forward.1} parent=1 // pred_check_branch
      %97 = sbr.rel (0) target = $region57
    $region56: #{transformer_backbone_forward.1} parent=1 // pred_region
      _
    $region57: #{transformer_backbone_forward.1} parent=1 // pred_fallthru
      _
    // Predicated region
    $region58: #{transformer_backbone_forward.1} parent=1 // pred_check
      _
    $region59: #{transformer_backbone_forward.1} parent=1 // pred_check_branch
      %99 = sbr.rel (0) target = $region61
    $region60: #{transformer_backbone_forward.1} parent=1 // pred_region
      _
    $region61: #{transformer_backbone_forward.1} parent=1 // pred_fallthru
      _
    // Predicated region
    $region62: #{transformer_backbone_forward.1} parent=1 // pred_check
      _
    $region63: #{transformer_backbone_forward.1} parent=1 // pred_check_branch
      %101 = sbr.rel (0) target = $region65
    $region64: #{transformer_backbone_forward.1} parent=1 // pred_region
      _
    $region65: #{transformer_backbone_forward.1} parent=1 // pred_fallthru
      _
    // Predicated region
    $region66: #{transformer_backbone_forward.1} parent=1 // pred_check
      _
    $region67: #{transformer_backbone_forward.1} parent=1 // pred_check_branch
      %103 = sbr.rel (0) target = $region69
    $region68: #{transformer_backbone_forward.1} parent=1 // pred_region
      _
    $region69: #{transformer_backbone_forward.1} parent=1 // pred_fallthru
      _
    // Predicated region
    $region70: #{transformer_backbone_forward.1} parent=1 // pred_check
      _
    $region71: #{transformer_backbone_forward.1} parent=1 // pred_check_branch
      %105 = sbr.rel (0) target = $region73
    $region72: #{transformer_backbone_forward.1} parent=1 // pred_region
      %107 = dma.done [#allocation3], 2048
    $region73: #{transformer_backbone_forward.1} parent=1 // pred_fallthru
      _
    // Predicated region
    $region74: #{transformer_backbone_forward.1} parent=1 // pred_check
      _
    $region75: #{transformer_backbone_forward.1} parent=1 // pred_check_branch
      %109 = sbr.rel (0) target = $region77
    $region76: #{transformer_backbone_forward.1} parent=1 // pred_region
      %111 = dma.done [#allocation6], 2048
    $region77: #{transformer_backbone_forward.1} parent=1 // pred_fallthru
      _
    // Predicated region
    $region78: #{transformer_backbone_forward.1} parent=1 // pred_check
      _
    $region79: #{transformer_backbone_forward.1} parent=1 // pred_check_branch
      %113 = sbr.rel (0) target = $region81
    $region80: #{transformer_backbone_forward.1} parent=1 // pred_region
      %115 = dma.done [#allocation6], 2048
    $region81: #{transformer_backbone_forward.1} parent=1 // pred_fallthru
      _
    // Predicated region
    $region82: #{transformer_backbone_forward.1} parent=1 // pred_check
      _
    $region83: #{transformer_backbone_forward.1} parent=1 // pred_check_branch
      %117 = sbr.rel (0) target = $region85
    $region84: #{transformer_backbone_forward.1} parent=1 // pred_region
      %119 = dma.done [#allocation9], 2048
    $region85: #{transformer_backbone_forward.1} parent=1 // pred_fallthru
      _
    %v120 = vld [vmem:[%s15] sm:$0xff]
    %v121 = vld [vmem:[%s15 + $0x8] sm:$0xff]
    %v122 = vld [vmem:[%s15 + $0x10] sm:$0xff]
    %v123 = vld [vmem:[%s15 + $0x18] sm:$0xff]
    %v124 = vld [vmem:[%s16] sm:$0xf]
    %v125 = vld [vmem:[%s1] sm:$0xf]
    %v126 = vld [vmem:[%s2] sm:$0x1]
    %v127 = vld [vmem:[%s0] sm:$0xff]
    %v128 = vld [vmem:[%s0 + $0x8] sm:$0xff]
    %v130 = vperm.slane %v126, 0
    %vm132 = vcmask 31744
    %v134 = vsel %vm132, %v127, 0
    %v137 = vsel %vm132, %v128, 0
    %vm139 = vcmask 1043456
    %v141 = vsel %vm139, %v125, 0
    %143 = vmatpush.msra.mxu0 0.0
    %144 = vmatpush.msra.mxu0 0.0
    %145 = vmatpush.msra.mxu0 0.0
    %146 = vmatpush.msra.mxu0 0.0
    %147 = vmatpush.msra.mxu0 0.0
    %148 = vmatpush.msra.mxu0 0.0
    %149 = vmatpush.msra.mxu0 0.0
    %150 = vmatpush.msra.mxu0 0.0
    %151 = vmatpush.msra.mxu0 0.0
    %152 = vmatpush.msra.mxu0 0.0
    %153 = vmatpush.msra.mxu0 0.0
    %154 = vmatpush.msra.mxu0 0.0
    %155 = vmatpush.msra.mxu0 0.0
    %156 = vmatpush.msra.mxu0 0.0
    %157 = vmatpush.msra.mxu0 0.0
    %158 = vmatpush.msra.mxu0 %v141
    %159 = vmatmul.f32.gmra.mxu0 %v134
    %v160 = vpop.f32.mrf.mxu0
    %v161 = vadd.f32 %v130, %v160
    %162 = vmatmul.f32.gmra.mxu0 %v137
    %v163 = vpop.f32.mrf.mxu0
    %v164 = vadd.f32 %v130, %v163
    %165 = vdwg.mxu0
    %s166 = scalar_lea.vmem %s0, 16
    %v167 = vld [vmem:[%s166] sm:$0xff]
    %v168 = vld [vmem:[%s166 + $0x8] sm:$0xff]
    %v170 = vsel %vm132, %v167, 0
    %v173 = vsel %vm132, %v168, 0
    %175 = vmatpush.msra.mxu0 0.0
    %176 = vmatpush.msra.mxu0 0.0
    %177 = vmatpush.msra.mxu0 0.0
    %178 = vmatpush.msra.mxu0 0.0
    %179 = vmatpush.msra.mxu0 0.0
    %180 = vmatpush.msra.mxu0 0.0
    %181 = vmatpush.msra.mxu0 0.0
    %182 = vmatpush.msra.mxu0 0.0
    %183 = vmatpush.msra.mxu0 0.0
    %184 = vmatpush.msra.mxu0 0.0
    %185 = vmatpush.msra.mxu0 0.0
    %186 = vmatpush.msra.mxu0 0.0
    %187 = vmatpush.msra.mxu0 0.0
    %188 = vmatpush.msra.mxu0 0.0
    %189 = vmatpush.msra.mxu0 0.0
    %190 = vmatpush.msra.mxu0 %v141
    %191 = vmatmul.f32.gmra.mxu0 %v170
    %v192 = vpop.f32.mrf.mxu0
    %v193 = vadd.f32 %v130, %v192
    %194 = vmatmul.f32.gmra.mxu0 %v173
    %v195 = vpop.f32.mrf.mxu0
    %v196 = vadd.f32 %v130, %v195
    %197 = vdwg.mxu0
    %v198 = vld [vmem:[#allocation2] sm:$0xff]
    %v199 = vld [vmem:[#allocation2 + $0x8] sm:$0xff]
    %v200 = vld [vmem:[#allocation2 + $0x10] sm:$0xff]
    %v201 = vld [vmem:[#allocation2 + $0x18] sm:$0xff]
    %v202 = vld [vmem:[%s4] sm:$0x1]
    %v203 = vld [vmem:[#allocation5] sm:$0xff]
    %v204 = vld [vmem:[#allocation5 + $0x8] sm:$0xff]
    %v205 = vld [vmem:[#allocation5 + $0x10] sm:$0xff]
    %v206 = vld [vmem:[#allocation5 + $0x18] sm:$0xff]
    %v207 = vld [vmem:[%s6] sm:$0x1]
    %v208 = vld [vmem:[#allocation7] sm:$0xff]
    %v209 = vld [vmem:[#allocation7 + $0x8] sm:$0xff]
    %v210 = vld [vmem:[#allocation7 + $0x10] sm:$0xff]
    %v211 = vld [vmem:[#allocation7 + $0x18] sm:$0xff]
    %v212 = vld [vmem:[%s8] sm:$0x1]
    %v213 = vld [vmem:[#allocation8] sm:$0xff]
    %v214 = vld [vmem:[#allocation8 + $0x8] sm:$0xff]
    %v215 = vld [vmem:[#allocation8 + $0x10] sm:$0xff]
    %v216 = vld [vmem:[#allocation8 + $0x18] sm:$0xff]
    %v217 = vld [vmem:[%s10] sm:$0x1]
    %v218 = vld [vmem:[%s11] sm:$0x1]
    %v219 = vld [vmem:[%s12] sm:$0x1]
    %v220 = vld [vmem:[%s13] sm:$0x1]
    %v221 = vld [vmem:[%s14] sm:$0x1]
    %v223 = vperm.slane %v202, 0
    %vm225 = vcmask 261120
    %v227 = vsel %vm225, %v161, 0
    %v230 = vsel %vm225, %v164, 0
    %v233 = vsel %vm225, %v193, 0
    %v236 = vsel %vm225, %v196, 0
    %238 = vmatpush.msra.mxu0 0.0
    %239 = vmatpush.msra.mxu0 0.0
    %240 = vmatpush.msra.mxu0 0.0
    %241 = vmatpush.msra.mxu0 0.0
    %242 = vmatpush.msra.mxu0 0.0
    %243 = vmatpush.msra.mxu0 0.0
    %244 = vmatpush.msra.mxu0 0.0
    %245 = vmatpush.msra.mxu0 0.0
    %246 = vmatpush.msra.mxu0 0.0
    %247 = vmatpush.msra.mxu0 0.0
    %248 = vmatpush.msra.mxu0 0.0
    %249 = vmatpush.msra.mxu0 0.0
    %250 = vmatpush.msra.mxu0 %v201
    %251 = vmatpush.msra.mxu0 %v200
    %252 = vmatpush.msra.mxu0 %v199
    %253 = vmatpush.msra.mxu0 %v198
    %254 = vmatmul.f32.gmra.mxu0 %v227
    %v255 = vpop.f32.mrf.mxu0
    %v256 = vadd.f32 %v223, %v255
    %257 = vmatmul.f32.gmra.mxu0 %v230
    %v258 = vpop.f32.mrf.mxu0
    %v259 = vadd.f32 %v223, %v258
    %260 = vmatmul.f32.gmra.mxu0 %v233
    %v261 = vpop.f32.mrf.mxu0
    %v262 = vadd.f32 %v223, %v261
    %263 = vmatmul.f32.gmra.mxu0 %v236
    %v264 = vpop.f32.mrf.mxu0
    %v265 = vadd.f32 %v223, %v264
    %266 = vdwg.mxu0
    %269 = vrot.lane.b32.xlu0 %v256, 96
    %v270 = vpop.permute.xlu0 %269
    %271 = vrot.lane.b32.xlu0 %v259, 96
    %v272 = vpop.permute.xlu0 %271
    %v275 = vmul.f32 %v256, %v270
    %v276 = vmul.f32 %v259, %v272
    %v278 = vsel %vm225, %v275, 0
    %v281 = vsel %vm225, %v276, 0
    %283 = vmatpush.msra.mxu0 0.0
    %284 = vmatpush.msra.mxu0 0.0
    %285 = vmatpush.msra.mxu0 0.0
    %286 = vmatpush.msra.mxu0 0.0
    %287 = vmatpush.msra.mxu0 0.0
    %288 = vmatpush.msra.mxu0 0.0
    %289 = vmatpush.msra.mxu0 0.0
    %290 = vmatpush.msra.mxu0 0.0
    %291 = vmatpush.msra.mxu0 0.0
    %292 = vmatpush.msra.mxu0 0.0
    %293 = vmatpush.msra.mxu0 0.0
    %294 = vmatpush.msra.mxu0 0.0
    %295 = vmatpush.msra.mxu0 %v123
    %296 = vmatpush.msra.mxu0 %v122
    %297 = vmatpush.msra.mxu0 %v121
    %298 = vmatpush.msra.mxu0 %v120
    %299 = vmatmul.f32.gmra.mxu0 %v278
    %v300 = vpop.f32.mrf.mxu0
    %v301 = vadd.f32 0.0, %v300
    %302 = vmatmul.f32.gmra.mxu0 %v281
    %v303 = vpop.f32.mrf.mxu0
    %v304 = vadd.f32 0.0, %v303
    %305 = vdwg.mxu0
    %308 = vrot.lane.b32.xlu0 %v262, 96
    %v309 = vpop.permute.xlu0 %308
    %310 = vrot.lane.b32.xlu0 %v265, 96
    %v311 = vpop.permute.xlu0 %310
    %v314 = vmul.f32 %v256, %v309
    %v315 = vmul.f32 %v259, %v311
    %v317 = vsel %vm225, %v314, 0
    %v320 = vsel %vm225, %v315, 0
    %322 = vmatpush.msra.mxu0 0.0
    %323 = vmatpush.msra.mxu0 0.0
    %324 = vmatpush.msra.mxu0 0.0
    %325 = vmatpush.msra.mxu0 0.0
    %326 = vmatpush.msra.mxu0 0.0
    %327 = vmatpush.msra.mxu0 0.0
    %328 = vmatpush.msra.mxu0 0.0
    %329 = vmatpush.msra.mxu0 0.0
    %330 = vmatpush.msra.mxu0 0.0
    %331 = vmatpush.msra.mxu0 0.0
    %332 = vmatpush.msra.mxu0 0.0
    %333 = vmatpush.msra.mxu0 0.0
    %334 = vmatpush.msra.mxu0 %v123
    %335 = vmatpush.msra.mxu0 %v122
    %336 = vmatpush.msra.mxu0 %v121
    %337 = vmatpush.msra.mxu0 %v120
    %338 = vmatmul.f32.gmra.mxu0 %v317
    %v339 = vpop.f32.mrf.mxu0
    %v340 = vadd.f32 0.0, %v339
    %341 = vmatmul.f32.gmra.mxu0 %v320
    %v342 = vpop.f32.mrf.mxu0
    %v343 = vadd.f32 0.0, %v342
    %344 = vdwg.mxu0
    %v345 = vmax.f32 %v301, %v340
    %v346 = vmax.f32 %v304, %v343
    %v347 = vsub.f32 %v301, %v345
    %v348 = vsub.f32 %v304, %v346
    %v349 = vmul.f32 %v347, 1.442695
    %v350 = vpow.pop %v349
    %v351 = vmul.f32 %v348, 1.442695
    %v352 = vpow.pop %v351
    %v353 = vsub.f32 %v340, %v345
    %v354 = vsub.f32 %v343, %v346
    %v355 = vmul.f32 %v353, 1.442695
    %v356 = vpow.pop %v355
    %v357 = vmul.f32 %v354, 1.442695
    %v358 = vpow.pop %v357
    %v359 = vadd.f32 %v350, %v356
    %v360 = vadd.f32 %v352, %v358
    %v361 = vrcp.pop %v359
    %v362 = vrcp.pop %v360
    %v363 = vmul.f32 %v350, %v361
    %v364 = vmul.f32 %v352, %v362
    %v366 = vsel %vm132, %v363, 0
    %v369 = vsel %vm132, %v364, 0
    %v372 = vsel %vm139, %v124, 0
    %374 = vmatpush.msra.mxu0 0.0
    %375 = vmatpush.msra.mxu0 0.0
    %376 = vmatpush.msra.mxu0 0.0
    %377 = vmatpush.msra.mxu0 0.0
    %378 = vmatpush.msra.mxu0 0.0
    %379 = vmatpush.msra.mxu0 0.0
    %380 = vmatpush.msra.mxu0 0.0
    %381 = vmatpush.msra.mxu0 0.0
    %382 = vmatpush.msra.mxu0 0.0
    %383 = vmatpush.msra.mxu0 0.0
    %384 = vmatpush.msra.mxu0 0.0
    %385 = vmatpush.msra.mxu0 0.0
    %386 = vmatpush.msra.mxu0 0.0
    %387 = vmatpush.msra.mxu0 0.0
    %388 = vmatpush.msra.mxu0 0.0
    %389 = vmatpush.msra.mxu0 %v372
    %390 = vmatmul.f32.gmra.mxu0 %v366
    %v391 = vpop.f32.mrf.mxu0
    %v392 = vadd.f32 0.0, %v391
    %393 = vmatmul.f32.gmra.mxu0 %v369
    %v394 = vpop.f32.mrf.mxu0
    %v395 = vadd.f32 0.0, %v394
    %396 = vdwg.mxu0
    %397 = vrot.lane.b32.xlu0 %v256, 64
    %v398 = vpop.permute.xlu0 %397
    %399 = vrot.lane.b32.xlu0 %v259, 64
    %v400 = vpop.permute.xlu0 %399
    %v403 = vmul.f32 %v392, %v398
    %v404 = vmul.f32 %v395, %v400
    %v405 = vmul.f32 %v356, %v361
    %v406 = vmul.f32 %v358, %v362
    %v408 = vsel %vm132, %v405, 0
    %v411 = vsel %vm132, %v406, 0
    %413 = vmatpush.msra.mxu0 0.0
    %414 = vmatpush.msra.mxu0 0.0
    %415 = vmatpush.msra.mxu0 0.0
    %416 = vmatpush.msra.mxu0 0.0
    %417 = vmatpush.msra.mxu0 0.0
    %418 = vmatpush.msra.mxu0 0.0
    %419 = vmatpush.msra.mxu0 0.0
    %420 = vmatpush.msra.mxu0 0.0
    %421 = vmatpush.msra.mxu0 0.0
    %422 = vmatpush.msra.mxu0 0.0
    %423 = vmatpush.msra.mxu0 0.0
    %424 = vmatpush.msra.mxu0 0.0
    %425 = vmatpush.msra.mxu0 0.0
    %426 = vmatpush.msra.mxu0 0.0
    %427 = vmatpush.msra.mxu0 0.0
    %428 = vmatpush.msra.mxu0 %v372
    %429 = vmatmul.f32.gmra.mxu0 %v408
    %v430 = vpop.f32.mrf.mxu0
    %v431 = vadd.f32 0.0, %v430
    %432 = vmatmul.f32.gmra.mxu0 %v411
    %v433 = vpop.f32.mrf.mxu0
    %v434 = vadd.f32 0.0, %v433
    %435 = vdwg.mxu0
    %436 = vrot.lane.b32.xlu0 %v262, 64
    %v437 = vpop.permute.xlu0 %436
    %438 = vrot.lane.b32.xlu0 %v265, 64
    %v439 = vpop.permute.xlu0 %438
    %v442 = vmul.f32 %v431, %v437
    %v443 = vmul.f32 %v434, %v439
    %v444 = vadd.f32 %v403, %v442
    %v445 = vadd.f32 %v404, %v443
    %v446 = vmul.f32 %v262, %v270
    %v447 = vmul.f32 %v265, %v272
    %v449 = vsel %vm225, %v446, 0
    %v452 = vsel %vm225, %v447, 0
    %454 = vmatpush.msra.mxu0 0.0
    %455 = vmatpush.msra.mxu0 0.0
    %456 = vmatpush.msra.mxu0 0.0
    %457 = vmatpush.msra.mxu0 0.0
    %458 = vmatpush.msra.mxu0 0.0
    %459 = vmatpush.msra.mxu0 0.0
    %460 = vmatpush.msra.mxu0 0.0
    %461 = vmatpush.msra.mxu0 0.0
    %462 = vmatpush.msra.mxu0 0.0
    %463 = vmatpush.msra.mxu0 0.0
    %464 = vmatpush.msra.mxu0 0.0
    %465 = vmatpush.msra.mxu0 0.0
    %466 = vmatpush.msra.mxu0 %v123
    %467 = vmatpush.msra.mxu0 %v122
    %468 = vmatpush.msra.mxu0 %v121
    %469 = vmatpush.msra.mxu0 %v120
    %470 = vmatmul.f32.gmra.mxu0 %v449
    %v471 = vpop.f32.mrf.mxu0
    %v472 = vadd.f32 0.0, %v471
    %473 = vmatmul.f32.gmra.mxu0 %v452
    %v474 = vpop.f32.mrf.mxu0
    %v475 = vadd.f32 0.0, %v474
    %476 = vdwg.mxu0
    %v477 = vmul.f32 %v262, %v309
    %v478 = vmul.f32 %v265, %v311
    %v480 = vsel %vm225, %v477, 0
    %v483 = vsel %vm225, %v478, 0
    %485 = vmatpush.msra.mxu0 0.0
    %486 = vmatpush.msra.mxu0 0.0
    %487 = vmatpush.msra.mxu0 0.0
    %488 = vmatpush.msra.mxu0 0.0
    %489 = vmatpush.msra.mxu0 0.0
    %490 = vmatpush.msra.mxu0 0.0
    %491 = vmatpush.msra.mxu0 0.0
    %492 = vmatpush.msra.mxu0 0.0
    %493 = vmatpush.msra.mxu0 0.0
    %494 = vmatpush.msra.mxu0 0.0
    %495 = vmatpush.msra.mxu0 0.0
    %496 = vmatpush.msra.mxu0 0.0
    %497 = vmatpush.msra.mxu0 %v123
    %498 = vmatpush.msra.mxu0 %v122
    %499 = vmatpush.msra.mxu0 %v121
    %500 = vmatpush.msra.mxu0 %v120
    %501 = vmatmul.f32.gmra.mxu0 %v480
    %v502 = vpop.f32.mrf.mxu0
    %v503 = vadd.f32 0.0, %v502
    %504 = vmatmul.f32.gmra.mxu0 %v483
    %v505 = vpop.f32.mrf.mxu0
    %v506 = vadd.f32 0.0, %v505
    %507 = vdwg.mxu0
    %v508 = vmax.f32 %v472, %v503
    %v509 = vmax.f32 %v475, %v506
    %v510 = vsub.f32 %v472, %v508
    %v511 = vsub.f32 %v475, %v509
    %v512 = vmul.f32 %v510, 1.442695
    %v513 = vpow.pop %v512
    %v514 = vmul.f32 %v511, 1.442695
    %v515 = vpow.pop %v514
    %v516 = vsub.f32 %v503, %v508
    %v517 = vsub.f32 %v506, %v509
    %v518 = vmul.f32 %v516, 1.442695
    %v519 = vpow.pop %v518
    %v520 = vmul.f32 %v517, 1.442695
    %v521 = vpow.pop %v520
    %v522 = vadd.f32 %v513, %v519
    %v523 = vadd.f32 %v515, %v521
    %v524 = vrcp.pop %v522
    %v525 = vrcp.pop %v523
    %v526 = vmul.f32 %v513, %v524
    %v527 = vmul.f32 %v515, %v525
    %v529 = vsel %vm132, %v526, 0
    %v532 = vsel %vm132, %v527, 0
    %534 = vmatpush.msra.mxu0 0.0
    %535 = vmatpush.msra.mxu0 0.0
    %536 = vmatpush.msra.mxu0 0.0
    %537 = vmatpush.msra.mxu0 0.0
    %538 = vmatpush.msra.mxu0 0.0
    %539 = vmatpush.msra.mxu0 0.0
    %540 = vmatpush.msra.mxu0 0.0
    %541 = vmatpush.msra.mxu0 0.0
    %542 = vmatpush.msra.mxu0 0.0
    %543 = vmatpush.msra.mxu0 0.0
    %544 = vmatpush.msra.mxu0 0.0
    %545 = vmatpush.msra.mxu0 0.0
    %546 = vmatpush.msra.mxu0 0.0
    %547 = vmatpush.msra.mxu0 0.0
    %548 = vmatpush.msra.mxu0 0.0
    %549 = vmatpush.msra.mxu0 %v372
    %550 = vmatmul.f32.gmra.mxu0 %v529
    %v551 = vpop.f32.mrf.mxu0
    %v552 = vadd.f32 0.0, %v551
    %553 = vmatmul.f32.gmra.mxu0 %v532
    %v554 = vpop.f32.mrf.mxu0
    %v555 = vadd.f32 0.0, %v554
    %556 = vdwg.mxu0
    %v557 = vmul.f32 %v552, %v398
    %v558 = vmul.f32 %v555, %v400
    %v559 = vmul.f32 %v519, %v524
    %v560 = vmul.f32 %v521, %v525
    %v562 = vsel %vm132, %v559, 0
    %v565 = vsel %vm132, %v560, 0
    %567 = vmatpush.msra.mxu0 0.0
    %568 = vmatpush.msra.mxu0 0.0
    %569 = vmatpush.msra.mxu0 0.0
    %570 = vmatpush.msra.mxu0 0.0
    %571 = vmatpush.msra.mxu0 0.0
    %572 = vmatpush.msra.mxu0 0.0
    %573 = vmatpush.msra.mxu0 0.0
    %574 = vmatpush.msra.mxu0 0.0
    %575 = vmatpush.msra.mxu0 0.0
    %576 = vmatpush.msra.mxu0 0.0
    %577 = vmatpush.msra.mxu0 0.0
    %578 = vmatpush.msra.mxu0 0.0
    %579 = vmatpush.msra.mxu0 0.0
    %580 = vmatpush.msra.mxu0 0.0
    %581 = vmatpush.msra.mxu0 0.0
    %582 = vmatpush.msra.mxu0 %v372
    %583 = vmatmul.f32.gmra.mxu0 %v562
    %v584 = vpop.f32.mrf.mxu0
    %v585 = vadd.f32 0.0, %v584
    %586 = vmatmul.f32.gmra.mxu0 %v565
    %v587 = vpop.f32.mrf.mxu0
    %v588 = vadd.f32 0.0, %v587
    %589 = vdwg.mxu0
    %v590 = vmul.f32 %v585, %v437
    %v591 = vmul.f32 %v588, %v439
    %v592 = vadd.f32 %v557, %v590
    %v593 = vadd.f32 %v558, %v591
    %v595 = vperm.slane %v207, 0
    %v598 = vsel %vm225, %v444, 0
    %v601 = vsel %vm225, %v445, 0
    %v604 = vsel %vm225, %v592, 0
    %v607 = vsel %vm225, %v593, 0
    %609 = vmatpush.msra.mxu0 0.0
    %610 = vmatpush.msra.mxu0 0.0
    %611 = vmatpush.msra.mxu0 0.0
    %612 = vmatpush.msra.mxu0 0.0
    %613 = vmatpush.msra.mxu0 0.0
    %614 = vmatpush.msra.mxu0 0.0
    %615 = vmatpush.msra.mxu0 0.0
    %616 = vmatpush.msra.mxu0 0.0
    %617 = vmatpush.msra.mxu0 0.0
    %618 = vmatpush.msra.mxu0 0.0
    %619 = vmatpush.msra.mxu0 0.0
    %620 = vmatpush.msra.mxu0 0.0
    %621 = vmatpush.msra.mxu0 %v206
    %622 = vmatpush.msra.mxu0 %v205
    %623 = vmatpush.msra.mxu0 %v204
    %624 = vmatpush.msra.mxu0 %v203
    %625 = vmatmul.f32.gmra.mxu0 %v598
    %v626 = vpop.f32.mrf.mxu0
    %v627 = vadd.f32 %v595, %v626
    %628 = vmatmul.f32.gmra.mxu0 %v601
    %v629 = vpop.f32.mrf.mxu0
    %v630 = vadd.f32 %v595, %v629
    %631 = vmatmul.f32.gmra.mxu0 %v604
    %v632 = vpop.f32.mrf.mxu0
    %v633 = vadd.f32 %v595, %v632
    %634 = vmatmul.f32.gmra.mxu0 %v607
    %v635 = vpop.f32.mrf.mxu0
    %v636 = vadd.f32 %v595, %v635
    %637 = vdwg.mxu0
    %v638 = vadd.f32 %v161, %v627
    %v639 = vadd.f32 %v164, %v630
    %v640 = vadd.f32 %v193, %v633
    %v641 = vadd.f32 %v196, %v636
    %v642 = vsel %vm225, %v638, 0.0
    %643 = vadd.xlane.f32.xlu0 %v642
    %v644 = vpop.xlane.xlu0 %643
    %v645 = vsel %vm225, %v639, 0.0
    %646 = vadd.xlane.f32.xlu0 %v645
    %v647 = vpop.xlane.xlu0 %646
    %v648 = vsel %vm225, %v640, 0.0
    %649 = vadd.xlane.f32.xlu0 %v648
    %v650 = vpop.xlane.xlu0 %649
    %v651 = vsel %vm225, %v641, 0.0
    %652 = vadd.xlane.f32.xlu0 %v651
    %v653 = vpop.xlane.xlu0 %652
    %v654 = vrcp.pop 32.0
    %v655 = vmul.f32 32.0, %v654
    %v656 = vsub.f32 1.0, %v655
    %v657 = vmul.f32 %v654, %v656
    %v658 = vadd.f32 %v654, %v657
    %vm659 = vweird.f32 %v654
    %v660 = vsel %vm659, %v654, %v658
    %v661 = vmul.f32 %v644, %v660
    %v662 = vmul.f32 %v647, %v660
    %v663 = vmul.f32 %v650, %v660
    %v664 = vmul.f32 %v653, %v660
    %v665 = vsub.f32 %v638, %v661
    %v666 = vsub.f32 %v639, %v662
    %v667 = vsub.f32 %v640, %v663
    %v668 = vsub.f32 %v641, %v664
    %v669 = vmul.f32 %v665, %v665
    %v670 = vmul.f32 %v666, %v666
    %v671 = vmul.f32 %v667, %v667
    %v672 = vmul.f32 %v668, %v668
    %v673 = vsel %vm225, %v669, 0.0
    %674 = vadd.xlane.f32.xlu0 %v673
    %v675 = vpop.xlane.xlu0 %674
    %v676 = vsel %vm225, %v670, 0.0
    %677 = vadd.xlane.f32.xlu0 %v676
    %v678 = vpop.xlane.xlu0 %677
    %v679 = vsel %vm225, %v671, 0.0
    %680 = vadd.xlane.f32.xlu0 %v679
    %v681 = vpop.xlane.xlu0 %680
    %v682 = vsel %vm225, %v672, 0.0
    %683 = vadd.xlane.f32.xlu0 %v682
    %v684 = vpop.xlane.xlu0 %683
    %v685 = vmul.f32 %v675, %v660
    %v686 = vmul.f32 %v678, %v660
    %v687 = vmul.f32 %v681, %v660
    %v688 = vmul.f32 %v684, %v660
    %v689 = vadd.f32 %v685, 1e-05
    %v690 = vadd.f32 %v686, 1e-05
    %v691 = vadd.f32 %v687, 1e-05
    %v692 = vadd.f32 %v688, 1e-05
    %v693 = vrsqrt.pop %v689
    %v694 = vmul.f32 %v693, %v689
    %v695 = vmul.f32 %v694, %v693
    %v696 = vmul.f32 0.5, %v695
    %v697 = vsub.f32 1.5, %v696
    %v698 = vmul.f32 %v693, %v697
    %vm699 = vweird.f32 %v689
    %vm700 = vweird.f32 %v693
    %vm701 = vmor %vm699, %vm700
    %v702 = vsel %vm701, %v693, %v698
    %v703 = vrsqrt.pop %v690
    %v704 = vmul.f32 %v703, %v690
    %v705 = vmul.f32 %v704, %v703
    %v706 = vmul.f32 0.5, %v705
    %v707 = vsub.f32 1.5, %v706
    %v708 = vmul.f32 %v703, %v707
    %vm709 = vweird.f32 %v690
    %vm710 = vweird.f32 %v703
    %vm711 = vmor %vm709, %vm710
    %v712 = vsel %vm711, %v703, %v708
    %v713 = vrsqrt.pop %v691
    %v714 = vmul.f32 %v713, %v691
    %v715 = vmul.f32 %v714, %v713
    %v716 = vmul.f32 0.5, %v715
    %v717 = vsub.f32 1.5, %v716
    %v718 = vmul.f32 %v713, %v717
    %vm719 = vweird.f32 %v691
    %vm720 = vweird.f32 %v713
    %vm721 = vmor %vm719, %vm720
    %v722 = vsel %vm721, %v713, %v718
    %v723 = vrsqrt.pop %v692
    %v724 = vmul.f32 %v723, %v692
    %v725 = vmul.f32 %v724, %v723
    %v726 = vmul.f32 0.5, %v725
    %v727 = vsub.f32 1.5, %v726
    %v728 = vmul.f32 %v723, %v727
    %vm729 = vweird.f32 %v692
    %vm730 = vweird.f32 %v723
    %vm731 = vmor %vm729, %vm730
    %v732 = vsel %vm731, %v723, %v728
    %v733 = vmul.f32 %v665, %v702
    %v734 = vmul.f32 %v666, %v712
    %v735 = vmul.f32 %v667, %v722
    %v736 = vmul.f32 %v668, %v732
    %v738 = vperm.slane %v218, 0
    %v740 = vmul.f32 %v733, %v738
    %v741 = vmul.f32 %v734, %v738
    %v742 = vmul.f32 %v735, %v738
    %v743 = vmul.f32 %v736, %v738
    %v745 = vperm.slane %v219, 0
    %v747 = vadd.f32 %v740, %v745
    %v748 = vadd.f32 %v741, %v745
    %v749 = vadd.f32 %v742, %v745
    %v750 = vadd.f32 %v743, %v745
    %v752 = vperm.slane %v212, 0
    %v755 = vsel %vm225, %v747, 0
    %v758 = vsel %vm225, %v748, 0
    %v761 = vsel %vm225, %v749, 0
    %v764 = vsel %vm225, %v750, 0
    %766 = vmatpush.msra.mxu0 0.0
    %767 = vmatpush.msra.mxu0 0.0
    %768 = vmatpush.msra.mxu0 0.0
    %769 = vmatpush.msra.mxu0 0.0
    %770 = vmatpush.msra.mxu0 0.0
    %771 = vmatpush.msra.mxu0 0.0
    %772 = vmatpush.msra.mxu0 0.0
    %773 = vmatpush.msra.mxu0 0.0
    %774 = vmatpush.msra.mxu0 0.0
    %775 = vmatpush.msra.mxu0 0.0
    %776 = vmatpush.msra.mxu0 0.0
    %777 = vmatpush.msra.mxu0 0.0
    %778 = vmatpush.msra.mxu0 %v211
    %779 = vmatpush.msra.mxu0 %v210
    %780 = vmatpush.msra.mxu0 %v209
    %781 = vmatpush.msra.mxu0 %v208
    %782 = vmatmul.f32.gmra.mxu0 %v755
    %v783 = vpop.f32.mrf.mxu0
    %v784 = vadd.f32 %v752, %v783
    %785 = vmatmul.f32.gmra.mxu0 %v758
    %v786 = vpop.f32.mrf.mxu0
    %v787 = vadd.f32 %v752, %v786
    %788 = vmatmul.f32.gmra.mxu0 %v761
    %v789 = vpop.f32.mrf.mxu0
    %v790 = vadd.f32 %v752, %v789
    %791 = vmatmul.f32.gmra.mxu0 %v764
    %v792 = vpop.f32.mrf.mxu0
    %v793 = vadd.f32 %v752, %v792
    %794 = vdwg.mxu0
    %v795 = vmax.f32 %v784, 0.0
    %v796 = vmax.f32 %v787, 0.0
    %v797 = vmax.f32 %v790, 0.0
    %v798 = vmax.f32 %v793, 0.0
    %v800 = vperm.slane %v217, 0
    %v803 = vsel %vm225, %v795, 0
    %v806 = vsel %vm225, %v796, 0
    %v809 = vsel %vm225, %v797, 0
    %v812 = vsel %vm225, %v798, 0
    %814 = vmatpush.msra.mxu0 0.0
    %815 = vmatpush.msra.mxu0 0.0
    %816 = vmatpush.msra.mxu0 0.0
    %817 = vmatpush.msra.mxu0 0.0
    %818 = vmatpush.msra.mxu0 0.0
    %819 = vmatpush.msra.mxu0 0.0
    %820 = vmatpush.msra.mxu0 0.0
    %821 = vmatpush.msra.mxu0 0.0
    %822 = vmatpush.msra.mxu0 0.0
    %823 = vmatpush.msra.mxu0 0.0
    %824 = vmatpush.msra.mxu0 0.0
    %825 = vmatpush.msra.mxu0 0.0
    %826 = vmatpush.msra.mxu0 %v216
    %827 = vmatpush.msra.mxu0 %v215
    %828 = vmatpush.msra.mxu0 %v214
    %829 = vmatpush.msra.mxu0 %v213
    %830 = vmatmul.f32.gmra.mxu0 %v803
    %v831 = vpop.f32.mrf.mxu0
    %v832 = vadd.f32 %v800, %v831
    %833 = vmatmul.f32.gmra.mxu0 %v806
    %v834 = vpop.f32.mrf.mxu0
    %v835 = vadd.f32 %v800, %v834
    %836 = vmatmul.f32.gmra.mxu0 %v809
    %v837 = vpop.f32.mrf.mxu0
    %v838 = vadd.f32 %v800, %v837
    %839 = vmatmul.f32.gmra.mxu0 %v812
    %v840 = vpop.f32.mrf.mxu0
    %v841 = vadd.f32 %v800, %v840
    %842 = vdwg.mxu0
    %v843 = vadd.f32 %v747, %v832
    %v844 = vadd.f32 %v748, %v835
    %v845 = vadd.f32 %v749, %v838
    %v846 = vadd.f32 %v750, %v841
    %v847 = vsel %vm225, %v843, 0.0
    %848 = vadd.xlane.f32.xlu0 %v847
    %v849 = vpop.xlane.xlu0 %848
    %v850 = vsel %vm225, %v844, 0.0
    %851 = vadd.xlane.f32.xlu0 %v850
    %v852 = vpop.xlane.xlu0 %851
    %v853 = vsel %vm225, %v845, 0.0
    %854 = vadd.xlane.f32.xlu0 %v853
    %v855 = vpop.xlane.xlu0 %854
    %v856 = vsel %vm225, %v846, 0.0
    %857 = vadd.xlane.f32.xlu0 %v856
    %v858 = vpop.xlane.xlu0 %857
    %v859 = vmul.f32 %v849, %v660
    %v860 = vmul.f32 %v852, %v660
    %v861 = vmul.f32 %v855, %v660
    %v862 = vmul.f32 %v858, %v660
    %v863 = vsub.f32 %v843, %v859
    %v864 = vsub.f32 %v844, %v860
    %v865 = vsub.f32 %v845, %v861
    %v866 = vsub.f32 %v846, %v862
    %v867 = vmul.f32 %v863, %v863
    %v868 = vmul.f32 %v864, %v864
    %v869 = vmul.f32 %v865, %v865
    %v870 = vmul.f32 %v866, %v866
    %v871 = vsel %vm225, %v867, 0.0
    %872 = vadd.xlane.f32.xlu0 %v871
    %v873 = vpop.xlane.xlu0 %872
    %v874 = vsel %vm225, %v868, 0.0
    %875 = vadd.xlane.f32.xlu0 %v874
    %v876 = vpop.xlane.xlu0 %875
    %v877 = vsel %vm225, %v869, 0.0
    %878 = vadd.xlane.f32.xlu0 %v877
    %v879 = vpop.xlane.xlu0 %878
    %v880 = vsel %vm225, %v870, 0.0
    %881 = vadd.xlane.f32.xlu0 %v880
    %v882 = vpop.xlane.xlu0 %881
    %v883 = vmul.f32 %v873, %v660
    %v884 = vmul.f32 %v876, %v660
    %v885 = vmul.f32 %v879, %v660
    %v886 = vmul.f32 %v882, %v660
    %v887 = vadd.f32 %v883, 1e-05
    %v888 = vadd.f32 %v884, 1e-05
    %v889 = vadd.f32 %v885, 1e-05
    %v890 = vadd.f32 %v886, 1e-05
    %v891 = vrsqrt.pop %v887
    %v892 = vmul.f32 %v891, %v887
    %v893 = vmul.f32 %v892, %v891
    %v894 = vmul.f32 0.5, %v893
    %v895 = vsub.f32 1.5, %v894
    %v896 = vmul.f32 %v891, %v895
    %vm897 = vweird.f32 %v887
    %vm898 = vweird.f32 %v891
    %vm899 = vmor %vm897, %vm898
    %v900 = vsel %vm899, %v891, %v896
    %v901 = vrsqrt.pop %v888
    %v902 = vmul.f32 %v901, %v888
    %v903 = vmul.f32 %v902, %v901
    %v904 = vmul.f32 0.5, %v903
    %v905 = vsub.f32 1.5, %v904
    %v906 = vmul.f32 %v901, %v905
    %vm907 = vweird.f32 %v888
    %vm908 = vweird.f32 %v901
    %vm909 = vmor %vm907, %vm908
    %v910 = vsel %vm909, %v901, %v906
    %v911 = vrsqrt.pop %v889
    %v912 = vmul.f32 %v911, %v889
    %v913 = vmul.f32 %v912, %v911
    %v914 = vmul.f32 0.5, %v913
    %v915 = vsub.f32 1.5, %v914
    %v916 = vmul.f32 %v911, %v915
    %vm917 = vweird.f32 %v889
    %vm918 = vweird.f32 %v911
    %vm919 = vmor %vm917, %vm918
    %v920 = vsel %vm919, %v911, %v916
    %v921 = vrsqrt.pop %v890
    %v922 = vmul.f32 %v921, %v890
    %v923 = vmul.f32 %v922, %v921
    %v924 = vmul.f32 0.5, %v923
    %v925 = vsub.f32 1.5, %v924
    %v926 = vmul.f32 %v921, %v925
    %vm927 = vweird.f32 %v890
    %vm928 = vweird.f32 %v921
    %vm929 = vmor %vm927, %vm928
    %v930 = vsel %vm929, %v921, %v926
    %v931 = vmul.f32 %v863, %v900
    %v932 = vmul.f32 %v864, %v910
    %v933 = vmul.f32 %v865, %v920
    %v934 = vmul.f32 %v866, %v930
    %v936 = vperm.slane %v220, 0
    %v938 = vmul.f32 %v931, %v936
    %v939 = vmul.f32 %v932, %v936
    %v940 = vmul.f32 %v933, %v936
    %v941 = vmul.f32 %v934, %v936
    %v943 = vperm.slane %v221, 0
    %v945 = vadd.f32 %v938, %v943
    %v946 = vadd.f32 %v939, %v943
    %v947 = vadd.f32 %v940, %v943
    %v948 = vadd.f32 %v941, %v943
    %s949 = scalar_lea.vmem [#allocation2], 32
    %v950 = vld [vmem:[%s949] sm:$0xff]
    %v951 = vld [vmem:[%s949 + $0x8] sm:$0xff]
    %v952 = vld [vmem:[%s949 + $0x10] sm:$0xff]
    %v953 = vld [vmem:[%s949 + $0x18] sm:$0xff]
    %s954 = scalar_lea.vmem %s4, 1
    %v955 = vld [vmem:[%s954] sm:$0x1]
    %s956 = scalar_lea.vmem [#allocation5], 32
    %v957 = vld [vmem:[%s956] sm:$0xff]
    %v958 = vld [vmem:[%s956 + $0x8] sm:$0xff]
    %v959 = vld [vmem:[%s956 + $0x10] sm:$0xff]
    %v960 = vld [vmem:[%s956 + $0x18] sm:$0xff]
    %s961 = scalar_lea.vmem %s6, 1
    %v962 = vld [vmem:[%s961] sm:$0x1]
    %s963 = scalar_lea.vmem [#allocation7], 32
    %v964 = vld [vmem:[%s963] sm:$0xff]
    %v965 = vld [vmem:[%s963 + $0x8] sm:$0xff]
    %v966 = vld [vmem:[%s963 + $0x10] sm:$0xff]
    %v967 = vld [vmem:[%s963 + $0x18] sm:$0xff]
    %s968 = scalar_lea.vmem %s8, 1
    %v969 = vld [vmem:[%s968] sm:$0x1]
    %s970 = scalar_lea.vmem [#allocation8], 32
    %v971 = vld [vmem:[%s970] sm:$0xff]
    %v972 = vld [vmem:[%s970 + $0x8] sm:$0xff]
    %v973 = vld [vmem:[%s970 + $0x10] sm:$0xff]
    %v974 = vld [vmem:[%s970 + $0x18] sm:$0xff]
    %s975 = scalar_lea.vmem %s10, 1
    %v976 = vld [vmem:[%s975] sm:$0x1]
    %s977 = scalar_lea.vmem %s11, 1
    %v978 = vld [vmem:[%s977] sm:$0x1]
    %s979 = scalar_lea.vmem %s12, 1
    %v980 = vld [vmem:[%s979] sm:$0x1]
    %s981 = scalar_lea.vmem %s13, 1
    %v982 = vld [vmem:[%s981] sm:$0x1]
    %s983 = scalar_lea.vmem %s14, 1
    %v984 = vld [vmem:[%s983] sm:$0x1]
    %v986 = vperm.slane %v955, 0
    %v989 = vsel %vm225, %v945, 0
    %v992 = vsel %vm225, %v946, 0
    %v995 = vsel %vm225, %v947, 0
    %v998 = vsel %vm225, %v948, 0
    %1000 = vmatpush.msra.mxu0 0.0
    %1001 = vmatpush.msra.mxu0 0.0
    %1002 = vmatpush.msra.mxu0 0.0
    %1003 = vmatpush.msra.mxu0 0.0
    %1004 = vmatpush.msra.mxu0 0.0
    %1005 = vmatpush.msra.mxu0 0.0
    %1006 = vmatpush.msra.mxu0 0.0
    %1007 = vmatpush.msra.mxu0 0.0
    %1008 = vmatpush.msra.mxu0 0.0
    %1009 = vmatpush.msra.mxu0 0.0
    %1010 = vmatpush.msra.mxu0 0.0
    %1011 = vmatpush.msra.mxu0 0.0
    %1012 = vmatpush.msra.mxu0 %v953
    %1013 = vmatpush.msra.mxu0 %v952
    %1014 = vmatpush.msra.mxu0 %v951
    %1015 = vmatpush.msra.mxu0 %v950
    %1016 = vmatmul.f32.gmra.mxu0 %v989
    %v1017 = vpop.f32.mrf.mxu0
    %v1018 = vadd.f32 %v986, %v1017
    %1019 = vmatmul.f32.gmra.mxu0 %v992
    %v1020 = vpop.f32.mrf.mxu0
    %v1021 = vadd.f32 %v986, %v1020
    %1022 = vmatmul.f32.gmra.mxu0 %v995
    %v1023 = vpop.f32.mrf.mxu0
    %v1024 = vadd.f32 %v986, %v1023
    %1025 = vmatmul.f32.gmra.mxu0 %v998
    %v1026 = vpop.f32.mrf.mxu0
    %v1027 = vadd.f32 %v986, %v1026
    %1028 = vdwg.mxu0
    %1031 = vrot.lane.b32.xlu0 %v1018, 96
    %v1032 = vpop.permute.xlu0 %1031
    %1033 = vrot.lane.b32.xlu0 %v1021, 96
    %v1034 = vpop.permute.xlu0 %1033
    %v1037 = vmul.f32 %v1018, %v1032
    %v1038 = vmul.f32 %v1021, %v1034
    %v1040 = vsel %vm225, %v1037, 0
    %v1043 = vsel %vm225, %v1038, 0
    %1045 = vmatpush.msra.mxu0 0.0
    %1046 = vmatpush.msra.mxu0 0.0
    %1047 = vmatpush.msra.mxu0 0.0
    %1048 = vmatpush.msra.mxu0 0.0
    %1049 = vmatpush.msra.mxu0 0.0
    %1050 = vmatpush.msra.mxu0 0.0
    %1051 = vmatpush.msra.mxu0 0.0
    %1052 = vmatpush.msra.mxu0 0.0
    %1053 = vmatpush.msra.mxu0 0.0
    %1054 = vmatpush.msra.mxu0 0.0
    %1055 = vmatpush.msra.mxu0 0.0
    %1056 = vmatpush.msra.mxu0 0.0
    %1057 = vmatpush.msra.mxu0 %v123
    %1058 = vmatpush.msra.mxu0 %v122
    %1059 = vmatpush.msra.mxu0 %v121
    %1060 = vmatpush.msra.mxu0 %v120
    %1061 = vmatmul.f32.gmra.mxu0 %v1040
    %v1062 = vpop.f32.mrf.mxu0
    %v1063 = vadd.f32 0.0, %v1062
    %1064 = vmatmul.f32.gmra.mxu0 %v1043
    %v1065 = vpop.f32.mrf.mxu0
    %v1066 = vadd.f32 0.0, %v1065
    %1067 = vdwg.mxu0
    %1070 = vrot.lane.b32.xlu0 %v1024, 96
    %v1071 = vpop.permute.xlu0 %1070
    %1072 = vrot.lane.b32.xlu0 %v1027, 96
    %v1073 = vpop.permute.xlu0 %1072
    %v1076 = vmul.f32 %v1018, %v1071
    %v1077 = vmul.f32 %v1021, %v1073
    %v1079 = vsel %vm225, %v1076, 0
    %v1082 = vsel %vm225, %v1077, 0
    %1084 = vmatpush.msra.mxu0 0.0
    %1085 = vmatpush.msra.mxu0 0.0
    %1086 = vmatpush.msra.mxu0 0.0
    %1087 = vmatpush.msra.mxu0 0.0
    %1088 = vmatpush.msra.mxu0 0.0
    %1089 = vmatpush.msra.mxu0 0.0
    %1090 = vmatpush.msra.mxu0 0.0
    %1091 = vmatpush.msra.mxu0 0.0
    %1092 = vmatpush.msra.mxu0 0.0
    %1093 = vmatpush.msra.mxu0 0.0
    %1094 = vmatpush.msra.mxu0 0.0
    %1095 = vmatpush.msra.mxu0 0.0
    %1096 = vmatpush.msra.mxu0 %v123
    %1097 = vmatpush.msra.mxu0 %v122
    %1098 = vmatpush.msra.mxu0 %v121
    %1099 = vmatpush.msra.mxu0 %v120
    %1100 = vmatmul.f32.gmra.mxu0 %v1079
    %v1101 = vpop.f32.mrf.mxu0
    %v1102 = vadd.f32 0.0, %v1101
    %1103 = vmatmul.f32.gmra.mxu0 %v1082
    %v1104 = vpop.f32.mrf.mxu0
    %v1105 = vadd.f32 0.0, %v1104
    %1106 = vdwg.mxu0
    %v1107 = vmax.f32 %v1063, %v1102
    %v1108 = vmax.f32 %v1066, %v1105
    %v1109 = vsub.f32 %v1063, %v1107
    %v1110 = vsub.f32 %v1066, %v1108
    %v1111 = vmul.f32 %v1109, 1.442695
    %v1112 = vpow.pop %v1111
    %v1113 = vmul.f32 %v1110, 1.442695
    %v1114 = vpow.pop %v1113
    %v1115 = vsub.f32 %v1102, %v1107
    %v1116 = vsub.f32 %v1105, %v1108
    %v1117 = vmul.f32 %v1115, 1.442695
    %v1118 = vpow.pop %v1117
    %v1119 = vmul.f32 %v1116, 1.442695
    %v1120 = vpow.pop %v1119
    %v1121 = vadd.f32 %v1112, %v1118
    %v1122 = vadd.f32 %v1114, %v1120
    %v1123 = vrcp.pop %v1121
    %v1124 = vrcp.pop %v1122
    %v1125 = vmul.f32 %v1112, %v1123
    %v1126 = vmul.f32 %v1114, %v1124
    %v1128 = vsel %vm132, %v1125, 0
    %v1131 = vsel %vm132, %v1126, 0
    %1133 = vmatpush.msra.mxu0 0.0
    %1134 = vmatpush.msra.mxu0 0.0
    %1135 = vmatpush.msra.mxu0 0.0
    %1136 = vmatpush.msra.mxu0 0.0
    %1137 = vmatpush.msra.mxu0 0.0
    %1138 = vmatpush.msra.mxu0 0.0
    %1139 = vmatpush.msra.mxu0 0.0
    %1140 = vmatpush.msra.mxu0 0.0
    %1141 = vmatpush.msra.mxu0 0.0
    %1142 = vmatpush.msra.mxu0 0.0
    %1143 = vmatpush.msra.mxu0 0.0
    %1144 = vmatpush.msra.mxu0 0.0
    %1145 = vmatpush.msra.mxu0 0.0
    %1146 = vmatpush.msra.mxu0 0.0
    %1147 = vmatpush.msra.mxu0 0.0
    %1148 = vmatpush.msra.mxu0 %v372
    %1149 = vmatmul.f32.gmra.mxu0 %v1128
    %v1150 = vpop.f32.mrf.mxu0
    %v1151 = vadd.f32 0.0, %v1150
    %1152 = vmatmul.f32.gmra.mxu0 %v1131
    %v1153 = vpop.f32.mrf.mxu0
    %v1154 = vadd.f32 0.0, %v1153
    %1155 = vdwg.mxu0
    %1156 = vrot.lane.b32.xlu0 %v1018, 64
    %v1157 = vpop.permute.xlu0 %1156
    %1158 = vrot.lane.b32.xlu0 %v1021, 64
    %v1159 = vpop.permute.xlu0 %1158
    %v1162 = vmul.f32 %v1151, %v1157
    %v1163 = vmul.f32 %v1154, %v1159
    %v1164 = vmul.f32 %v1118, %v1123
    %v1165 = vmul.f32 %v1120, %v1124
    %v1167 = vsel %vm132, %v1164, 0
    %v1170 = vsel %vm132, %v1165, 0
    %1172 = vmatpush.msra.mxu0 0.0
    %1173 = vmatpush.msra.mxu0 0.0
    %1174 = vmatpush.msra.mxu0 0.0
    %1175 = vmatpush.msra.mxu0 0.0
    %1176 = vmatpush.msra.mxu0 0.0
    %1177 = vmatpush.msra.mxu0 0.0
    %1178 = vmatpush.msra.mxu0 0.0
    %1179 = vmatpush.msra.mxu0 0.0
    %1180 = vmatpush.msra.mxu0 0.0
    %1181 = vmatpush.msra.mxu0 0.0
    %1182 = vmatpush.msra.mxu0 0.0
    %1183 = vmatpush.msra.mxu0 0.0
    %1184 = vmatpush.msra.mxu0 0.0
    %1185 = vmatpush.msra.mxu0 0.0
    %1186 = vmatpush.msra.mxu0 0.0
    %1187 = vmatpush.msra.mxu0 %v372
    %1188 = vmatmul.f32.gmra.mxu0 %v1167
    %v1189 = vpop.f32.mrf.mxu0
    %v1190 = vadd.f32 0.0, %v1189
    %1191 = vmatmul.f32.gmra.mxu0 %v1170
    %v1192 = vpop.f32.mrf.mxu0
    %v1193 = vadd.f32 0.0, %v1192
    %1194 = vdwg.mxu0
    %1195 = vrot.lane.b32.xlu0 %v1024, 64
    %v1196 = vpop.permute.xlu0 %1195
    %1197 = vrot.lane.b32.xlu0 %v1027, 64
    %v1198 = vpop.permute.xlu0 %1197
    %v1201 = vmul.f32 %v1190, %v1196
    %v1202 = vmul.f32 %v1193, %v1198
    %v1203 = vadd.f32 %v1162, %v1201
    %v1204 = vadd.f32 %v1163, %v1202
    %v1205 = vmul.f32 %v1024, %v1032
    %v1206 = vmul.f32 %v1027, %v1034
    %v1208 = vsel %vm225, %v1205, 0
    %v1211 = vsel %vm225, %v1206, 0
    %1213 = vmatpush.msra.mxu0 0.0
    %1214 = vmatpush.msra.mxu0 0.0
    %1215 = vmatpush.msra.mxu0 0.0
    %1216 = vmatpush.msra.mxu0 0.0
    %1217 = vmatpush.msra.mxu0 0.0
    %1218 = vmatpush.msra.mxu0 0.0
    %1219 = vmatpush.msra.mxu0 0.0
    %1220 = vmatpush.msra.mxu0 0.0
    %1221 = vmatpush.msra.mxu0 0.0
    %1222 = vmatpush.msra.mxu0 0.0
    %1223 = vmatpush.msra.mxu0 0.0
    %1224 = vmatpush.msra.mxu0 0.0
    %1225 = vmatpush.msra.mxu0 %v123
    %1226 = vmatpush.msra.mxu0 %v122
    %1227 = vmatpush.msra.mxu0 %v121
    %1228 = vmatpush.msra.mxu0 %v120
    %1229 = vmatmul.f32.gmra.mxu0 %v1208
    %v1230 = vpop.f32.mrf.mxu0
    %v1231 = vadd.f32 0.0, %v1230
    %1232 = vmatmul.f32.gmra.mxu0 %v1211
    %v1233 = vpop.f32.mrf.mxu0
    %v1234 = vadd.f32 0.0, %v1233
    %1235 = vdwg.mxu0
    %v1236 = vmul.f32 %v1024, %v1071
    %v1237 = vmul.f32 %v1027, %v1073
    %v1239 = vsel %vm225, %v1236, 0
    %v1242 = vsel %vm225, %v1237, 0
    %1244 = vmatpush.msra.mxu0 0.0
    %1245 = vmatpush.msra.mxu0 0.0
    %1246 = vmatpush.msra.mxu0 0.0
    %1247 = vmatpush.msra.mxu0 0.0
    %1248 = vmatpush.msra.mxu0 0.0
    %1249 = vmatpush.msra.mxu0 0.0
    %1250 = vmatpush.msra.mxu0 0.0
    %1251 = vmatpush.msra.mxu0 0.0
    %1252 = vmatpush.msra.mxu0 0.0
    %1253 = vmatpush.msra.mxu0 0.0
    %1254 = vmatpush.msra.mxu0 0.0
    %1255 = vmatpush.msra.mxu0 0.0
    %1256 = vmatpush.msra.mxu0 %v123
    %1257 = vmatpush.msra.mxu0 %v122
    %1258 = vmatpush.msra.mxu0 %v121
    %1259 = vmatpush.msra.mxu0 %v120
    %1260 = vmatmul.f32.gmra.mxu0 %v1239
    %v1261 = vpop.f32.mrf.mxu0
    %v1262 = vadd.f32 0.0, %v1261
    %1263 = vmatmul.f32.gmra.mxu0 %v1242
    %v1264 = vpop.f32.mrf.mxu0
    %v1265 = vadd.f32 0.0, %v1264
    %1266 = vdwg.mxu0
    %v1267 = vmax.f32 %v1231, %v1262
    %v1268 = vmax.f32 %v1234, %v1265
    %v1269 = vsub.f32 %v1231, %v1267
    %v1270 = vsub.f32 %v1234, %v1268
    %v1271 = vmul.f32 %v1269, 1.442695
    %v1272 = vpow.pop %v1271
    %v1273 = vmul.f32 %v1270, 1.442695
    %v1274 = vpow.pop %v1273
    %v1275 = vsub.f32 %v1262, %v1267
    %v1276 = vsub.f32 %v1265, %v1268
    %v1277 = vmul.f32 %v1275, 1.442695
    %v1278 = vpow.pop %v1277
    %v1279 = vmul.f32 %v1276, 1.442695
    %v1280 = vpow.pop %v1279
    %v1281 = vadd.f32 %v1272, %v1278
    %v1282 = vadd.f32 %v1274, %v1280
    %v1283 = vrcp.pop %v1281
    %v1284 = vrcp.pop %v1282
    %v1285 = vmul.f32 %v1272, %v1283
    %v1286 = vmul.f32 %v1274, %v1284
    %v1288 = vsel %vm132, %v1285, 0
    %v1291 = vsel %vm132, %v1286, 0
    %1293 = vmatpush.msra.mxu0 0.0
    %1294 = vmatpush.msra.mxu0 0.0
    %1295 = vmatpush.msra.mxu0 0.0
    %1296 = vmatpush.msra.mxu0 0.0
    %1297 = vmatpush.msra.mxu0 0.0
    %1298 = vmatpush.msra.mxu0 0.0
    %1299 = vmatpush.msra.mxu0 0.0
    %1300 = vmatpush.msra.mxu0 0.0
    %1301 = vmatpush.msra.mxu0 0.0
    %1302 = vmatpush.msra.mxu0 0.0
    %1303 = vmatpush.msra.mxu0 0.0
    %1304 = vmatpush.msra.mxu0 0.0
    %1305 = vmatpush.msra.mxu0 0.0
    %1306 = vmatpush.msra.mxu0 0.0
    %1307 = vmatpush.msra.mxu0 0.0
    %1308 = vmatpush.msra.mxu0 %v372
    %1309 = vmatmul.f32.gmra.mxu0 %v1288
    %v1310 = vpop.f32.mrf.mxu0
    %v1311 = vadd.f32 0.0, %v1310
    %1312 = vmatmul.f32.gmra.mxu0 %v1291
    %v1313 = vpop.f32.mrf.mxu0
    %v1314 = vadd.f32 0.0, %v1313
    %1315 = vdwg.mxu0
    %v1316 = vmul.f32 %v1311, %v1157
    %v1317 = vmul.f32 %v1314, %v1159
    %v1318 = vmul.f32 %v1278, %v1283
    %v1319 = vmul.f32 %v1280, %v1284
    %v1321 = vsel %vm132, %v1318, 0
    %v1324 = vsel %vm132, %v1319, 0
    %1326 = vmatpush.msra.mxu0 0.0
    %1327 = vmatpush.msra.mxu0 0.0
    %1328 = vmatpush.msra.mxu0 0.0
    %1329 = vmatpush.msra.mxu0 0.0
    %1330 = vmatpush.msra.mxu0 0.0
    %1331 = vmatpush.msra.mxu0 0.0
    %1332 = vmatpush.msra.mxu0 0.0
    %1333 = vmatpush.msra.mxu0 0.0
    %1334 = vmatpush.msra.mxu0 0.0
    %1335 = vmatpush.msra.mxu0 0.0
    %1336 = vmatpush.msra.mxu0 0.0
    %1337 = vmatpush.msra.mxu0 0.0
    %1338 = vmatpush.msra.mxu0 0.0
    %1339 = vmatpush.msra.mxu0 0.0
    %1340 = vmatpush.msra.mxu0 0.0
    %1341 = vmatpush.msra.mxu0 %v372
    %1342 = vmatmul.f32.gmra.mxu0 %v1321
    %v1343 = vpop.f32.mrf.mxu0
    %v1344 = vadd.f32 0.0, %v1343
    %1345 = vmatmul.f32.gmra.mxu0 %v1324
    %v1346 = vpop.f32.mrf.mxu0
    %v1347 = vadd.f32 0.0, %v1346
    %1348 = vdwg.mxu0
    %v1349 = vmul.f32 %v1344, %v1196
    %v1350 = vmul.f32 %v1347, %v1198
    %v1351 = vadd.f32 %v1316, %v1349
    %v1352 = vadd.f32 %v1317, %v1350
    %v1354 = vperm.slane %v962, 0
    %v1357 = vsel %vm225, %v1203, 0
    %v1360 = vsel %vm225, %v1204, 0
    %v1363 = vsel %vm225, %v1351, 0
    %v1366 = vsel %vm225, %v1352, 0
    %1368 = vmatpush.msra.mxu0 0.0
    %1369 = vmatpush.msra.mxu0 0.0
    %1370 = vmatpush.msra.mxu0 0.0
    %1371 = vmatpush.msra.mxu0 0.0
    %1372 = vmatpush.msra.mxu0 0.0
    %1373 = vmatpush.msra.mxu0 0.0
    %1374 = vmatpush.msra.mxu0 0.0
    %1375 = vmatpush.msra.mxu0 0.0
    %1376 = vmatpush.msra.mxu0 0.0
    %1377 = vmatpush.msra.mxu0 0.0
    %1378 = vmatpush.msra.mxu0 0.0
    %1379 = vmatpush.msra.mxu0 0.0
    %1380 = vmatpush.msra.mxu0 %v960
    %1381 = vmatpush.msra.mxu0 %v959
    %1382 = vmatpush.msra.mxu0 %v958
    %1383 = vmatpush.msra.mxu0 %v957
    %1384 = vmatmul.f32.gmra.mxu0 %v1357
    %v1385 = vpop.f32.mrf.mxu0
    %v1386 = vadd.f32 %v1354, %v1385
    %1387 = vmatmul.f32.gmra.mxu0 %v1360
    %v1388 = vpop.f32.mrf.mxu0
    %v1389 = vadd.f32 %v1354, %v1388
    %1390 = vmatmul.f32.gmra.mxu0 %v1363
    %v1391 = vpop.f32.mrf.mxu0
    %v1392 = vadd.f32 %v1354, %v1391
    %1393 = vmatmul.f32.gmra.mxu0 %v1366
    %v1394 = vpop.f32.mrf.mxu0
    %v1395 = vadd.f32 %v1354, %v1394
    %1396 = vdwg.mxu0
    %v1397 = vadd.f32 %v945, %v1386
    %v1398 = vadd.f32 %v946, %v1389
    %v1399 = vadd.f32 %v947, %v1392
    %v1400 = vadd.f32 %v948, %v1395
    %v1401 = vsel %vm225, %v1397, 0.0
    %1402 = vadd.xlane.f32.xlu0 %v1401
    %v1403 = vpop.xlane.xlu0 %1402
    %v1404 = vsel %vm225, %v1398, 0.0
    %1405 = vadd.xlane.f32.xlu0 %v1404
    %v1406 = vpop.xlane.xlu0 %1405
    %v1407 = vsel %vm225, %v1399, 0.0
    %1408 = vadd.xlane.f32.xlu0 %v1407
    %v1409 = vpop.xlane.xlu0 %1408
    %v1410 = vsel %vm225, %v1400, 0.0
    %1411 = vadd.xlane.f32.xlu0 %v1410
    %v1412 = vpop.xlane.xlu0 %1411
    %v1413 = vmul.f32 %v1403, %v660
    %v1414 = vmul.f32 %v1406, %v660
    %v1415 = vmul.f32 %v1409, %v660
    %v1416 = vmul.f32 %v1412, %v660
    %v1417 = vsub.f32 %v1397, %v1413
    %v1418 = vsub.f32 %v1398, %v1414
    %v1419 = vsub.f32 %v1399, %v1415
    %v1420 = vsub.f32 %v1400, %v1416
    %v1421 = vmul.f32 %v1417, %v1417
    %v1422 = vmul.f32 %v1418, %v1418
    %v1423 = vmul.f32 %v1419, %v1419
    %v1424 = vmul.f32 %v1420, %v1420
    %v1425 = vsel %vm225, %v1421, 0.0
    %1426 = vadd.xlane.f32.xlu0 %v1425
    %v1427 = vpop.xlane.xlu0 %1426
    %v1428 = vsel %vm225, %v1422, 0.0
    %1429 = vadd.xlane.f32.xlu0 %v1428
    %v1430 = vpop.xlane.xlu0 %1429
    %v1431 = vsel %vm225, %v1423, 0.0
    %1432 = vadd.xlane.f32.xlu0 %v1431
    %v1433 = vpop.xlane.xlu0 %1432
    %v1434 = vsel %vm225, %v1424, 0.0
    %1435 = vadd.xlane.f32.xlu0 %v1434
    %v1436 = vpop.xlane.xlu0 %1435
    %v1437 = vmul.f32 %v1427, %v660
    %v1438 = vmul.f32 %v1430, %v660
    %v1439 = vmul.f32 %v1433, %v660
    %v1440 = vmul.f32 %v1436, %v660
    %v1441 = vadd.f32 %v1437, 1e-05
    %v1442 = vadd.f32 %v1438, 1e-05
    %v1443 = vadd.f32 %v1439, 1e-05
    %v1444 = vadd.f32 %v1440, 1e-05
    %v1445 = vrsqrt.pop %v1441
    %v1446 = vmul.f32 %v1445, %v1441
    %v1447 = vmul.f32 %v1446, %v1445
    %v1448 = vmul.f32 0.5, %v1447
    %v1449 = vsub.f32 1.5, %v1448
    %v1450 = vmul.f32 %v1445, %v1449
    %vm1451 = vweird.f32 %v1441
    %vm1452 = vweird.f32 %v1445
    %vm1453 = vmor %vm1451, %vm1452
    %v1454 = vsel %vm1453, %v1445, %v1450
    %v1455 = vrsqrt.pop %v1442
    %v1456 = vmul.f32 %v1455, %v1442
    %v1457 = vmul.f32 %v1456, %v1455
    %v1458 = vmul.f32 0.5, %v1457
    %v1459 = vsub.f32 1.5, %v1458
    %v1460 = vmul.f32 %v1455, %v1459
    %vm1461 = vweird.f32 %v1442
    %vm1462 = vweird.f32 %v1455
    %vm1463 = vmor %vm1461, %vm1462
    %v1464 = vsel %vm1463, %v1455, %v1460
    %v1465 = vrsqrt.pop %v1443
    %v1466 = vmul.f32 %v1465, %v1443
    %v1467 = vmul.f32 %v1466, %v1465
    %v1468 = vmul.f32 0.5, %v1467
    %v1469 = vsub.f32 1.5, %v1468
    %v1470 = vmul.f32 %v1465, %v1469
    %vm1471 = vweird.f32 %v1443
    %vm1472 = vweird.f32 %v1465
    %vm1473 = vmor %vm1471, %vm1472
    %v1474 = vsel %vm1473, %v1465, %v1470
    %v1475 = vrsqrt.pop %v1444
    %v1476 = vmul.f32 %v1475, %v1444
    %v1477 = vmul.f32 %v1476, %v1475
    %v1478 = vmul.f32 0.5, %v1477
    %v1479 = vsub.f32 1.5, %v1478
    %v1480 = vmul.f32 %v1475, %v1479
    %vm1481 = vweird.f32 %v1444
    %vm1482 = vweird.f32 %v1475
    %vm1483 = vmor %vm1481, %vm1482
    %v1484 = vsel %vm1483, %v1475, %v1480
    %v1485 = vmul.f32 %v1417, %v1454
    %v1486 = vmul.f32 %v1418, %v1464
    %v1487 = vmul.f32 %v1419, %v1474
    %v1488 = vmul.f32 %v1420, %v1484
    %v1490 = vperm.slane %v978, 0
    %v1492 = vmul.f32 %v1485, %v1490
    %v1493 = vmul.f32 %v1486, %v1490
    %v1494 = vmul.f32 %v1487, %v1490
    %v1495 = vmul.f32 %v1488, %v1490
    %v1497 = vperm.slane %v980, 0
    %v1499 = vadd.f32 %v1492, %v1497
    %v1500 = vadd.f32 %v1493, %v1497
    %v1501 = vadd.f32 %v1494, %v1497
    %v1502 = vadd.f32 %v1495, %v1497
    %v1504 = vperm.slane %v969, 0
    %v1507 = vsel %vm225, %v1499, 0
    %v1510 = vsel %vm225, %v1500, 0
    %v1513 = vsel %vm225, %v1501, 0
    %v1516 = vsel %vm225, %v1502, 0
    %1518 = vmatpush.msra.mxu0 0.0
    %1519 = vmatpush.msra.mxu0 0.0
    %1520 = vmatpush.msra.mxu0 0.0
    %1521 = vmatpush.msra.mxu0 0.0
    %1522 = vmatpush.msra.mxu0 0.0
    %1523 = vmatpush.msra.mxu0 0.0
    %1524 = vmatpush.msra.mxu0 0.0
    %1525 = vmatpush.msra.mxu0 0.0
    %1526 = vmatpush.msra.mxu0 0.0
    %1527 = vmatpush.msra.mxu0 0.0
    %1528 = vmatpush.msra.mxu0 0.0
    %1529 = vmatpush.msra.mxu0 0.0
    %1530 = vmatpush.msra.mxu0 %v967
    %1531 = vmatpush.msra.mxu0 %v966
    %1532 = vmatpush.msra.mxu0 %v965
    %1533 = vmatpush.msra.mxu0 %v964
    %1534 = vmatmul.f32.gmra.mxu0 %v1507
    %v1535 = vpop.f32.mrf.mxu0
    %v1536 = vadd.f32 %v1504, %v1535
    %1537 = vmatmul.f32.gmra.mxu0 %v1510
    %v1538 = vpop.f32.mrf.mxu0
    %v1539 = vadd.f32 %v1504, %v1538
    %1540 = vmatmul.f32.gmra.mxu0 %v1513
    %v1541 = vpop.f32.mrf.mxu0
    %v1542 = vadd.f32 %v1504, %v1541
    %1543 = vmatmul.f32.gmra.mxu0 %v1516
    %v1544 = vpop.f32.mrf.mxu0
    %v1545 = vadd.f32 %v1504, %v1544
    %1546 = vdwg.mxu0
    %v1547 = vmax.f32 %v1536, 0.0
    %v1548 = vmax.f32 %v1539, 0.0
    %v1549 = vmax.f32 %v1542, 0.0
    %v1550 = vmax.f32 %v1545, 0.0
    %v1552 = vperm.slane %v976, 0
    %v1555 = vsel %vm225, %v1547, 0
    %v1558 = vsel %vm225, %v1548, 0
    %v1561 = vsel %vm225, %v1549, 0
    %v1564 = vsel %vm225, %v1550, 0
    %1566 = vmatpush.msra.mxu0 0.0
    %1567 = vmatpush.msra.mxu0 0.0
    %1568 = vmatpush.msra.mxu0 0.0
    %1569 = vmatpush.msra.mxu0 0.0
    %1570 = vmatpush.msra.mxu0 0.0
    %1571 = vmatpush.msra.mxu0 0.0
    %1572 = vmatpush.msra.mxu0 0.0
    %1573 = vmatpush.msra.mxu0 0.0
    %1574 = vmatpush.msra.mxu0 0.0
    %1575 = vmatpush.msra.mxu0 0.0
    %1576 = vmatpush.msra.mxu0 0.0
    %1577 = vmatpush.msra.mxu0 0.0
    %1578 = vmatpush.msra.mxu0 %v974
    %1579 = vmatpush.msra.mxu0 %v973
    %1580 = vmatpush.msra.mxu0 %v972
    %1581 = vmatpush.msra.mxu0 %v971
    %1582 = vmatmul.f32.gmra.mxu0 %v1555
    %v1583 = vpop.f32.mrf.mxu0
    %v1584 = vadd.f32 %v1552, %v1583
    %1585 = vmatmul.f32.gmra.mxu0 %v1558
    %v1586 = vpop.f32.mrf.mxu0
    %v1587 = vadd.f32 %v1552, %v1586
    %1588 = vmatmul.f32.gmra.mxu0 %v1561
    %v1589 = vpop.f32.mrf.mxu0
    %v1590 = vadd.f32 %v1552, %v1589
    %1591 = vmatmul.f32.gmra.mxu0 %v1564
    %v1592 = vpop.f32.mrf.mxu0
    %v1593 = vadd.f32 %v1552, %v1592
    %1594 = vdwg.mxu0
    %v1595 = vadd.f32 %v1499, %v1584
    %v1596 = vadd.f32 %v1500, %v1587
    %v1597 = vadd.f32 %v1501, %v1590
    %v1598 = vadd.f32 %v1502, %v1593
    %v1599 = vsel %vm225, %v1595, 0.0
    %1600 = vadd.xlane.f32.xlu0 %v1599
    %v1601 = vpop.xlane.xlu0 %1600
    %v1602 = vsel %vm225, %v1596, 0.0
    %1603 = vadd.xlane.f32.xlu0 %v1602
    %v1604 = vpop.xlane.xlu0 %1603
    %v1605 = vsel %vm225, %v1597, 0.0
    %1606 = vadd.xlane.f32.xlu0 %v1605
    %v1607 = vpop.xlane.xlu0 %1606
    %v1608 = vsel %vm225, %v1598, 0.0
    %1609 = vadd.xlane.f32.xlu0 %v1608
    %v1610 = vpop.xlane.xlu0 %1609
    %v1611 = vmul.f32 %v1601, %v660
    %v1612 = vmul.f32 %v1604, %v660
    %v1613 = vmul.f32 %v1607, %v660
    %v1614 = vmul.f32 %v1610, %v660
    %v1615 = vsub.f32 %v1595, %v1611
    %v1616 = vsub.f32 %v1596, %v1612
    %v1617 = vsub.f32 %v1597, %v1613
    %v1618 = vsub.f32 %v1598, %v1614
    %v1619 = vmul.f32 %v1615, %v1615
    %v1620 = vmul.f32 %v1616, %v1616
    %v1621 = vmul.f32 %v1617, %v1617
    %v1622 = vmul.f32 %v1618, %v1618
    %v1623 = vsel %vm225, %v1619, 0.0
    %1624 = vadd.xlane.f32.xlu0 %v1623
    %v1625 = vpop.xlane.xlu0 %1624
    %v1626 = vsel %vm225, %v1620, 0.0
    %1627 = vadd.xlane.f32.xlu0 %v1626
    %v1628 = vpop.xlane.xlu0 %1627
    %v1629 = vsel %vm225, %v1621, 0.0
    %1630 = vadd.xlane.f32.xlu0 %v1629
    %v1631 = vpop.xlane.xlu0 %1630
    %v1632 = vsel %vm225, %v1622, 0.0
    %1633 = vadd.xlane.f32.xlu0 %v1632
    %v1634 = vpop.xlane.xlu0 %1633
    %v1635 = vmul.f32 %v1625, %v660
    %v1636 = vmul.f32 %v1628, %v660
    %v1637 = vmul.f32 %v1631, %v660
    %v1638 = vmul.f32 %v1634, %v660
    %v1639 = vadd.f32 %v1635, 1e-05
    %v1640 = vadd.f32 %v1636, 1e-05
    %v1641 = vadd.f32 %v1637, 1e-05
    %v1642 = vadd.f32 %v1638, 1e-05
    %v1643 = vrsqrt.pop %v1639
    %v1644 = vmul.f32 %v1643, %v1639
    %v1645 = vmul.f32 %v1644, %v1643
    %v1646 = vmul.f32 0.5, %v1645
    %v1647 = vsub.f32 1.5, %v1646
    %v1648 = vmul.f32 %v1643, %v1647
    %vm1649 = vweird.f32 %v1639
    %vm1650 = vweird.f32 %v1643
    %vm1651 = vmor %vm1649, %vm1650
    %v1652 = vsel %vm1651, %v1643, %v1648
    %v1653 = vrsqrt.pop %v1640
    %v1654 = vmul.f32 %v1653, %v1640
    %v1655 = vmul.f32 %v1654, %v1653
    %v1656 = vmul.f32 0.5, %v1655
    %v1657 = vsub.f32 1.5, %v1656
    %v1658 = vmul.f32 %v1653, %v1657
    %vm1659 = vweird.f32 %v1640
    %vm1660 = vweird.f32 %v1653
    %vm1661 = vmor %vm1659, %vm1660
    %v1662 = vsel %vm1661, %v1653, %v1658
    %v1663 = vrsqrt.pop %v1641
    %v1664 = vmul.f32 %v1663, %v1641
    %v1665 = vmul.f32 %v1664, %v1663
    %v1666 = vmul.f32 0.5, %v1665
    %v1667 = vsub.f32 1.5, %v1666
    %v1668 = vmul.f32 %v1663, %v1667
    %vm1669 = vweird.f32 %v1641
    %vm1670 = vweird.f32 %v1663
    %vm1671 = vmor %vm1669, %vm1670
    %v1672 = vsel %vm1671, %v1663, %v1668
    %v1673 = vrsqrt.pop %v1642
    %v1674 = vmul.f32 %v1673, %v1642
    %v1675 = vmul.f32 %v1674, %v1673
    %v1676 = vmul.f32 0.5, %v1675
    %v1677 = vsub.f32 1.5, %v1676
    %v1678 = vmul.f32 %v1673, %v1677
    %vm1679 = vweird.f32 %v1642
    %vm1680 = vweird.f32 %v1673
    %vm1681 = vmor %vm1679, %vm1680
    %v1682 = vsel %vm1681, %v1673, %v1678
    %v1683 = vmul.f32 %v1615, %v1652
    %v1684 = vmul.f32 %v1616, %v1662
    %v1685 = vmul.f32 %v1617, %v1672
    %v1686 = vmul.f32 %v1618, %v1682
    %v1688 = vperm.slane %v982, 0
    %v1690 = vmul.f32 %v1683, %v1688
    %v1691 = vmul.f32 %v1684, %v1688
    %v1692 = vmul.f32 %v1685, %v1688
    %v1693 = vmul.f32 %v1686, %v1688
    %v1695 = vperm.slane %v984, 0
    %v1697 = vadd.f32 %v1690, %v1695
    %v1698 = vadd.f32 %v1691, %v1695
    %v1699 = vadd.f32 %v1692, %v1695
    %v1700 = vadd.f32 %v1693, %v1695
    %s1701 = scalar_lea.vmem [#allocation2], 64
    %v1702 = vld [vmem:[%s1701] sm:$0xff]
    %v1703 = vld [vmem:[%s1701 + $0x8] sm:$0xff]
    %v1704 = vld [vmem:[%s1701 + $0x10] sm:$0xff]
    %v1705 = vld [vmem:[%s1701 + $0x18] sm:$0xff]
    %s1706 = scalar_lea.vmem %s4, 2
    %v1707 = vld [vmem:[%s1706] sm:$0x1]
    %s1708 = scalar_lea.vmem [#allocation5], 64
    %v1709 = vld [vmem:[%s1708] sm:$0xff]
    %v1710 = vld [vmem:[%s1708 + $0x8] sm:$0xff]
    %v1711 = vld [vmem:[%s1708 + $0x10] sm:$0xff]
    %v1712 = vld [vmem:[%s1708 + $0x18] sm:$0xff]
    %s1713 = scalar_lea.vmem %s6, 2
    %v1714 = vld [vmem:[%s1713] sm:$0x1]
    %s1715 = scalar_lea.vmem [#allocation7], 64
    %v1716 = vld [vmem:[%s1715] sm:$0xff]
    %v1717 = vld [vmem:[%s1715 + $0x8] sm:$0xff]
    %v1718 = vld [vmem:[%s1715 + $0x10] sm:$0xff]
    %v1719 = vld [vmem:[%s1715 + $0x18] sm:$0xff]
    %s1720 = scalar_lea.vmem %s8, 2
    %v1721 = vld [vmem:[%s1720] sm:$0x1]
    %s1722 = scalar_lea.vmem [#allocation8], 64
    %v1723 = vld [vmem:[%s1722] sm:$0xff]
    %v1724 = vld [vmem:[%s1722 + $0x8] sm:$0xff]
    %v1725 = vld [vmem:[%s1722 + $0x10] sm:$0xff]
    %v1726 = vld [vmem:[%s1722 + $0x18] sm:$0xff]
    %s1727 = scalar_lea.vmem %s10, 2
    %v1728 = vld [vmem:[%s1727] sm:$0x1]
    %s1729 = scalar_lea.vmem %s11, 2
    %v1730 = vld [vmem:[%s1729] sm:$0x1]
    %s1731 = scalar_lea.vmem %s12, 2
    %v1732 = vld [vmem:[%s1731] sm:$0x1]
    %s1733 = scalar_lea.vmem %s13, 2
    %v1734 = vld [vmem:[%s1733] sm:$0x1]
    %s1735 = scalar_lea.vmem %s14, 2
    %v1736 = vld [vmem:[%s1735] sm:$0x1]
    %v1738 = vperm.slane %v1707, 0
    %v1741 = vsel %vm225, %v1697, 0
    %v1744 = vsel %vm225, %v1698, 0
    %v1747 = vsel %vm225, %v1699, 0
    %v1750 = vsel %vm225, %v1700, 0
    %1752 = vmatpush.msra.mxu0 0.0
    %1753 = vmatpush.msra.mxu0 0.0
    %1754 = vmatpush.msra.mxu0 0.0
    %1755 = vmatpush.msra.mxu0 0.0
    %1756 = vmatpush.msra.mxu0 0.0
    %1757 = vmatpush.msra.mxu0 0.0
    %1758 = vmatpush.msra.mxu0 0.0
    %1759 = vmatpush.msra.mxu0 0.0
    %1760 = vmatpush.msra.mxu0 0.0
    %1761 = vmatpush.msra.mxu0 0.0
    %1762 = vmatpush.msra.mxu0 0.0
    %1763 = vmatpush.msra.mxu0 0.0
    %1764 = vmatpush.msra.mxu0 %v1705
    %1765 = vmatpush.msra.mxu0 %v1704
    %1766 = vmatpush.msra.mxu0 %v1703
    %1767 = vmatpush.msra.mxu0 %v1702
    %1768 = vmatmul.f32.gmra.mxu0 %v1741
    %v1769 = vpop.f32.mrf.mxu0
    %v1770 = vadd.f32 %v1738, %v1769
    %1771 = vmatmul.f32.gmra.mxu0 %v1744
    %v1772 = vpop.f32.mrf.mxu0
    %v1773 = vadd.f32 %v1738, %v1772
    %1774 = vmatmul.f32.gmra.mxu0 %v1747
    %v1775 = vpop.f32.mrf.mxu0
    %v1776 = vadd.f32 %v1738, %v1775
    %1777 = vmatmul.f32.gmra.mxu0 %v1750
    %v1778 = vpop.f32.mrf.mxu0
    %v1779 = vadd.f32 %v1738, %v1778
    %1780 = vdwg.mxu0
    %1783 = vrot.lane.b32.xlu0 %v1770, 96
    %v1784 = vpop.permute.xlu0 %1783
    %1785 = vrot.lane.b32.xlu0 %v1773, 96
    %v1786 = vpop.permute.xlu0 %1785
    %v1789 = vmul.f32 %v1770, %v1784
    %v1790 = vmul.f32 %v1773, %v1786
    %v1792 = vsel %vm225, %v1789, 0
    %v1795 = vsel %vm225, %v1790, 0
    %1797 = vmatpush.msra.mxu0 0.0
    %1798 = vmatpush.msra.mxu0 0.0
    %1799 = vmatpush.msra.mxu0 0.0
    %1800 = vmatpush.msra.mxu0 0.0
    %1801 = vmatpush.msra.mxu0 0.0
    %1802 = vmatpush.msra.mxu0 0.0
    %1803 = vmatpush.msra.mxu0 0.0
    %1804 = vmatpush.msra.mxu0 0.0
    %1805 = vmatpush.msra.mxu0 0.0
    %1806 = vmatpush.msra.mxu0 0.0
    %1807 = vmatpush.msra.mxu0 0.0
    %1808 = vmatpush.msra.mxu0 0.0
    %1809 = vmatpush.msra.mxu0 %v123
    %1810 = vmatpush.msra.mxu0 %v122
    %1811 = vmatpush.msra.mxu0 %v121
    %1812 = vmatpush.msra.mxu0 %v120
    %1813 = vmatmul.f32.gmra.mxu0 %v1792
    %v1814 = vpop.f32.mrf.mxu0
    %v1815 = vadd.f32 0.0, %v1814
    %1816 = vmatmul.f32.gmra.mxu0 %v1795
    %v1817 = vpop.f32.mrf.mxu0
    %v1818 = vadd.f32 0.0, %v1817
    %1819 = vdwg.mxu0
    %1822 = vrot.lane.b32.xlu0 %v1776, 96
    %v1823 = vpop.permute.xlu0 %1822
    %1824 = vrot.lane.b32.xlu0 %v1779, 96
    %v1825 = vpop.permute.xlu0 %1824
    %v1828 = vmul.f32 %v1770, %v1823
    %v1829 = vmul.f32 %v1773, %v1825
    %v1831 = vsel %vm225, %v1828, 0
    %v1834 = vsel %vm225, %v1829, 0
    %1836 = vmatpush.msra.mxu0 0.0
    %1837 = vmatpush.msra.mxu0 0.0
    %1838 = vmatpush.msra.mxu0 0.0
    %1839 = vmatpush.msra.mxu0 0.0
    %1840 = vmatpush.msra.mxu0 0.0
    %1841 = vmatpush.msra.mxu0 0.0
    %1842 = vmatpush.msra.mxu0 0.0
    %1843 = vmatpush.msra.mxu0 0.0
    %1844 = vmatpush.msra.mxu0 0.0
    %1845 = vmatpush.msra.mxu0 0.0
    %1846 = vmatpush.msra.mxu0 0.0
    %1847 = vmatpush.msra.mxu0 0.0
    %1848 = vmatpush.msra.mxu0 %v123
    %1849 = vmatpush.msra.mxu0 %v122
    %1850 = vmatpush.msra.mxu0 %v121
    %1851 = vmatpush.msra.mxu0 %v120
    %1852 = vmatmul.f32.gmra.mxu0 %v1831
    %v1853 = vpop.f32.mrf.mxu0
    %v1854 = vadd.f32 0.0, %v1853
    %1855 = vmatmul.f32.gmra.mxu0 %v1834
    %v1856 = vpop.f32.mrf.mxu0
    %v1857 = vadd.f32 0.0, %v1856
    %1858 = vdwg.mxu0
    %v1859 = vmax.f32 %v1815, %v1854
    %v1860 = vmax.f32 %v1818, %v1857
    %v1861 = vsub.f32 %v1815, %v1859
    %v1862 = vsub.f32 %v1818, %v1860
    %v1863 = vmul.f32 %v1861, 1.442695
    %v1864 = vpow.pop %v1863
    %v1865 = vmul.f32 %v1862, 1.442695
    %v1866 = vpow.pop %v1865
    %v1867 = vsub.f32 %v1854, %v1859
    %v1868 = vsub.f32 %v1857, %v1860
    %v1869 = vmul.f32 %v1867, 1.442695
    %v1870 = vpow.pop %v1869
    %v1871 = vmul.f32 %v1868, 1.442695
    %v1872 = vpow.pop %v1871
    %v1873 = vadd.f32 %v1864, %v1870
    %v1874 = vadd.f32 %v1866, %v1872
    %v1875 = vrcp.pop %v1873
    %v1876 = vrcp.pop %v1874
    %v1877 = vmul.f32 %v1864, %v1875
    %v1878 = vmul.f32 %v1866, %v1876
    %v1880 = vsel %vm132, %v1877, 0
    %v1883 = vsel %vm132, %v1878, 0
    %1885 = vmatpush.msra.mxu0 0.0
    %1886 = vmatpush.msra.mxu0 0.0
    %1887 = vmatpush.msra.mxu0 0.0
    %1888 = vmatpush.msra.mxu0 0.0
    %1889 = vmatpush.msra.mxu0 0.0
    %1890 = vmatpush.msra.mxu0 0.0
    %1891 = vmatpush.msra.mxu0 0.0
    %1892 = vmatpush.msra.mxu0 0.0
    %1893 = vmatpush.msra.mxu0 0.0
    %1894 = vmatpush.msra.mxu0 0.0
    %1895 = vmatpush.msra.mxu0 0.0
    %1896 = vmatpush.msra.mxu0 0.0
    %1897 = vmatpush.msra.mxu0 0.0
    %1898 = vmatpush.msra.mxu0 0.0
    %1899 = vmatpush.msra.mxu0 0.0
    %1900 = vmatpush.msra.mxu0 %v372
    %1901 = vmatmul.f32.gmra.mxu0 %v1880
    %v1902 = vpop.f32.mrf.mxu0
    %v1903 = vadd.f32 0.0, %v1902
    %1904 = vmatmul.f32.gmra.mxu0 %v1883
    %v1905 = vpop.f32.mrf.mxu0
    %v1906 = vadd.f32 0.0, %v1905
    %1907 = vdwg.mxu0
    %1908 = vrot.lane.b32.xlu0 %v1770, 64
    %v1909 = vpop.permute.xlu0 %1908
    %1910 = vrot.lane.b32.xlu0 %v1773, 64
    %v1911 = vpop.permute.xlu0 %1910
    %v1914 = vmul.f32 %v1903, %v1909
    %v1915 = vmul.f32 %v1906, %v1911
    %v1916 = vmul.f32 %v1870, %v1875
    %v1917 = vmul.f32 %v1872, %v1876
    %v1919 = vsel %vm132, %v1916, 0
    %v1922 = vsel %vm132, %v1917, 0
    %1924 = vmatpush.msra.mxu0 0.0
    %1925 = vmatpush.msra.mxu0 0.0
    %1926 = vmatpush.msra.mxu0 0.0
    %1927 = vmatpush.msra.mxu0 0.0
    %1928 = vmatpush.msra.mxu0 0.0
    %1929 = vmatpush.msra.mxu0 0.0
    %1930 = vmatpush.msra.mxu0 0.0
    %1931 = vmatpush.msra.mxu0 0.0
    %1932 = vmatpush.msra.mxu0 0.0
    %1933 = vmatpush.msra.mxu0 0.0
    %1934 = vmatpush.msra.mxu0 0.0
    %1935 = vmatpush.msra.mxu0 0.0
    %1936 = vmatpush.msra.mxu0 0.0
    %1937 = vmatpush.msra.mxu0 0.0
    %1938 = vmatpush.msra.mxu0 0.0
    %1939 = vmatpush.msra.mxu0 %v372
    %1940 = vmatmul.f32.gmra.mxu0 %v1919
    %v1941 = vpop.f32.mrf.mxu0
    %v1942 = vadd.f32 0.0, %v1941
    %1943 = vmatmul.f32.gmra.mxu0 %v1922
    %v1944 = vpop.f32.mrf.mxu0
    %v1945 = vadd.f32 0.0, %v1944
    %1946 = vdwg.mxu0
    %1947 = vrot.lane.b32.xlu0 %v1776, 64
    %v1948 = vpop.permute.xlu0 %1947
    %1949 = vrot.lane.b32.xlu0 %v1779, 64
    %v1950 = vpop.permute.xlu0 %1949
    %v1953 = vmul.f32 %v1942, %v1948
    %v1954 = vmul.f32 %v1945, %v1950
    %v1955 = vadd.f32 %v1914, %v1953
    %v1956 = vadd.f32 %v1915, %v1954
    %v1957 = vmul.f32 %v1776, %v1784
    %v1958 = vmul.f32 %v1779, %v1786
    %v1960 = vsel %vm225, %v1957, 0
    %v1963 = vsel %vm225, %v1958, 0
    %1965 = vmatpush.msra.mxu0 0.0
    %1966 = vmatpush.msra.mxu0 0.0
    %1967 = vmatpush.msra.mxu0 0.0
    %1968 = vmatpush.msra.mxu0 0.0
    %1969 = vmatpush.msra.mxu0 0.0
    %1970 = vmatpush.msra.mxu0 0.0
    %1971 = vmatpush.msra.mxu0 0.0
    %1972 = vmatpush.msra.mxu0 0.0
    %1973 = vmatpush.msra.mxu0 0.0
    %1974 = vmatpush.msra.mxu0 0.0
    %1975 = vmatpush.msra.mxu0 0.0
    %1976 = vmatpush.msra.mxu0 0.0
    %1977 = vmatpush.msra.mxu0 %v123
    %1978 = vmatpush.msra.mxu0 %v122
    %1979 = vmatpush.msra.mxu0 %v121
    %1980 = vmatpush.msra.mxu0 %v120
    %1981 = vmatmul.f32.gmra.mxu0 %v1960
    %v1982 = vpop.f32.mrf.mxu0
    %v1983 = vadd.f32 0.0, %v1982
    %1984 = vmatmul.f32.gmra.mxu0 %v1963
    %v1985 = vpop.f32.mrf.mxu0
    %v1986 = vadd.f32 0.0, %v1985
    %1987 = vdwg.mxu0
    %v1988 = vmul.f32 %v1776, %v1823
    %v1989 = vmul.f32 %v1779, %v1825
    %v1991 = vsel %vm225, %v1988, 0
    %v1994 = vsel %vm225, %v1989, 0
    %1996 = vmatpush.msra.mxu0 0.0
    %1997 = vmatpush.msra.mxu0 0.0
    %1998 = vmatpush.msra.mxu0 0.0
    %1999 = vmatpush.msra.mxu0 0.0
    %2000 = vmatpush.msra.mxu0 0.0
    %2001 = vmatpush.msra.mxu0 0.0
    %2002 = vmatpush.msra.mxu0 0.0
    %2003 = vmatpush.msra.mxu0 0.0
    %2004 = vmatpush.msra.mxu0 0.0
    %2005 = vmatpush.msra.mxu0 0.0
    %2006 = vmatpush.msra.mxu0 0.0
    %2007 = vmatpush.msra.mxu0 0.0
    %2008 = vmatpush.msra.mxu0 %v123
    %2009 = vmatpush.msra.mxu0 %v122
    %2010 = vmatpush.msra.mxu0 %v121
    %2011 = vmatpush.msra.mxu0 %v120
    %2012 = vmatmul.f32.gmra.mxu0 %v1991
    %v2013 = vpop.f32.mrf.mxu0
    %v2014 = vadd.f32 0.0, %v2013
    %2015 = vmatmul.f32.gmra.mxu0 %v1994
    %v2016 = vpop.f32.mrf.mxu0
    %v2017 = vadd.f32 0.0, %v2016
    %2018 = vdwg.mxu0
    %v2019 = vmax.f32 %v1983, %v2014
    %v2020 = vmax.f32 %v1986, %v2017
    %v2021 = vsub.f32 %v1983, %v2019
    %v2022 = vsub.f32 %v1986, %v2020
    %v2023 = vmul.f32 %v2021, 1.442695
    %v2024 = vpow.pop %v2023
    %v2025 = vmul.f32 %v2022, 1.442695
    %v2026 = vpow.pop %v2025
    %v2027 = vsub.f32 %v2014, %v2019
    %v2028 = vsub.f32 %v2017, %v2020
    %v2029 = vmul.f32 %v2027, 1.442695
    %v2030 = vpow.pop %v2029
    %v2031 = vmul.f32 %v2028, 1.442695
    %v2032 = vpow.pop %v2031
    %v2033 = vadd.f32 %v2024, %v2030
    %v2034 = vadd.f32 %v2026, %v2032
    %v2035 = vrcp.pop %v2033
    %v2036 = vrcp.pop %v2034
    %v2037 = vmul.f32 %v2024, %v2035
    %v2038 = vmul.f32 %v2026, %v2036
    %v2040 = vsel %vm132, %v2037, 0
    %v2043 = vsel %vm132, %v2038, 0
    %2045 = vmatpush.msra.mxu0 0.0
    %2046 = vmatpush.msra.mxu0 0.0
    %2047 = vmatpush.msra.mxu0 0.0
    %2048 = vmatpush.msra.mxu0 0.0
    %2049 = vmatpush.msra.mxu0 0.0
    %2050 = vmatpush.msra.mxu0 0.0
    %2051 = vmatpush.msra.mxu0 0.0
    %2052 = vmatpush.msra.mxu0 0.0
    %2053 = vmatpush.msra.mxu0 0.0
    %2054 = vmatpush.msra.mxu0 0.0
    %2055 = vmatpush.msra.mxu0 0.0
    %2056 = vmatpush.msra.mxu0 0.0
    %2057 = vmatpush.msra.mxu0 0.0
    %2058 = vmatpush.msra.mxu0 0.0
    %2059 = vmatpush.msra.mxu0 0.0
    %2060 = vmatpush.msra.mxu0 %v372
    %2061 = vmatmul.f32.gmra.mxu0 %v2040
    %v2062 = vpop.f32.mrf.mxu0
    %v2063 = vadd.f32 0.0, %v2062
    %2064 = vmatmul.f32.gmra.mxu0 %v2043
    %v2065 = vpop.f32.mrf.mxu0
    %v2066 = vadd.f32 0.0, %v2065
    %2067 = vdwg.mxu0
    %v2068 = vmul.f32 %v2063, %v1909
    %v2069 = vmul.f32 %v2066, %v1911
    %v2070 = vmul.f32 %v2030, %v2035
    %v2071 = vmul.f32 %v2032, %v2036
    %v2073 = vsel %vm132, %v2070, 0
    %v2076 = vsel %vm132, %v2071, 0
    %2078 = vmatpush.msra.mxu0 0.0
    %2079 = vmatpush.msra.mxu0 0.0
    %2080 = vmatpush.msra.mxu0 0.0
    %2081 = vmatpush.msra.mxu0 0.0
    %2082 = vmatpush.msra.mxu0 0.0
    %2083 = vmatpush.msra.mxu0 0.0
    %2084 = vmatpush.msra.mxu0 0.0
    %2085 = vmatpush.msra.mxu0 0.0
    %2086 = vmatpush.msra.mxu0 0.0
    %2087 = vmatpush.msra.mxu0 0.0
    %2088 = vmatpush.msra.mxu0 0.0
    %2089 = vmatpush.msra.mxu0 0.0
    %2090 = vmatpush.msra.mxu0 0.0
    %2091 = vmatpush.msra.mxu0 0.0
    %2092 = vmatpush.msra.mxu0 0.0
    %2093 = vmatpush.msra.mxu0 %v372
    %2094 = vmatmul.f32.gmra.mxu0 %v2073
    %v2095 = vpop.f32.mrf.mxu0
    %v2096 = vadd.f32 0.0, %v2095
    %2097 = vmatmul.f32.gmra.mxu0 %v2076
    %v2098 = vpop.f32.mrf.mxu0
    %v2099 = vadd.f32 0.0, %v2098
    %2100 = vdwg.mxu0
    %v2101 = vmul.f32 %v2096, %v1948
    %v2102 = vmul.f32 %v2099, %v1950
    %v2103 = vadd.f32 %v2068, %v2101
    %v2104 = vadd.f32 %v2069, %v2102
    %v2106 = vperm.slane %v1714, 0
    %v2109 = vsel %vm225, %v1955, 0
    %v2112 = vsel %vm225, %v1956, 0
    %v2115 = vsel %vm225, %v2103, 0
    %v2118 = vsel %vm225, %v2104, 0
    %2120 = vmatpush.msra.mxu0 0.0
    %2121 = vmatpush.msra.mxu0 0.0
    %2122 = vmatpush.msra.mxu0 0.0
    %2123 = vmatpush.msra.mxu0 0.0
    %2124 = vmatpush.msra.mxu0 0.0
    %2125 = vmatpush.msra.mxu0 0.0
    %2126 = vmatpush.msra.mxu0 0.0
    %2127 = vmatpush.msra.mxu0 0.0
    %2128 = vmatpush.msra.mxu0 0.0
    %2129 = vmatpush.msra.mxu0 0.0
    %2130 = vmatpush.msra.mxu0 0.0
    %2131 = vmatpush.msra.mxu0 0.0
    %2132 = vmatpush.msra.mxu0 %v1712
    %2133 = vmatpush.msra.mxu0 %v1711
    %2134 = vmatpush.msra.mxu0 %v1710
    %2135 = vmatpush.msra.mxu0 %v1709
    %2136 = vmatmul.f32.gmra.mxu0 %v2109
    %v2137 = vpop.f32.mrf.mxu0
    %v2138 = vadd.f32 %v2106, %v2137
    %2139 = vmatmul.f32.gmra.mxu0 %v2112
    %v2140 = vpop.f32.mrf.mxu0
    %v2141 = vadd.f32 %v2106, %v2140
    %2142 = vmatmul.f32.gmra.mxu0 %v2115
    %v2143 = vpop.f32.mrf.mxu0
    %v2144 = vadd.f32 %v2106, %v2143
    %2145 = vmatmul.f32.gmra.mxu0 %v2118
    %v2146 = vpop.f32.mrf.mxu0
    %v2147 = vadd.f32 %v2106, %v2146
    %2148 = vdwg.mxu0
    %v2149 = vadd.f32 %v1697, %v2138
    %v2150 = vadd.f32 %v1698, %v2141
    %v2151 = vadd.f32 %v1699, %v2144
    %v2152 = vadd.f32 %v1700, %v2147
    %v2153 = vsel %vm225, %v2149, 0.0
    %2154 = vadd.xlane.f32.xlu0 %v2153
    %v2155 = vpop.xlane.xlu0 %2154
    %v2156 = vsel %vm225, %v2150, 0.0
    %2157 = vadd.xlane.f32.xlu0 %v2156
    %v2158 = vpop.xlane.xlu0 %2157
    %v2159 = vsel %vm225, %v2151, 0.0
    %2160 = vadd.xlane.f32.xlu0 %v2159
    %v2161 = vpop.xlane.xlu0 %2160
    %v2162 = vsel %vm225, %v2152, 0.0
    %2163 = vadd.xlane.f32.xlu0 %v2162
    %v2164 = vpop.xlane.xlu0 %2163
    %v2165 = vmul.f32 %v2155, %v660
    %v2166 = vmul.f32 %v2158, %v660
    %v2167 = vmul.f32 %v2161, %v660
    %v2168 = vmul.f32 %v2164, %v660
    %v2169 = vsub.f32 %v2149, %v2165
    %v2170 = vsub.f32 %v2150, %v2166
    %v2171 = vsub.f32 %v2151, %v2167
    %v2172 = vsub.f32 %v2152, %v2168
    %v2173 = vmul.f32 %v2169, %v2169
    %v2174 = vmul.f32 %v2170, %v2170
    %v2175 = vmul.f32 %v2171, %v2171
    %v2176 = vmul.f32 %v2172, %v2172
    %v2177 = vsel %vm225, %v2173, 0.0
    %2178 = vadd.xlane.f32.xlu0 %v2177
    %v2179 = vpop.xlane.xlu0 %2178
    %v2180 = vsel %vm225, %v2174, 0.0
    %2181 = vadd.xlane.f32.xlu0 %v2180
    %v2182 = vpop.xlane.xlu0 %2181
    %v2183 = vsel %vm225, %v2175, 0.0
    %2184 = vadd.xlane.f32.xlu0 %v2183
    %v2185 = vpop.xlane.xlu0 %2184
    %v2186 = vsel %vm225, %v2176, 0.0
    %2187 = vadd.xlane.f32.xlu0 %v2186
    %v2188 = vpop.xlane.xlu0 %2187
    %v2189 = vmul.f32 %v2179, %v660
    %v2190 = vmul.f32 %v2182, %v660
    %v2191 = vmul.f32 %v2185, %v660
    %v2192 = vmul.f32 %v2188, %v660
    %v2193 = vadd.f32 %v2189, 1e-05
    %v2194 = vadd.f32 %v2190, 1e-05
    %v2195 = vadd.f32 %v2191, 1e-05
    %v2196 = vadd.f32 %v2192, 1e-05
    %v2197 = vrsqrt.pop %v2193
    %v2198 = vmul.f32 %v2197, %v2193
    %v2199 = vmul.f32 %v2198, %v2197
    %v2200 = vmul.f32 0.5, %v2199
    %v2201 = vsub.f32 1.5, %v2200
    %v2202 = vmul.f32 %v2197, %v2201
    %vm2203 = vweird.f32 %v2193
    %vm2204 = vweird.f32 %v2197
    %vm2205 = vmor %vm2203, %vm2204
    %v2206 = vsel %vm2205, %v2197, %v2202
    %v2207 = vrsqrt.pop %v2194
    %v2208 = vmul.f32 %v2207, %v2194
    %v2209 = vmul.f32 %v2208, %v2207
    %v2210 = vmul.f32 0.5, %v2209
    %v2211 = vsub.f32 1.5, %v2210
    %v2212 = vmul.f32 %v2207, %v2211
    %vm2213 = vweird.f32 %v2194
    %vm2214 = vweird.f32 %v2207
    %vm2215 = vmor %vm2213, %vm2214
    %v2216 = vsel %vm2215, %v2207, %v2212
    %v2217 = vrsqrt.pop %v2195
    %v2218 = vmul.f32 %v2217, %v2195
    %v2219 = vmul.f32 %v2218, %v2217
    %v2220 = vmul.f32 0.5, %v2219
    %v2221 = vsub.f32 1.5, %v2220
    %v2222 = vmul.f32 %v2217, %v2221
    %vm2223 = vweird.f32 %v2195
    %vm2224 = vweird.f32 %v2217
    %vm2225 = vmor %vm2223, %vm2224
    %v2226 = vsel %vm2225, %v2217, %v2222
    %v2227 = vrsqrt.pop %v2196
    %v2228 = vmul.f32 %v2227, %v2196
    %v2229 = vmul.f32 %v2228, %v2227
    %v2230 = vmul.f32 0.5, %v2229
    %v2231 = vsub.f32 1.5, %v2230
    %v2232 = vmul.f32 %v2227, %v2231
    %vm2233 = vweird.f32 %v2196
    %vm2234 = vweird.f32 %v2227
    %vm2235 = vmor %vm2233, %vm2234
    %v2236 = vsel %vm2235, %v2227, %v2232
    %v2237 = vmul.f32 %v2169, %v2206
    %v2238 = vmul.f32 %v2170, %v2216
    %v2239 = vmul.f32 %v2171, %v2226
    %v2240 = vmul.f32 %v2172, %v2236
    %v2242 = vperm.slane %v1730, 0
    %v2244 = vmul.f32 %v2237, %v2242
    %v2245 = vmul.f32 %v2238, %v2242
    %v2246 = vmul.f32 %v2239, %v2242
    %v2247 = vmul.f32 %v2240, %v2242
    %v2249 = vperm.slane %v1732, 0
    %v2251 = vadd.f32 %v2244, %v2249
    %v2252 = vadd.f32 %v2245, %v2249
    %v2253 = vadd.f32 %v2246, %v2249
    %v2254 = vadd.f32 %v2247, %v2249
    %v2256 = vperm.slane %v1721, 0
    %v2259 = vsel %vm225, %v2251, 0
    %v2262 = vsel %vm225, %v2252, 0
    %v2265 = vsel %vm225, %v2253, 0
    %v2268 = vsel %vm225, %v2254, 0
    %2270 = vmatpush.msra.mxu0 0.0
    %2271 = vmatpush.msra.mxu0 0.0
    %2272 = vmatpush.msra.mxu0 0.0
    %2273 = vmatpush.msra.mxu0 0.0
    %2274 = vmatpush.msra.mxu0 0.0
    %2275 = vmatpush.msra.mxu0 0.0
    %2276 = vmatpush.msra.mxu0 0.0
    %2277 = vmatpush.msra.mxu0 0.0
    %2278 = vmatpush.msra.mxu0 0.0
    %2279 = vmatpush.msra.mxu0 0.0
    %2280 = vmatpush.msra.mxu0 0.0
    %2281 = vmatpush.msra.mxu0 0.0
    %2282 = vmatpush.msra.mxu0 %v1719
    %2283 = vmatpush.msra.mxu0 %v1718
    %2284 = vmatpush.msra.mxu0 %v1717
    %2285 = vmatpush.msra.mxu0 %v1716
    %2286 = vmatmul.f32.gmra.mxu0 %v2259
    %v2287 = vpop.f32.mrf.mxu0
    %v2288 = vadd.f32 %v2256, %v2287
    %2289 = vmatmul.f32.gmra.mxu0 %v2262
    %v2290 = vpop.f32.mrf.mxu0
    %v2291 = vadd.f32 %v2256, %v2290
    %2292 = vmatmul.f32.gmra.mxu0 %v2265
    %v2293 = vpop.f32.mrf.mxu0
    %v2294 = vadd.f32 %v2256, %v2293
    %2295 = vmatmul.f32.gmra.mxu0 %v2268
    %v2296 = vpop.f32.mrf.mxu0
    %v2297 = vadd.f32 %v2256, %v2296
    %2298 = vdwg.mxu0
    %v2299 = vmax.f32 %v2288, 0.0
    %v2300 = vmax.f32 %v2291, 0.0
    %v2301 = vmax.f32 %v2294, 0.0
    %v2302 = vmax.f32 %v2297, 0.0
    %v2304 = vperm.slane %v1728, 0
    %v2307 = vsel %vm225, %v2299, 0
    %v2310 = vsel %vm225, %v2300, 0
    %v2313 = vsel %vm225, %v2301, 0
    %v2316 = vsel %vm225, %v2302, 0
    %2318 = vmatpush.msra.mxu0 0.0
    %2319 = vmatpush.msra.mxu0 0.0
    %2320 = vmatpush.msra.mxu0 0.0
    %2321 = vmatpush.msra.mxu0 0.0
    %2322 = vmatpush.msra.mxu0 0.0
    %2323 = vmatpush.msra.mxu0 0.0
    %2324 = vmatpush.msra.mxu0 0.0
    %2325 = vmatpush.msra.mxu0 0.0
    %2326 = vmatpush.msra.mxu0 0.0
    %2327 = vmatpush.msra.mxu0 0.0
    %2328 = vmatpush.msra.mxu0 0.0
    %2329 = vmatpush.msra.mxu0 0.0
    %2330 = vmatpush.msra.mxu0 %v1726
    %2331 = vmatpush.msra.mxu0 %v1725
    %2332 = vmatpush.msra.mxu0 %v1724
    %2333 = vmatpush.msra.mxu0 %v1723
    %2334 = vmatmul.f32.gmra.mxu0 %v2307
    %v2335 = vpop.f32.mrf.mxu0
    %v2336 = vadd.f32 %v2304, %v2335
    %2337 = vmatmul.f32.gmra.mxu0 %v2310
    %v2338 = vpop.f32.mrf.mxu0
    %v2339 = vadd.f32 %v2304, %v2338
    %2340 = vmatmul.f32.gmra.mxu0 %v2313
    %v2341 = vpop.f32.mrf.mxu0
    %v2342 = vadd.f32 %v2304, %v2341
    %2343 = vmatmul.f32.gmra.mxu0 %v2316
    %v2344 = vpop.f32.mrf.mxu0
    %v2345 = vadd.f32 %v2304, %v2344
    %2346 = vdwg.mxu0
    %v2347 = vadd.f32 %v2251, %v2336
    %v2348 = vadd.f32 %v2252, %v2339
    %v2349 = vadd.f32 %v2253, %v2342
    %v2350 = vadd.f32 %v2254, %v2345
    %v2351 = vsel %vm225, %v2347, 0.0
    %2352 = vadd.xlane.f32.xlu0 %v2351
    %v2353 = vpop.xlane.xlu0 %2352
    %v2354 = vsel %vm225, %v2348, 0.0
    %2355 = vadd.xlane.f32.xlu0 %v2354
    %v2356 = vpop.xlane.xlu0 %2355
    %v2357 = vsel %vm225, %v2349, 0.0
    %2358 = vadd.xlane.f32.xlu0 %v2357
    %v2359 = vpop.xlane.xlu0 %2358
    %v2360 = vsel %vm225, %v2350, 0.0
    %2361 = vadd.xlane.f32.xlu0 %v2360
    %v2362 = vpop.xlane.xlu0 %2361
    %v2363 = vmul.f32 %v2353, %v660
    %v2364 = vmul.f32 %v2356, %v660
    %v2365 = vmul.f32 %v2359, %v660
    %v2366 = vmul.f32 %v2362, %v660
    %v2367 = vsub.f32 %v2347, %v2363
    %v2368 = vsub.f32 %v2348, %v2364
    %v2369 = vsub.f32 %v2349, %v2365
    %v2370 = vsub.f32 %v2350, %v2366
    %v2371 = vmul.f32 %v2367, %v2367
    %v2372 = vmul.f32 %v2368, %v2368
    %v2373 = vmul.f32 %v2369, %v2369
    %v2374 = vmul.f32 %v2370, %v2370
    %v2375 = vsel %vm225, %v2371, 0.0
    %2376 = vadd.xlane.f32.xlu0 %v2375
    %v2377 = vpop.xlane.xlu0 %2376
    %v2378 = vsel %vm225, %v2372, 0.0
    %2379 = vadd.xlane.f32.xlu0 %v2378
    %v2380 = vpop.xlane.xlu0 %2379
    %v2381 = vsel %vm225, %v2373, 0.0
    %2382 = vadd.xlane.f32.xlu0 %v2381
    %v2383 = vpop.xlane.xlu0 %2382
    %v2384 = vsel %vm225, %v2374, 0.0
    %2385 = vadd.xlane.f32.xlu0 %v2384
    %v2386 = vpop.xlane.xlu0 %2385
    %v2387 = vmul.f32 %v2377, %v660
    %v2388 = vmul.f32 %v2380, %v660
    %v2389 = vmul.f32 %v2383, %v660
    %v2390 = vmul.f32 %v2386, %v660
    %v2391 = vadd.f32 %v2387, 1e-05
    %v2392 = vadd.f32 %v2388, 1e-05
    %v2393 = vadd.f32 %v2389, 1e-05
    %v2394 = vadd.f32 %v2390, 1e-05
    %v2395 = vrsqrt.pop %v2391
    %v2396 = vmul.f32 %v2395, %v2391
    %v2397 = vmul.f32 %v2396, %v2395
    %v2398 = vmul.f32 0.5, %v2397
    %v2399 = vsub.f32 1.5, %v2398
    %v2400 = vmul.f32 %v2395, %v2399
    %vm2401 = vweird.f32 %v2391
    %vm2402 = vweird.f32 %v2395
    %vm2403 = vmor %vm2401, %vm2402
    %v2404 = vsel %vm2403, %v2395, %v2400
    %v2405 = vrsqrt.pop %v2392
    %v2406 = vmul.f32 %v2405, %v2392
    %v2407 = vmul.f32 %v2406, %v2405
    %v2408 = vmul.f32 0.5, %v2407
    %v2409 = vsub.f32 1.5, %v2408
    %v2410 = vmul.f32 %v2405, %v2409
    %vm2411 = vweird.f32 %v2392
    %vm2412 = vweird.f32 %v2405
    %vm2413 = vmor %vm2411, %vm2412
    %v2414 = vsel %vm2413, %v2405, %v2410
    %v2415 = vrsqrt.pop %v2393
    %v2416 = vmul.f32 %v2415, %v2393
    %v2417 = vmul.f32 %v2416, %v2415
    %v2418 = vmul.f32 0.5, %v2417
    %v2419 = vsub.f32 1.5, %v2418
    %v2420 = vmul.f32 %v2415, %v2419
    %vm2421 = vweird.f32 %v2393
    %vm2422 = vweird.f32 %v2415
    %vm2423 = vmor %vm2421, %vm2422
    %v2424 = vsel %vm2423, %v2415, %v2420
    %v2425 = vrsqrt.pop %v2394
    %v2426 = vmul.f32 %v2425, %v2394
    %v2427 = vmul.f32 %v2426, %v2425
    %v2428 = vmul.f32 0.5, %v2427
    %v2429 = vsub.f32 1.5, %v2428
    %v2430 = vmul.f32 %v2425, %v2429
    %vm2431 = vweird.f32 %v2394
    %vm2432 = vweird.f32 %v2425
    %vm2433 = vmor %vm2431, %vm2432
    %v2434 = vsel %vm2433, %v2425, %v2430
    %v2435 = vmul.f32 %v2367, %v2404
    %v2436 = vmul.f32 %v2368, %v2414
    %v2437 = vmul.f32 %v2369, %v2424
    %v2438 = vmul.f32 %v2370, %v2434
    %v2440 = vperm.slane %v1734, 0
    %v2442 = vmul.f32 %v2435, %v2440
    %v2443 = vmul.f32 %v2436, %v2440
    %v2444 = vmul.f32 %v2437, %v2440
    %v2445 = vmul.f32 %v2438, %v2440
    %v2447 = vperm.slane %v1736, 0
    %v2449 = vadd.f32 %v2442, %v2447
    %v2450 = vadd.f32 %v2443, %v2447
    %v2451 = vadd.f32 %v2444, %v2447
    %v2452 = vadd.f32 %v2445, %v2447
    %s2453 = scalar_lea.vmem [#allocation2], 96
    %v2454 = vld [vmem:[%s2453] sm:$0xff]
    %v2455 = vld [vmem:[%s2453 + $0x8] sm:$0xff]
    %v2456 = vld [vmem:[%s2453 + $0x10] sm:$0xff]
    %v2457 = vld [vmem:[%s2453 + $0x18] sm:$0xff]
    %s2458 = scalar_lea.vmem %s4, 3
    %v2459 = vld [vmem:[%s2458] sm:$0x1]
    %s2460 = scalar_lea.vmem [#allocation5], 96
    %v2461 = vld [vmem:[%s2460] sm:$0xff]
    %v2462 = vld [vmem:[%s2460 + $0x8] sm:$0xff]
    %v2463 = vld [vmem:[%s2460 + $0x10] sm:$0xff]
    %v2464 = vld [vmem:[%s2460 + $0x18] sm:$0xff]
    %s2465 = scalar_lea.vmem %s6, 3
    %v2466 = vld [vmem:[%s2465] sm:$0x1]
    %s2467 = scalar_lea.vmem [#allocation7], 96
    %v2468 = vld [vmem:[%s2467] sm:$0xff]
    %v2469 = vld [vmem:[%s2467 + $0x8] sm:$0xff]
    %v2470 = vld [vmem:[%s2467 + $0x10] sm:$0xff]
    %v2471 = vld [vmem:[%s2467 + $0x18] sm:$0xff]
    %s2472 = scalar_lea.vmem %s8, 3
    %v2473 = vld [vmem:[%s2472] sm:$0x1]
    %s2474 = scalar_lea.vmem [#allocation8], 96
    %v2475 = vld [vmem:[%s2474] sm:$0xff]
    %v2476 = vld [vmem:[%s2474 + $0x8] sm:$0xff]
    %v2477 = vld [vmem:[%s2474 + $0x10] sm:$0xff]
    %v2478 = vld [vmem:[%s2474 + $0x18] sm:$0xff]
    %s2479 = scalar_lea.vmem %s10, 3
    %v2480 = vld [vmem:[%s2479] sm:$0x1]
    %s2481 = scalar_lea.vmem %s11, 3
    %v2482 = vld [vmem:[%s2481] sm:$0x1]
    %s2483 = scalar_lea.vmem %s12, 3
    %v2484 = vld [vmem:[%s2483] sm:$0x1]
    %s2485 = scalar_lea.vmem %s13, 3
    %v2486 = vld [vmem:[%s2485] sm:$0x1]
    %s2487 = scalar_lea.vmem %s14, 3
    %v2488 = vld [vmem:[%s2487] sm:$0x1]
    %v2490 = vperm.slane %v2459, 0
    %v2493 = vsel %vm225, %v2449, 0
    %v2496 = vsel %vm225, %v2450, 0
    %v2499 = vsel %vm225, %v2451, 0
    %v2502 = vsel %vm225, %v2452, 0
    %2504 = vmatpush.msra.mxu0 0.0
    %2505 = vmatpush.msra.mxu0 0.0
    %2506 = vmatpush.msra.mxu0 0.0
    %2507 = vmatpush.msra.mxu0 0.0
    %2508 = vmatpush.msra.mxu0 0.0
    %2509 = vmatpush.msra.mxu0 0.0
    %2510 = vmatpush.msra.mxu0 0.0
    %2511 = vmatpush.msra.mxu0 0.0
    %2512 = vmatpush.msra.mxu0 0.0
    %2513 = vmatpush.msra.mxu0 0.0
    %2514 = vmatpush.msra.mxu0 0.0
    %2515 = vmatpush.msra.mxu0 0.0
    %2516 = vmatpush.msra.mxu0 %v2457
    %2517 = vmatpush.msra.mxu0 %v2456
    %2518 = vmatpush.msra.mxu0 %v2455
    %2519 = vmatpush.msra.mxu0 %v2454
    %2520 = vmatmul.f32.gmra.mxu0 %v2493
    %v2521 = vpop.f32.mrf.mxu0
    %v2522 = vadd.f32 %v2490, %v2521
    %2523 = vmatmul.f32.gmra.mxu0 %v2496
    %v2524 = vpop.f32.mrf.mxu0
    %v2525 = vadd.f32 %v2490, %v2524
    %2526 = vmatmul.f32.gmra.mxu0 %v2499
    %v2527 = vpop.f32.mrf.mxu0
    %v2528 = vadd.f32 %v2490, %v2527
    %2529 = vmatmul.f32.gmra.mxu0 %v2502
    %v2530 = vpop.f32.mrf.mxu0
    %v2531 = vadd.f32 %v2490, %v2530
    %2532 = vdwg.mxu0
    %2535 = vrot.lane.b32.xlu0 %v2522, 96
    %v2536 = vpop.permute.xlu0 %2535
    %2537 = vrot.lane.b32.xlu0 %v2525, 96
    %v2538 = vpop.permute.xlu0 %2537
    %v2541 = vmul.f32 %v2522, %v2536
    %v2542 = vmul.f32 %v2525, %v2538
    %v2544 = vsel %vm225, %v2541, 0
    %v2547 = vsel %vm225, %v2542, 0
    %2549 = vmatpush.msra.mxu0 0.0
    %2550 = vmatpush.msra.mxu0 0.0
    %2551 = vmatpush.msra.mxu0 0.0
    %2552 = vmatpush.msra.mxu0 0.0
    %2553 = vmatpush.msra.mxu0 0.0
    %2554 = vmatpush.msra.mxu0 0.0
    %2555 = vmatpush.msra.mxu0 0.0
    %2556 = vmatpush.msra.mxu0 0.0
    %2557 = vmatpush.msra.mxu0 0.0
    %2558 = vmatpush.msra.mxu0 0.0
    %2559 = vmatpush.msra.mxu0 0.0
    %2560 = vmatpush.msra.mxu0 0.0
    %2561 = vmatpush.msra.mxu0 %v123
    %2562 = vmatpush.msra.mxu0 %v122
    %2563 = vmatpush.msra.mxu0 %v121
    %2564 = vmatpush.msra.mxu0 %v120
    %2565 = vmatmul.f32.gmra.mxu0 %v2544
    %v2566 = vpop.f32.mrf.mxu0
    %v2567 = vadd.f32 0.0, %v2566
    %2568 = vmatmul.f32.gmra.mxu0 %v2547
    %v2569 = vpop.f32.mrf.mxu0
    %v2570 = vadd.f32 0.0, %v2569
    %2571 = vdwg.mxu0
    %2574 = vrot.lane.b32.xlu0 %v2528, 96
    %v2575 = vpop.permute.xlu0 %2574
    %2576 = vrot.lane.b32.xlu0 %v2531, 96
    %v2577 = vpop.permute.xlu0 %2576
    %v2580 = vmul.f32 %v2522, %v2575
    %v2581 = vmul.f32 %v2525, %v2577
    %v2583 = vsel %vm225, %v2580, 0
    %v2586 = vsel %vm225, %v2581, 0
    %2588 = vmatpush.msra.mxu0 0.0
    %2589 = vmatpush.msra.mxu0 0.0
    %2590 = vmatpush.msra.mxu0 0.0
    %2591 = vmatpush.msra.mxu0 0.0
    %2592 = vmatpush.msra.mxu0 0.0
    %2593 = vmatpush.msra.mxu0 0.0
    %2594 = vmatpush.msra.mxu0 0.0
    %2595 = vmatpush.msra.mxu0 0.0
    %2596 = vmatpush.msra.mxu0 0.0
    %2597 = vmatpush.msra.mxu0 0.0
    %2598 = vmatpush.msra.mxu0 0.0
    %2599 = vmatpush.msra.mxu0 0.0
    %2600 = vmatpush.msra.mxu0 %v123
    %2601 = vmatpush.msra.mxu0 %v122
    %2602 = vmatpush.msra.mxu0 %v121
    %2603 = vmatpush.msra.mxu0 %v120
    %2604 = vmatmul.f32.gmra.mxu0 %v2583
    %v2605 = vpop.f32.mrf.mxu0
    %v2606 = vadd.f32 0.0, %v2605
    %2607 = vmatmul.f32.gmra.mxu0 %v2586
    %v2608 = vpop.f32.mrf.mxu0
    %v2609 = vadd.f32 0.0, %v2608
    %2610 = vdwg.mxu0
    %v2611 = vmax.f32 %v2567, %v2606
    %v2612 = vmax.f32 %v2570, %v2609
    %v2613 = vsub.f32 %v2567, %v2611
    %v2614 = vsub.f32 %v2570, %v2612
    %v2615 = vmul.f32 %v2613, 1.442695
    %v2616 = vpow.pop %v2615
    %v2617 = vmul.f32 %v2614, 1.442695
    %v2618 = vpow.pop %v2617
    %v2619 = vsub.f32 %v2606, %v2611
    %v2620 = vsub.f32 %v2609, %v2612
    %v2621 = vmul.f32 %v2619, 1.442695
    %v2622 = vpow.pop %v2621
    %v2623 = vmul.f32 %v2620, 1.442695
    %v2624 = vpow.pop %v2623
    %v2625 = vadd.f32 %v2616, %v2622
    %v2626 = vadd.f32 %v2618, %v2624
    %v2627 = vrcp.pop %v2625
    %v2628 = vrcp.pop %v2626
    %v2629 = vmul.f32 %v2616, %v2627
    %v2630 = vmul.f32 %v2618, %v2628
    %v2632 = vsel %vm132, %v2629, 0
    %v2635 = vsel %vm132, %v2630, 0
    %2637 = vmatpush.msra.mxu0 0.0
    %2638 = vmatpush.msra.mxu0 0.0
    %2639 = vmatpush.msra.mxu0 0.0
    %2640 = vmatpush.msra.mxu0 0.0
    %2641 = vmatpush.msra.mxu0 0.0
    %2642 = vmatpush.msra.mxu0 0.0
    %2643 = vmatpush.msra.mxu0 0.0
    %2644 = vmatpush.msra.mxu0 0.0
    %2645 = vmatpush.msra.mxu0 0.0
    %2646 = vmatpush.msra.mxu0 0.0
    %2647 = vmatpush.msra.mxu0 0.0
    %2648 = vmatpush.msra.mxu0 0.0
    %2649 = vmatpush.msra.mxu0 0.0
    %2650 = vmatpush.msra.mxu0 0.0
    %2651 = vmatpush.msra.mxu0 0.0
    %2652 = vmatpush.msra.mxu0 %v372
    %2653 = vmatmul.f32.gmra.mxu0 %v2632
    %v2654 = vpop.f32.mrf.mxu0
    %v2655 = vadd.f32 0.0, %v2654
    %2656 = vmatmul.f32.gmra.mxu0 %v2635
    %v2657 = vpop.f32.mrf.mxu0
    %v2658 = vadd.f32 0.0, %v2657
    %2659 = vdwg.mxu0
    %2660 = vrot.lane.b32.xlu0 %v2522, 64
    %v2661 = vpop.permute.xlu0 %2660
    %2662 = vrot.lane.b32.xlu0 %v2525, 64
    %v2663 = vpop.permute.xlu0 %2662
    %v2666 = vmul.f32 %v2655, %v2661
    %v2667 = vmul.f32 %v2658, %v2663
    %v2668 = vmul.f32 %v2622, %v2627
    %v2669 = vmul.f32 %v2624, %v2628
    %v2671 = vsel %vm132, %v2668, 0
    %v2674 = vsel %vm132, %v2669, 0
    %2676 = vmatpush.msra.mxu0 0.0
    %2677 = vmatpush.msra.mxu0 0.0
    %2678 = vmatpush.msra.mxu0 0.0
    %2679 = vmatpush.msra.mxu0 0.0
    %2680 = vmatpush.msra.mxu0 0.0
    %2681 = vmatpush.msra.mxu0 0.0
    %2682 = vmatpush.msra.mxu0 0.0
    %2683 = vmatpush.msra.mxu0 0.0
    %2684 = vmatpush.msra.mxu0 0.0
    %2685 = vmatpush.msra.mxu0 0.0
    %2686 = vmatpush.msra.mxu0 0.0
    %2687 = vmatpush.msra.mxu0 0.0
    %2688 = vmatpush.msra.mxu0 0.0
    %2689 = vmatpush.msra.mxu0 0.0
    %2690 = vmatpush.msra.mxu0 0.0
    %2691 = vmatpush.msra.mxu0 %v372
    %2692 = vmatmul.f32.gmra.mxu0 %v2671
    %v2693 = vpop.f32.mrf.mxu0
    %v2694 = vadd.f32 0.0, %v2693
    %2695 = vmatmul.f32.gmra.mxu0 %v2674
    %v2696 = vpop.f32.mrf.mxu0
    %v2697 = vadd.f32 0.0, %v2696
    %2698 = vdwg.mxu0
    %2699 = vrot.lane.b32.xlu0 %v2528, 64
    %v2700 = vpop.permute.xlu0 %2699
    %2701 = vrot.lane.b32.xlu0 %v2531, 64
    %v2702 = vpop.permute.xlu0 %2701
    %v2705 = vmul.f32 %v2694, %v2700
    %v2706 = vmul.f32 %v2697, %v2702
    %v2707 = vadd.f32 %v2666, %v2705
    %v2708 = vadd.f32 %v2667, %v2706
    %v2709 = vmul.f32 %v2528, %v2536
    %v2710 = vmul.f32 %v2531, %v2538
    %v2712 = vsel %vm225, %v2709, 0
    %v2715 = vsel %vm225, %v2710, 0
    %2717 = vmatpush.msra.mxu0 0.0
    %2718 = vmatpush.msra.mxu0 0.0
    %2719 = vmatpush.msra.mxu0 0.0
    %2720 = vmatpush.msra.mxu0 0.0
    %2721 = vmatpush.msra.mxu0 0.0
    %2722 = vmatpush.msra.mxu0 0.0
    %2723 = vmatpush.msra.mxu0 0.0
    %2724 = vmatpush.msra.mxu0 0.0
    %2725 = vmatpush.msra.mxu0 0.0
    %2726 = vmatpush.msra.mxu0 0.0
    %2727 = vmatpush.msra.mxu0 0.0
    %2728 = vmatpush.msra.mxu0 0.0
    %2729 = vmatpush.msra.mxu0 %v123
    %2730 = vmatpush.msra.mxu0 %v122
    %2731 = vmatpush.msra.mxu0 %v121
    %2732 = vmatpush.msra.mxu0 %v120
    %2733 = vmatmul.f32.gmra.mxu0 %v2712
    %v2734 = vpop.f32.mrf.mxu0
    %v2735 = vadd.f32 0.0, %v2734
    %2736 = vmatmul.f32.gmra.mxu0 %v2715
    %v2737 = vpop.f32.mrf.mxu0
    %v2738 = vadd.f32 0.0, %v2737
    %2739 = vdwg.mxu0
    %v2740 = vmul.f32 %v2528, %v2575
    %v2741 = vmul.f32 %v2531, %v2577
    %v2743 = vsel %vm225, %v2740, 0
    %v2746 = vsel %vm225, %v2741, 0
    %2748 = vmatpush.msra.mxu0 0.0
    %2749 = vmatpush.msra.mxu0 0.0
    %2750 = vmatpush.msra.mxu0 0.0
    %2751 = vmatpush.msra.mxu0 0.0
    %2752 = vmatpush.msra.mxu0 0.0
    %2753 = vmatpush.msra.mxu0 0.0
    %2754 = vmatpush.msra.mxu0 0.0
    %2755 = vmatpush.msra.mxu0 0.0
    %2756 = vmatpush.msra.mxu0 0.0
    %2757 = vmatpush.msra.mxu0 0.0
    %2758 = vmatpush.msra.mxu0 0.0
    %2759 = vmatpush.msra.mxu0 0.0
    %2760 = vmatpush.msra.mxu0 %v123
    %2761 = vmatpush.msra.mxu0 %v122
    %2762 = vmatpush.msra.mxu0 %v121
    %2763 = vmatpush.msra.mxu0 %v120
    %2764 = vmatmul.f32.gmra.mxu0 %v2743
    %v2765 = vpop.f32.mrf.mxu0
    %v2766 = vadd.f32 0.0, %v2765
    %2767 = vmatmul.f32.gmra.mxu0 %v2746
    %v2768 = vpop.f32.mrf.mxu0
    %v2769 = vadd.f32 0.0, %v2768
    %2770 = vdwg.mxu0
    %v2771 = vmax.f32 %v2735, %v2766
    %v2772 = vmax.f32 %v2738, %v2769
    %v2773 = vsub.f32 %v2735, %v2771
    %v2774 = vsub.f32 %v2738, %v2772
    %v2775 = vmul.f32 %v2773, 1.442695
    %v2776 = vpow.pop %v2775
    %v2777 = vmul.f32 %v2774, 1.442695
    %v2778 = vpow.pop %v2777
    %v2779 = vsub.f32 %v2766, %v2771
    %v2780 = vsub.f32 %v2769, %v2772
    %v2781 = vmul.f32 %v2779, 1.442695
    %v2782 = vpow.pop %v2781
    %v2783 = vmul.f32 %v2780, 1.442695
    %v2784 = vpow.pop %v2783
    %v2785 = vadd.f32 %v2776, %v2782
    %v2786 = vadd.f32 %v2778, %v2784
    %v2787 = vrcp.pop %v2785
    %v2788 = vrcp.pop %v2786
    %v2789 = vmul.f32 %v2776, %v2787
    %v2790 = vmul.f32 %v2778, %v2788
    %v2792 = vsel %vm132, %v2789, 0
    %v2795 = vsel %vm132, %v2790, 0
    %2797 = vmatpush.msra.mxu0 0.0
    %2798 = vmatpush.msra.mxu0 0.0
    %2799 = vmatpush.msra.mxu0 0.0
    %2800 = vmatpush.msra.mxu0 0.0
    %2801 = vmatpush.msra.mxu0 0.0
    %2802 = vmatpush.msra.mxu0 0.0
    %2803 = vmatpush.msra.mxu0 0.0
    %2804 = vmatpush.msra.mxu0 0.0
    %2805 = vmatpush.msra.mxu0 0.0
    %2806 = vmatpush.msra.mxu0 0.0
    %2807 = vmatpush.msra.mxu0 0.0
    %2808 = vmatpush.msra.mxu0 0.0
    %2809 = vmatpush.msra.mxu0 0.0
    %2810 = vmatpush.msra.mxu0 0.0
    %2811 = vmatpush.msra.mxu0 0.0
    %2812 = vmatpush.msra.mxu0 %v372
    %2813 = vmatmul.f32.gmra.mxu0 %v2792
    %v2814 = vpop.f32.mrf.mxu0
    %v2815 = vadd.f32 0.0, %v2814
    %2816 = vmatmul.f32.gmra.mxu0 %v2795
    %v2817 = vpop.f32.mrf.mxu0
    %v2818 = vadd.f32 0.0, %v2817
    %2819 = vdwg.mxu0
    %v2820 = vmul.f32 %v2815, %v2661
    %v2821 = vmul.f32 %v2818, %v2663
    %v2822 = vmul.f32 %v2782, %v2787
    %v2823 = vmul.f32 %v2784, %v2788
    %v2825 = vsel %vm132, %v2822, 0
    %v2828 = vsel %vm132, %v2823, 0
    %2830 = vmatpush.msra.mxu0 0.0
    %2831 = vmatpush.msra.mxu0 0.0
    %2832 = vmatpush.msra.mxu0 0.0
    %2833 = vmatpush.msra.mxu0 0.0
    %2834 = vmatpush.msra.mxu0 0.0
    %2835 = vmatpush.msra.mxu0 0.0
    %2836 = vmatpush.msra.mxu0 0.0
    %2837 = vmatpush.msra.mxu0 0.0
    %2838 = vmatpush.msra.mxu0 0.0
    %2839 = vmatpush.msra.mxu0 0.0
    %2840 = vmatpush.msra.mxu0 0.0
    %2841 = vmatpush.msra.mxu0 0.0
    %2842 = vmatpush.msra.mxu0 0.0
    %2843 = vmatpush.msra.mxu0 0.0
    %2844 = vmatpush.msra.mxu0 0.0
    %2845 = vmatpush.msra.mxu0 %v372
    %2846 = vmatmul.f32.gmra.mxu0 %v2825
    %v2847 = vpop.f32.mrf.mxu0
    %v2848 = vadd.f32 0.0, %v2847
    %2849 = vmatmul.f32.gmra.mxu0 %v2828
    %v2850 = vpop.f32.mrf.mxu0
    %v2851 = vadd.f32 0.0, %v2850
    %2852 = vdwg.mxu0
    %v2853 = vmul.f32 %v2848, %v2700
    %v2854 = vmul.f32 %v2851, %v2702
    %v2855 = vadd.f32 %v2820, %v2853
    %v2856 = vadd.f32 %v2821, %v2854
    %v2858 = vperm.slane %v2466, 0
    %v2861 = vsel %vm225, %v2707, 0
    %v2864 = vsel %vm225, %v2708, 0
    %v2867 = vsel %vm225, %v2855, 0
    %v2870 = vsel %vm225, %v2856, 0
    %2872 = vmatpush.msra.mxu0 0.0
    %2873 = vmatpush.msra.mxu0 0.0
    %2874 = vmatpush.msra.mxu0 0.0
    %2875 = vmatpush.msra.mxu0 0.0
    %2876 = vmatpush.msra.mxu0 0.0
    %2877 = vmatpush.msra.mxu0 0.0
    %2878 = vmatpush.msra.mxu0 0.0
    %2879 = vmatpush.msra.mxu0 0.0
    %2880 = vmatpush.msra.mxu0 0.0
    %2881 = vmatpush.msra.mxu0 0.0
    %2882 = vmatpush.msra.mxu0 0.0
    %2883 = vmatpush.msra.mxu0 0.0
    %2884 = vmatpush.msra.mxu0 %v2464
    %2885 = vmatpush.msra.mxu0 %v2463
    %2886 = vmatpush.msra.mxu0 %v2462
    %2887 = vmatpush.msra.mxu0 %v2461
    %2888 = vmatmul.f32.gmra.mxu0 %v2861
    %v2889 = vpop.f32.mrf.mxu0
    %v2890 = vadd.f32 %v2858, %v2889
    %2891 = vmatmul.f32.gmra.mxu0 %v2864
    %v2892 = vpop.f32.mrf.mxu0
    %v2893 = vadd.f32 %v2858, %v2892
    %2894 = vmatmul.f32.gmra.mxu0 %v2867
    %v2895 = vpop.f32.mrf.mxu0
    %v2896 = vadd.f32 %v2858, %v2895
    %2897 = vmatmul.f32.gmra.mxu0 %v2870
    %v2898 = vpop.f32.mrf.mxu0
    %v2899 = vadd.f32 %v2858, %v2898
    %2900 = vdwg.mxu0
    %v2901 = vadd.f32 %v2449, %v2890
    %v2902 = vadd.f32 %v2450, %v2893
    %v2903 = vadd.f32 %v2451, %v2896
    %v2904 = vadd.f32 %v2452, %v2899
    %v2905 = vsel %vm225, %v2901, 0.0
    %2906 = vadd.xlane.f32.xlu0 %v2905
    %v2907 = vpop.xlane.xlu0 %2906
    %v2908 = vsel %vm225, %v2902, 0.0
    %2909 = vadd.xlane.f32.xlu0 %v2908
    %v2910 = vpop.xlane.xlu0 %2909
    %v2911 = vsel %vm225, %v2903, 0.0
    %2912 = vadd.xlane.f32.xlu0 %v2911
    %v2913 = vpop.xlane.xlu0 %2912
    %v2914 = vsel %vm225, %v2904, 0.0
    %2915 = vadd.xlane.f32.xlu0 %v2914
    %v2916 = vpop.xlane.xlu0 %2915
    %v2917 = vmul.f32 %v2907, %v660
    %v2918 = vmul.f32 %v2910, %v660
    %v2919 = vmul.f32 %v2913, %v660
    %v2920 = vmul.f32 %v2916, %v660
    %v2921 = vsub.f32 %v2901, %v2917
    %v2922 = vsub.f32 %v2902, %v2918
    %v2923 = vsub.f32 %v2903, %v2919
    %v2924 = vsub.f32 %v2904, %v2920
    %v2925 = vmul.f32 %v2921, %v2921
    %v2926 = vmul.f32 %v2922, %v2922
    %v2927 = vmul.f32 %v2923, %v2923
    %v2928 = vmul.f32 %v2924, %v2924
    %v2929 = vsel %vm225, %v2925, 0.0
    %2930 = vadd.xlane.f32.xlu0 %v2929
    %v2931 = vpop.xlane.xlu0 %2930
    %v2932 = vsel %vm225, %v2926, 0.0
    %2933 = vadd.xlane.f32.xlu0 %v2932
    %v2934 = vpop.xlane.xlu0 %2933
    %v2935 = vsel %vm225, %v2927, 0.0
    %2936 = vadd.xlane.f32.xlu0 %v2935
    %v2937 = vpop.xlane.xlu0 %2936
    %v2938 = vsel %vm225, %v2928, 0.0
    %2939 = vadd.xlane.f32.xlu0 %v2938
    %v2940 = vpop.xlane.xlu0 %2939
    %v2941 = vmul.f32 %v2931, %v660
    %v2942 = vmul.f32 %v2934, %v660
    %v2943 = vmul.f32 %v2937, %v660
    %v2944 = vmul.f32 %v2940, %v660
    %v2945 = vadd.f32 %v2941, 1e-05
    %v2946 = vadd.f32 %v2942, 1e-05
    %v2947 = vadd.f32 %v2943, 1e-05
    %v2948 = vadd.f32 %v2944, 1e-05
    %v2949 = vrsqrt.pop %v2945
    %v2950 = vmul.f32 %v2949, %v2945
    %v2951 = vmul.f32 %v2950, %v2949
    %v2952 = vmul.f32 0.5, %v2951
    %v2953 = vsub.f32 1.5, %v2952
    %v2954 = vmul.f32 %v2949, %v2953
    %vm2955 = vweird.f32 %v2945
    %vm2956 = vweird.f32 %v2949
    %vm2957 = vmor %vm2955, %vm2956
    %v2958 = vsel %vm2957, %v2949, %v2954
    %v2959 = vrsqrt.pop %v2946
    %v2960 = vmul.f32 %v2959, %v2946
    %v2961 = vmul.f32 %v2960, %v2959
    %v2962 = vmul.f32 0.5, %v2961
    %v2963 = vsub.f32 1.5, %v2962
    %v2964 = vmul.f32 %v2959, %v2963
    %vm2965 = vweird.f32 %v2946
    %vm2966 = vweird.f32 %v2959
    %vm2967 = vmor %vm2965, %vm2966
    %v2968 = vsel %vm2967, %v2959, %v2964
    %v2969 = vrsqrt.pop %v2947
    %v2970 = vmul.f32 %v2969, %v2947
    %v2971 = vmul.f32 %v2970, %v2969
    %v2972 = vmul.f32 0.5, %v2971
    %v2973 = vsub.f32 1.5, %v2972
    %v2974 = vmul.f32 %v2969, %v2973
    %vm2975 = vweird.f32 %v2947
    %vm2976 = vweird.f32 %v2969
    %vm2977 = vmor %vm2975, %vm2976
    %v2978 = vsel %vm2977, %v2969, %v2974
    %v2979 = vrsqrt.pop %v2948
    %v2980 = vmul.f32 %v2979, %v2948
    %v2981 = vmul.f32 %v2980, %v2979
    %v2982 = vmul.f32 0.5, %v2981
    %v2983 = vsub.f32 1.5, %v2982
    %v2984 = vmul.f32 %v2979, %v2983
    %vm2985 = vweird.f32 %v2948
    %vm2986 = vweird.f32 %v2979
    %vm2987 = vmor %vm2985, %vm2986
    %v2988 = vsel %vm2987, %v2979, %v2984
    %v2989 = vmul.f32 %v2921, %v2958
    %v2990 = vmul.f32 %v2922, %v2968
    %v2991 = vmul.f32 %v2923, %v2978
    %v2992 = vmul.f32 %v2924, %v2988
    %v2994 = vperm.slane %v2482, 0
    %v2996 = vmul.f32 %v2989, %v2994
    %v2997 = vmul.f32 %v2990, %v2994
    %v2998 = vmul.f32 %v2991, %v2994
    %v2999 = vmul.f32 %v2992, %v2994
    %v3001 = vperm.slane %v2484, 0
    %v3003 = vadd.f32 %v2996, %v3001
    %v3004 = vadd.f32 %v2997, %v3001
    %v3005 = vadd.f32 %v2998, %v3001
    %v3006 = vadd.f32 %v2999, %v3001
    %v3008 = vperm.slane %v2473, 0
    %v3011 = vsel %vm225, %v3003, 0
    %v3014 = vsel %vm225, %v3004, 0
    %v3017 = vsel %vm225, %v3005, 0
    %v3020 = vsel %vm225, %v3006, 0
    %3022 = vmatpush.msra.mxu0 0.0
    %3023 = vmatpush.msra.mxu0 0.0
    %3024 = vmatpush.msra.mxu0 0.0
    %3025 = vmatpush.msra.mxu0 0.0
    %3026 = vmatpush.msra.mxu0 0.0
    %3027 = vmatpush.msra.mxu0 0.0
    %3028 = vmatpush.msra.mxu0 0.0
    %3029 = vmatpush.msra.mxu0 0.0
    %3030 = vmatpush.msra.mxu0 0.0
    %3031 = vmatpush.msra.mxu0 0.0
    %3032 = vmatpush.msra.mxu0 0.0
    %3033 = vmatpush.msra.mxu0 0.0
    %3034 = vmatpush.msra.mxu0 %v2471
    %3035 = vmatpush.msra.mxu0 %v2470
    %3036 = vmatpush.msra.mxu0 %v2469
    %3037 = vmatpush.msra.mxu0 %v2468
    %3038 = vmatmul.f32.gmra.mxu0 %v3011
    %v3039 = vpop.f32.mrf.mxu0
    %v3040 = vadd.f32 %v3008, %v3039
    %3041 = vmatmul.f32.gmra.mxu0 %v3014
    %v3042 = vpop.f32.mrf.mxu0
    %v3043 = vadd.f32 %v3008, %v3042
    %3044 = vmatmul.f32.gmra.mxu0 %v3017
    %v3045 = vpop.f32.mrf.mxu0
    %v3046 = vadd.f32 %v3008, %v3045
    %3047 = vmatmul.f32.gmra.mxu0 %v3020
    %v3048 = vpop.f32.mrf.mxu0
    %v3049 = vadd.f32 %v3008, %v3048
    %3050 = vdwg.mxu0
    %v3051 = vmax.f32 %v3040, 0.0
    %v3052 = vmax.f32 %v3043, 0.0
    %v3053 = vmax.f32 %v3046, 0.0
    %v3054 = vmax.f32 %v3049, 0.0
    %v3056 = vperm.slane %v2480, 0
    %v3059 = vsel %vm225, %v3051, 0
    %v3062 = vsel %vm225, %v3052, 0
    %v3065 = vsel %vm225, %v3053, 0
    %v3068 = vsel %vm225, %v3054, 0
    %3070 = vmatpush.msra.mxu0 0.0
    %3071 = vmatpush.msra.mxu0 0.0
    %3072 = vmatpush.msra.mxu0 0.0
    %3073 = vmatpush.msra.mxu0 0.0
    %3074 = vmatpush.msra.mxu0 0.0
    %3075 = vmatpush.msra.mxu0 0.0
    %3076 = vmatpush.msra.mxu0 0.0
    %3077 = vmatpush.msra.mxu0 0.0
    %3078 = vmatpush.msra.mxu0 0.0
    %3079 = vmatpush.msra.mxu0 0.0
    %3080 = vmatpush.msra.mxu0 0.0
    %3081 = vmatpush.msra.mxu0 0.0
    %3082 = vmatpush.msra.mxu0 %v2478
    %3083 = vmatpush.msra.mxu0 %v2477
    %3084 = vmatpush.msra.mxu0 %v2476
    %3085 = vmatpush.msra.mxu0 %v2475
    %3086 = vmatmul.f32.gmra.mxu0 %v3059
    %v3087 = vpop.f32.mrf.mxu0
    %v3088 = vadd.f32 %v3056, %v3087
    %3089 = vmatmul.f32.gmra.mxu0 %v3062
    %v3090 = vpop.f32.mrf.mxu0
    %v3091 = vadd.f32 %v3056, %v3090
    %3092 = vmatmul.f32.gmra.mxu0 %v3065
    %v3093 = vpop.f32.mrf.mxu0
    %v3094 = vadd.f32 %v3056, %v3093
    %3095 = vmatmul.f32.gmra.mxu0 %v3068
    %v3096 = vpop.f32.mrf.mxu0
    %v3097 = vadd.f32 %v3056, %v3096
    %3098 = vdwg.mxu0
    %v3099 = vadd.f32 %v3003, %v3088
    %v3100 = vadd.f32 %v3004, %v3091
    %v3101 = vadd.f32 %v3005, %v3094
    %v3102 = vadd.f32 %v3006, %v3097
    %v3103 = vsel %vm225, %v3099, 0.0
    %3104 = vadd.xlane.f32.xlu0 %v3103
    %v3105 = vpop.xlane.xlu0 %3104
    %v3106 = vsel %vm225, %v3100, 0.0
    %3107 = vadd.xlane.f32.xlu0 %v3106
    %v3108 = vpop.xlane.xlu0 %3107
    %v3109 = vsel %vm225, %v3101, 0.0
    %3110 = vadd.xlane.f32.xlu0 %v3109
    %v3111 = vpop.xlane.xlu0 %3110
    %v3112 = vsel %vm225, %v3102, 0.0
    %3113 = vadd.xlane.f32.xlu0 %v3112
    %v3114 = vpop.xlane.xlu0 %3113
    %v3115 = vmul.f32 %v3105, %v660
    %v3116 = vmul.f32 %v3108, %v660
    %v3117 = vmul.f32 %v3111, %v660
    %v3118 = vmul.f32 %v3114, %v660
    %v3119 = vsub.f32 %v3099, %v3115
    %v3120 = vsub.f32 %v3100, %v3116
    %v3121 = vsub.f32 %v3101, %v3117
    %v3122 = vsub.f32 %v3102, %v3118
    %v3123 = vmul.f32 %v3119, %v3119
    %v3124 = vmul.f32 %v3120, %v3120
    %v3125 = vmul.f32 %v3121, %v3121
    %v3126 = vmul.f32 %v3122, %v3122
    %v3127 = vsel %vm225, %v3123, 0.0
    %3128 = vadd.xlane.f32.xlu0 %v3127
    %v3129 = vpop.xlane.xlu0 %3128
    %v3130 = vsel %vm225, %v3124, 0.0
    %3131 = vadd.xlane.f32.xlu0 %v3130
    %v3132 = vpop.xlane.xlu0 %3131
    %v3133 = vsel %vm225, %v3125, 0.0
    %3134 = vadd.xlane.f32.xlu0 %v3133
    %v3135 = vpop.xlane.xlu0 %3134
    %v3136 = vsel %vm225, %v3126, 0.0
    %3137 = vadd.xlane.f32.xlu0 %v3136
    %v3138 = vpop.xlane.xlu0 %3137
    %v3139 = vmul.f32 %v3129, %v660
    %v3140 = vmul.f32 %v3132, %v660
    %v3141 = vmul.f32 %v3135, %v660
    %v3142 = vmul.f32 %v3138, %v660
    %v3143 = vadd.f32 %v3139, 1e-05
    %v3144 = vadd.f32 %v3140, 1e-05
    %v3145 = vadd.f32 %v3141, 1e-05
    %v3146 = vadd.f32 %v3142, 1e-05
    %v3147 = vrsqrt.pop %v3143
    %v3148 = vmul.f32 %v3147, %v3143
    %v3149 = vmul.f32 %v3148, %v3147
    %v3150 = vmul.f32 0.5, %v3149
    %v3151 = vsub.f32 1.5, %v3150
    %v3152 = vmul.f32 %v3147, %v3151
    %vm3153 = vweird.f32 %v3143
    %vm3154 = vweird.f32 %v3147
    %vm3155 = vmor %vm3153, %vm3154
    %v3156 = vsel %vm3155, %v3147, %v3152
    %v3157 = vrsqrt.pop %v3144
    %v3158 = vmul.f32 %v3157, %v3144
    %v3159 = vmul.f32 %v3158, %v3157
    %v3160 = vmul.f32 0.5, %v3159
    %v3161 = vsub.f32 1.5, %v3160
    %v3162 = vmul.f32 %v3157, %v3161
    %vm3163 = vweird.f32 %v3144
    %vm3164 = vweird.f32 %v3157
    %vm3165 = vmor %vm3163, %vm3164
    %v3166 = vsel %vm3165, %v3157, %v3162
    %v3167 = vrsqrt.pop %v3145
    %v3168 = vmul.f32 %v3167, %v3145
    %v3169 = vmul.f32 %v3168, %v3167
    %v3170 = vmul.f32 0.5, %v3169
    %v3171 = vsub.f32 1.5, %v3170
    %v3172 = vmul.f32 %v3167, %v3171
    %vm3173 = vweird.f32 %v3145
    %vm3174 = vweird.f32 %v3167
    %vm3175 = vmor %vm3173, %vm3174
    %v3176 = vsel %vm3175, %v3167, %v3172
    %v3177 = vrsqrt.pop %v3146
    %v3178 = vmul.f32 %v3177, %v3146
    %v3179 = vmul.f32 %v3178, %v3177
    %v3180 = vmul.f32 0.5, %v3179
    %v3181 = vsub.f32 1.5, %v3180
    %v3182 = vmul.f32 %v3177, %v3181
    %vm3183 = vweird.f32 %v3146
    %vm3184 = vweird.f32 %v3177
    %vm3185 = vmor %vm3183, %vm3184
    %v3186 = vsel %vm3185, %v3177, %v3182
    %v3187 = vmul.f32 %v3119, %v3156
    %v3188 = vmul.f32 %v3120, %v3166
    %v3189 = vmul.f32 %v3121, %v3176
    %v3190 = vmul.f32 %v3122, %v3186
    %v3192 = vperm.slane %v2486, 0
    %v3194 = vmul.f32 %v3187, %v3192
    %v3195 = vmul.f32 %v3188, %v3192
    %v3196 = vmul.f32 %v3189, %v3192
    %v3197 = vmul.f32 %v3190, %v3192
    %v3199 = vperm.slane %v2488, 0
    %v3201 = vadd.f32 %v3194, %v3199
    %v3202 = vadd.f32 %v3195, %v3199
    %v3203 = vadd.f32 %v3196, %v3199
    %v3204 = vadd.f32 %v3197, %v3199
    %3205 = vst.msk [vmem:[#allocation10] sm:$0xff] %vm225, %v3201
    %3206 = vst.msk [vmem:[#allocation10 + $0x8] sm:$0xff] %vm225, %v3202
    %s3207 = scalar_lea.vmem [#allocation10], 16
    %3208 = vst.msk [vmem:[%s3207] sm:$0xff] %vm225, %v3203
    %3209 = vst.msk [vmem:[%s3207 + $0x8] sm:$0xff] %vm225, %v3204
    // Predicated region
    $region86: #{transformer_backbone_forward.1} parent=1 // pred_check
      _
    $region87: #{transformer_backbone_forward.1} parent=1 // pred_check_branch
      %3211 = sbr.rel (0) target = $region89
    $region88: #{transformer_backbone_forward.1} parent=1 // pred_region
      %3213 = vsyncadd [#allocation4], 0
      %s3214 = sshll.u32 [#allocation10], 4
      %s3215 = int_to_ptr.vmem [resolvable:$true] %s3214
      %s3216 = sshll.u32 %s17, 4
      %s3217 = int_to_ptr.hbm [resolvable:$true] %s3216
      %3222 = dma.vmem_to_hbm [thread:$0]  %s3215, 512, %s3217, [#allocation4], 128, 128, 8
    $region89: #{transformer_backbone_forward.1} parent=1 // pred_fallthru
      _
    // Predicated region
    $region90: #{transformer_backbone_forward.1} parent=1 // pred_check
      _
    $region91: #{transformer_backbone_forward.1} parent=1 // pred_check_branch
      %3224 = sbr.rel (0) target = $region93
    $region92: #{transformer_backbone_forward.1} parent=1 // pred_region
      %3226 = dma.done [#allocation4], 512
    $region93: #{transformer_backbone_forward.1} parent=1 // pred_fallthru
      _
    %3227 = vsyncpa [#allocation3], 1
    %3228 = vsyncpa [#allocation6], 1
    %3229 = vsyncpa [#allocation9], 1
    %3230 = vsyncpa [#allocation4], 1

</llo_original>
